<compile_context>
chip_gen: v7x
topology: tpu7x:2x2x1
jax: 0.10.0
libtpu: 0.0.40
codegen_flags: <defaults>
</compile_context>

<pallas_src>
import functools
import math

import jax
import jax.numpy as jnp
from jax.experimental import pallas as pl
from jax.experimental.pallas import tpu as pltpu

N_MAX_POSITIONS = 512
LN_EPS = 1e-12
NEG_INF = -1e30                 # finite masked-score fill (no inf-inf NaNs)
VMEM_LIMIT = 48 * 1024 * 1024   # safe scoped-VMEM request on v5e/v6e/v7x


# ---------------------------------------------------------------------------
# helpers
# ---------------------------------------------------------------------------
def _tile(size, target, base):
    """Largest tile <= target that divides `size` and is a multiple of `base`
    (falls back to the full dimension)."""
    # TODO(synk): cdiv-based grid + masked epilogue for large non-divisible
    # dims; with slen padded to a multiple of 8 the row axis always tiles.
    if size <= target:
        return size
    t = (target // base) * base
    while t >= base:
        if size % t == 0:
            return t
        t -= base
    return size


def _gelu(x):
    # matches xlm gelu: 0.5 * x * (1 + erf(x / sqrt(2)))
    return 0.5 * x * (1.0 + jax.lax.erf(x / math.sqrt(2.0)))


# ---------------------------------------------------------------------------
# kernel bodies
# ---------------------------------------------------------------------------
def matmul_kernel(gelu_act, has_res, x_ref, w_ref, b_ref, *rest):
    """out = [residual +] act(x @ w + b); bf16 MXU inputs, f32 accumulation."""
    if has_res:
        res_ref, o_ref, acc_ref = rest
    else:
        o_ref, acc_ref = rest

    kk = pl.program_id(2)

    @pl.when(kk == 0)
    def _():
        acc_ref[...] = jnp.zeros_like(acc_ref)

    acc_ref[...] += jnp.dot(x_ref[...], w_ref[...],
                            preferred_element_type=jnp.float32)

    @pl.when(kk == pl.num_programs(2) - 1)
    def _():
        y = acc_ref[...] + b_ref[...]
        if gelu_act:
            y = _gelu(y)
        if has_res:
            y = y + res_ref[...]
        o_ref[...] = y.astype(o_ref.dtype)


def flash_attn_kernel(tk_size, lens_ref, q_ref, k_ref, v_ref, o_ref,
                      qt_ref, m_ref, l_ref, acc_ref):
    """Online-softmax attention over kv blocks, all heads in one batched
    einsum.  Inputs are token-major slices of the fused qkv tensor:
      q_ref: (tq, H, dph)  k_ref/v_ref: (tk, H, dph)  (bf16, scale pre-folded)
    Fully padded kv blocks are skipped; per-key masking is derived from
    `lens_ref` (scalar-prefetched lengths)."""
    b = pl.program_id(0)
    ki = pl.program_id(2)

    @pl.when(ki == 0)
    def _():
        # hoist the token-major -> head-major reorder of q out of the kv loop
        qt_ref[...] = pltpu.einshape('mhd->hmd', q_ref[...])
        m_ref[...] = jnp.full_like(m_ref, -jnp.inf)
        l_ref[...] = jnp.zeros_like(l_ref)
        acc_ref[...] = jnp.zeros_like(acc_ref)

    @pl.when(ki * tk_size < lens_ref[b])        # skip fully-padded kv blocks
    def _():
        k = pltpu.einshape('mhd->hmd', k_ref[...])     # (H, tk, dph)
        v = pltpu.einshape('mhd->hmd', v_ref[...])     # (H, tk, dph)

        s = jnp.einsum('hqd,hkd->hqk', qt_ref[...], k,
                       preferred_element_type=jnp.float32)
        key_pos = ki * tk_size + jax.lax.broadcasted_iota(
            jnp.int32, (1, 1, tk_size), 2)
        s = jnp.where(key_pos < lens_ref[b], s, NEG_INF)

        m_prev = m_ref[...]
        m_new = jnp.maximum(m_prev, jnp.max(s, axis=-1, keepdims=True))
        alpha = jnp.exp(m_prev - m_new)
        p = jnp.exp(s - m_new)
        l_ref[...] = alpha * l_ref[...] + jnp.sum(p, axis=-1, keepdims=True)
        acc_ref[...] = alpha * acc_ref[...] + jnp.einsum(
            'hqk,hkd->hqd', p.astype(v.dtype), v,
            preferred_element_type=jnp.float32)
        m_ref[...] = m_new

    @pl.when(ki == pl.num_programs(2) - 1)
    def _():
        l = l_ref[...]
        l = jnp.where(l == 0.0, 1.0, l)          # guard length == 0 rows
        inv = pl.reciprocal(l, approx=True)
        # write back token-major so the out-projection needs no XLA transpose
        o_ref[...] = pltpu.einshape(
            'hmd->mhd', acc_ref[...] * inv).astype(o_ref.dtype)


def ln_kernel(apply_mask, x_ref, *rest):
    """LayerNorm over the lane axis; optional hidden-state mask multiply.
    Emits both an f32 (residual stream) and a bf16 (matmul feed) output."""
    if apply_mask:
        mask_ref, g_ref, b_ref, o32_ref, o16_ref = rest
    else:
        g_ref, b_ref, o32_ref, o16_ref = rest
    x = x_ref[...]                                # (tm, D) f32
    mean = jnp.mean(x, axis=-1, keepdims=True)
    xc = x - mean
    var = jnp.mean(xc * xc, axis=-1, keepdims=True)   # centered variance
    y = xc * jax.lax.rsqrt(var + LN_EPS) * g_ref[...] + b_ref[...]
    if apply_mask:
        y = y * mask_ref[...]                     # (tm, 1) broadcast
    o32_ref[...] = y
    o16_ref[...] = y.astype(jnp.bfloat16)


# ---------------------------------------------------------------------------
# pallas_call wrappers
# ---------------------------------------------------------------------------
def matmul(x, w, b, *, residual=None, gelu_act=False, out_dtype=jnp.float32,
           tm_target=256, tn_target=512, tk_target=1024):
    M, K = x.shape
    Kw, N = w.shape
    assert K == Kw
    tm = _tile(M, tm_target, 8)
    tn = _tile(N, tn_target, 128)
    tk = _tile(K, tk_target, 128)
    grid = (M // tm, N // tn, K // tk)

    in_specs = [
        pl.BlockSpec((tm, tk), lambda i, j, kk: (i, kk)),
        pl.BlockSpec((tk, tn), lambda i, j, kk: (kk, j)),
        pl.BlockSpec((1, tn), lambda i, j, kk: (0, j)),
    ]
    args = [x, w, b]
    if residual is not None:
        in_specs.append(pl.BlockSpec((tm, tn), lambda i, j, kk: (i, j)))
        args.append(residual)

    # TODO(synk): cross-pallas_call prefetch of the next layer's weights (P10)
    # and pl.Buffered(3) on the weight spec for latency-bound small-M shapes.
    kernel = functools.partial(matmul_kernel, gelu_act, residual is not None)
    return pl.pallas_call(
        kernel,
        out_shape=jax.ShapeDtypeStruct((M, N), out_dtype),
        grid=grid,
        in_specs=in_specs,
        out_specs=pl.BlockSpec((tm, tn), lambda i, j, kk: (i, j)),
        scratch_shapes=[pltpu.VMEM((tm, tn), jnp.float32)],
        compiler_params=pltpu.CompilerParams(
            dimension_semantics=("parallel", "parallel", "arbitrary"),
            vmem_limit_bytes=VMEM_LIMIT),
    )(*args)


def flash_attention(qkv, lengths, *, tq_target=256, tk_target=512):
    """qkv: (bs, S, 3, H, dph) bf16 (fused projection, q already scaled).
    lengths: int32 (bs,).  Returns (bs, S, H, dph) bf16."""
    bs, S, three, H, dph = qkv.shape
    assert three == 3
    tq = _tile(S, tq_target, 8)
    tk = _tile(S, tk_target, 8)
    grid = (bs, S // tq, S // tk)

    def q_map(b, qi, ki, lens):
        return (b, qi, 0, 0, 0)

    def kv_map(idx):
        def f(b, qi, ki, lens):
            # clamp to the last block holding valid keys so padded kv blocks
            # never trigger a new DMA (the block index does not change)
            last = jnp.maximum(pl.cdiv(lens[b], tk) - 1, 0)
            return (b, jnp.minimum(ki, last), idx, 0, 0)
        return f

    kernel = functools.partial(flash_attn_kernel, tk)
    return pl.pallas_call(
        kernel,
        out_shape=jax.ShapeDtypeStruct((bs, S, H, dph), qkv.dtype),
        grid_spec=pltpu.PrefetchScalarGridSpec(
            num_scalar_prefetch=1,
            grid=grid,
            in_specs=[
                pl.BlockSpec((None, tq, None, H, dph), q_map),
                pl.BlockSpec((None, tk, None, H, dph), kv_map(1)),
                pl.BlockSpec((None, tk, None, H, dph), kv_map(2)),
            ],
            out_specs=pl.BlockSpec((None, tq, H, dph),
                                   lambda b, qi, ki, lens: (b, qi, 0, 0)),
            scratch_shapes=[
                pltpu.VMEM((H, tq, dph), qkv.dtype),    # head-major q
                pltpu.VMEM((H, tq, 1), jnp.float32),    # running max
                pltpu.VMEM((H, tq, 1), jnp.float32),    # running denom
                pltpu.VMEM((H, tq, dph), jnp.float32),  # output accumulator
            ]),
        compiler_params=pltpu.CompilerParams(
            dimension_semantics=("parallel", "parallel", "arbitrary"),
            vmem_limit_bytes=VMEM_LIMIT),
    )(lengths, qkv, qkv, qkv)


def layer_norm(x2, g, b, *, mask2=None, tm_target=512):
    """Returns (f32 output, bf16 output).  mask2=None skips the mask DMA."""
    M, D = x2.shape
    tm = _tile(M, tm_target, 8)
    apply_mask = mask2 is not None

    in_specs = [pl.BlockSpec((tm, D), lambda i: (i, 0))]
    args = [x2]
    if apply_mask:
        in_specs.append(pl.BlockSpec((tm, 1), lambda i: (i, 0)))
        args.append(mask2)
    in_specs += [pl.BlockSpec((1, D), lambda i: (0, 0)),
                 pl.BlockSpec((1, D), lambda i: (0, 0))]
    args += [g, b]

    kernel = functools.partial(ln_kernel, apply_mask)
    return pl.pallas_call(
        kernel,
        out_shape=(jax.ShapeDtypeStruct((M, D), jnp.float32),
                   jax.ShapeDtypeStruct((M, D), jnp.bfloat16)),
        grid=(M // tm,),
        in_specs=in_specs,
        out_specs=(pl.BlockSpec((tm, D), lambda i: (i, 0)),
                   pl.BlockSpec((tm, D), lambda i: (i, 0))),
        compiler_params=pltpu.CompilerParams(
            dimension_semantics=("parallel",),
            vmem_limit_bytes=VMEM_LIMIT),
    )(*args)


# ---------------------------------------------------------------------------
# parameter initialization (mirrors nn.Module __init__ shapes; weights bf16)
# ---------------------------------------------------------------------------
def init_params(key, n_words, dim, n_layers, n_heads, pad_index):
    hidden_dim = 4 * dim
    dph = dim // n_heads
    q_scale = 1.0 / math.sqrt(dph)
    keys = iter(jax.random.split(key, 2 + 12 * n_layers))

    def linear(in_dim, out_dim):
        # nn.Linear default init: U(-1/sqrt(in), 1/sqrt(in)) for W and b
        bound = 1.0 / math.sqrt(in_dim)
        w = jax.random.uniform(next(keys), (out_dim, in_dim), jnp.float32,
                               -bound, bound)
        b = jax.random.uniform(next(keys), (1, out_dim), jnp.float32,
                               -bound, bound)
        return w.T, b                               # stored as (in, out)

    emb = jax.random.normal(next(keys), (n_words, dim), jnp.float32) * dim ** -0.5
    emb = emb.at[pad_index].set(0.0)
    pos = jax.random.normal(next(keys), (N_MAX_POSITIONS, dim),
                            jnp.float32) * dim ** -0.5
    ln_emb = (jnp.ones((1, dim), jnp.float32), jnp.zeros((1, dim), jnp.float32))

    layers = []
    for _ in range(n_layers):
        wq, bq = linear(dim, dim)
        wk, bk = linear(dim, dim)
        wv, bv = linear(dim, dim)
        wo, bo = linear(dim, dim)
        w1, b1 = linear(dim, hidden_dim)
        w2, b2 = linear(hidden_dim, dim)
        # fold 1/sqrt(dim_per_head) into the Q projection (removes the per-kv-
        # block score scaling multiply inside the attention kernel)
        wq = wq * q_scale
        bq = bq * q_scale
        layers.append(dict(
            w_qkv=jnp.concatenate([wq, wk, wv], axis=1).astype(jnp.bfloat16),
            b_qkv=jnp.concatenate([bq, bk, bv], axis=1),
            w_o=wo.astype(jnp.bfloat16), b_o=bo,
            g1=jnp.ones((1, dim), jnp.float32),
            be1=jnp.zeros((1, dim), jnp.float32),
            w1=w1.astype(jnp.bfloat16), b1=b1,
            w2=w2.astype(jnp.bfloat16), b2=b2,
            g2=jnp.ones((1, dim), jnp.float32),
            be2=jnp.zeros((1, dim), jnp.float32),
        ))
    return dict(emb=emb, pos=pos, ln_emb=ln_emb, layers=layers)


# ---------------------------------------------------------------------------
# TransformerModel.fwd equivalent
# ---------------------------------------------------------------------------
def transformer_fwd(params, x, lengths, n_heads):
    """x: int32 (slen, bs) word indices; lengths: int32 (bs).
    Returns float32 (slen, bs, dim).  Dropout = identity (eval mode)."""
    slen, bs = x.shape
    dim = params['emb'].shape[1]
    dph = dim // n_heads

    S = ((slen + 7) // 8) * 8            # pad sequence for clean row tiling
    M = bs * S

    xt = x.T                                                   # (bs, slen)
    alen = jnp.arange(slen)
    # embedding + position gathers stay in XLA; n_langs == 1 -> no lang emb
    # TODO(synk): language-embedding path (n_langs > 1) not implemented.
    h = params['emb'][xt] + params['pos'][alen][None, :, :]    # (bs, slen, dim)
    if S != slen:
        h = jnp.pad(h, ((0, 0), (0, S - slen), (0, 0)))
    mask = (jnp.arange(S)[None, :] < lengths[:, None]).astype(jnp.float32)
    mask2 = mask.reshape(M, 1)
    lens32 = lengths.astype(jnp.int32)

    g, b = params['ln_emb']
    h2, h2_bf = layer_norm(h.reshape(M, dim).astype(jnp.float32), g, b,
                           mask2=mask2)                         # LN + mask

    for lp in params['layers']:
        # --- fused QKV projection; output stays token-major (no transposes) ---
        qkv = matmul(h2_bf, lp['w_qkv'], lp['b_qkv'], out_dtype=jnp.bfloat16)
        qkv = qkv.reshape(bs, S, 3, n_heads, dph)               # free reshape

        # --- flash attention over kv blocks (all heads, padded blocks skipped) ---
        ctx = flash_attention(qkv, lens32)                      # (bs,S,H,dph)
        ctx2 = ctx.reshape(M, dim)                              # free reshape

        # --- out projection + residual, then layer_norm1 ---
        a = matmul(ctx2, lp['w_o'], lp['b_o'], residual=h2,
                   out_dtype=jnp.float32)
        t, t_bf = layer_norm(a, lp['g1'], lp['be1'])

        # --- FFN: gelu(lin1) fused; lin2 fused with residual add ---
        # TODO(synk): relu path (gelu_activation=False) not wired up.
        hh = matmul(t_bf, lp['w1'], lp['b1'], gelu_act=True,
                    out_dtype=jnp.bfloat16)
        f = matmul(hh, lp['w2'], lp['b2'], residual=t, out_dtype=jnp.float32)

        # --- layer_norm2 + hidden-state mask ---
        h2, h2_bf = layer_norm(f, lp['g2'], lp['be2'], mask2=mask2)

    out = h2.reshape(bs, S, dim)[:, :slen]
    return jnp.transpose(out, (1, 0, 2))                        # (slen, bs, dim)

# TODO(synk): 'predict' mode (boolean pred_mask gather -> dynamic shape, tied
# output projection + cross_entropy) is not implemented as a Pallas kernel.


if __name__ == "__main__":
    # small synthetic config consistent with the module
    n_words, dim, n_layers, n_heads = 64, 32, 2, 4
    pad_index = 2
    slen, bs = 8, 2

    key = jax.random.PRNGKey(0)
    pkey, xkey = jax.random.split(key)
    params = init_params(pkey, n_words, dim, n_layers, n_heads, pad_index)

    x = jax.random.randint(xkey, (slen, bs), 3, n_words, dtype=jnp.int32)
    lengths = jnp.array([8, 5], dtype=jnp.int32)

    fwd = jax.jit(transformer_fwd, static_argnames=("n_heads",))
    out = fwd(params, x, lengths, n_heads=n_heads)
    out = jax.block_until_ready(out)
    assert out.shape == (slen, bs, dim)
    assert bool(jnp.all(jnp.isfinite(out)))
    print("KERNEL_OK")
</pallas_src>

<mosaic_0001>
module attributes {stable_mosaic.version = 11 : i64} {
  func.func @matmul_kernel(%arg0: i32, %arg1: i32, %arg2: i32, %arg3: memref<16x32xbf16, #tpu.memory_space<vmem>>, %arg4: memref<32x96xbf16, #tpu.memory_space<vmem>>, %arg5: memref<1x96xf32, #tpu.memory_space<vmem>>, %arg6: memref<16x96xbf16, #tpu.memory_space<vmem>>, %arg7: memref<16x96xf32, #tpu.memory_space<vmem>>) attributes {dimension_semantics = [#tpu.dimension_semantics<parallel>, #tpu.dimension_semantics<parallel>, #tpu.dimension_semantics<arbitrary>], iteration_bounds = array<i64: 1, 1, 1>, scalar_prefetch = 0 : i64, scratch_operands = 1 : i64, tpu.core_type = #tpu.core_type<tc>, window_params = [{transform_indices = @transform_0, window_bounds = array<i64: 16, 32>}, {transform_indices = @transform_1, window_bounds = array<i64: 32, 96>}, {transform_indices = @transform_2, window_bounds = array<i64: 1, 96>}, {transform_indices = @transform_3, window_bounds = array<i64: 16, 96>}]} {
    %c0_i32 = arith.constant 0 : i32
    %0 = arith.cmpi eq, %arg2, %c0_i32 : i32
    %1 = arith.extui %0 : i1 to i32
    %c0_i32_0 = arith.constant 0 : i32
    %2 = arith.cmpi ne, %1, %c0_i32_0 : i32
    scf.if %2 {
      %cst_10 = arith.constant 0.000000e+00 : f32
      %12 = vector.broadcast %cst_10 : f32 to vector<16x96xf32>
      %c0_11 = arith.constant 0 : index
      %c0_12 = arith.constant 0 : index
      %13 = vector.load %arg7[%c0_11, %c0_12] : memref<16x96xf32, #tpu.memory_space<vmem>>, vector<16x96xf32>
      tpu.vector_store %arg7[%c0_11, %c0_12], %12 {strides = array<i32>} : memref<16x96xf32, #tpu.memory_space<vmem>>, vector<16x96xf32>,
    } else {
    }
    %c0 = arith.constant 0 : index
    %c0_1 = arith.constant 0 : index
    %3 = vector.load %arg7[%c0, %c0_1] : memref<16x96xf32, #tpu.memory_space<vmem>>, vector<16x96xf32>
    %c0_2 = arith.constant 0 : index
    %c0_3 = arith.constant 0 : index
    %4 = vector.load %arg3[%c0_2, %c0_3] : memref<16x32xbf16, #tpu.memory_space<vmem>>, vector<16x32xbf16>
    %c0_4 = arith.constant 0 : index
    %c0_5 = arith.constant 0 : index
    %5 = vector.load %arg4[%c0_4, %c0_5] : memref<32x96xbf16, #tpu.memory_space<vmem>>, vector<32x96xbf16>
    %cst = arith.constant dense<0.000000e+00> : vector<16x96xf32>
    %6 = tpu.matmul %4, %5, %cst {dimension_numbers = #tpu.dot_dimension_numbers<[1], [0], [0], [1], [0, 0, 1, 1], [], []>} : vector<16x32xbf16>, vector<32x96xbf16>, vector<16x96xf32> -> vector<16x96xf32>
    %7 = arith.addf %3, %6 : vector<16x96xf32>
    %c0_6 = arith.constant 0 : index
    %c0_7 = arith.constant 0 : index
    %8 = vector.load %arg7[%c0_6, %c0_7] : memref<16x96xf32, #tpu.memory_space<vmem>>, vector<16x96xf32>
    tpu.vector_store %arg7[%c0_6, %c0_7], %7 {strides = array<i32>} : memref<16x96xf32, #tpu.memory_space<vmem>>, vector<16x96xf32>,
    %c0_i32_8 = arith.constant 0 : i32
    %9 = arith.cmpi eq, %arg2, %c0_i32_8 : i32
    %10 = arith.extui %9 : i1 to i32
    %c0_i32_9 = arith.constant 0 : i32
    %11 = arith.cmpi ne, %10, %c0_i32_9 : i32
    scf.if %11 {
      %c0_10 = arith.constant 0 : index
      %c0_11 = arith.constant 0 : index
      %12 = vector.load %arg7[%c0_10, %c0_11] : memref<16x96xf32, #tpu.memory_space<vmem>>, vector<16x96xf32>
      %c0_12 = arith.constant 0 : index
      %c0_13 = arith.constant 0 : index
      %13 = vector.load %arg5[%c0_12, %c0_13] : memref<1x96xf32, #tpu.memory_space<vmem>>, vector<1x96xf32>
      %14 = vector.broadcast %13 : vector<1x96xf32> to vector<16x96xf32>
      %15 = arith.addf %12, %14 : vector<16x96xf32>
      %16 = arith.truncf %15 : vector<16x96xf32> to vector<16x96xbf16>
      %c0_14 = arith.constant 0 : index
      %c0_15 = arith.constant 0 : index
      %17 = vector.load %arg6[%c0_14, %c0_15] : memref<16x96xbf16, #tpu.memory_space<vmem>>, vector<16x96xbf16>
      tpu.vector_store %arg6[%c0_14, %c0_15], %16 {strides = array<i32>} : memref<16x96xbf16, #tpu.memory_space<vmem>>, vector<16x96xbf16>,
    } else {
    }
    return
  }
  func.func @transform_0(%arg0: i32, %arg1: i32, %arg2: i32) -> (i32, i32) {
    %c0_i32 = arith.constant 0 : i32
    return %arg0, %arg2 : i32, i32
  }
  func.func @transform_1(%arg0: i32, %arg1: i32, %arg2: i32) -> (i32, i32) {
    %c0_i32 = arith.constant 0 : i32
    return %arg2, %arg1 : i32, i32
  }
  func.func @transform_2(%arg0: i32, %arg1: i32, %arg2: i32) -> (i32, i32) {
    %c0_i32 = arith.constant 0 : i32
    %c0_i32_0 = arith.constant 0 : i32
    return %c0_i32, %arg1 : i32, i32
  }
  func.func @transform_3(%arg0: i32, %arg1: i32, %arg2: i32) -> (i32, i32) {
    %c0_i32 = arith.constant 0 : i32
    return %arg0, %arg1 : i32, i32
  }
}

module attributes {stable_mosaic.version = 11 : i64} {
  func.func @ln_kernel(%arg0: i32, %arg1: memref<16x32xf32, #tpu.memory_space<vmem>>, %arg2: memref<16x1xf32, #tpu.memory_space<vmem>>, %arg3: memref<1x32xf32, #tpu.memory_space<vmem>>, %arg4: memref<1x32xf32, #tpu.memory_space<vmem>>, %arg5: memref<16x32xf32, #tpu.memory_space<vmem>>, %arg6: memref<16x32xbf16, #tpu.memory_space<vmem>>) attributes {dimension_semantics = [#tpu.dimension_semantics<parallel>], iteration_bounds = array<i64: 1>, scalar_prefetch = 0 : i64, scratch_operands = 0 : i64, tpu.core_type = #tpu.core_type<tc>, window_params = [{transform_indices = @transform_0, window_bounds = array<i64: 16, 32>}, {transform_indices = @transform_1, window_bounds = array<i64: 16, 1>}, {pipeline_mode = #tpu.pipeline_mode<synchronous>, transform_indices = @transform_2, window_bounds = array<i64: 1, 32>}, {pipeline_mode = #tpu.pipeline_mode<synchronous>, transform_indices = @transform_3, window_bounds = array<i64: 1, 32>}, {transform_indices = @transform_4, window_bounds = array<i64: 16, 32>}, {transform_indices = @transform_5, window_bounds = array<i64: 16, 32>}]} {
    %c0 = arith.constant 0 : index
    %c0_0 = arith.constant 0 : index
    %0 = vector.load %arg1[%c0, %c0_0] : memref<16x32xf32, #tpu.memory_space<vmem>>, vector<16x32xf32>
    %cst = arith.constant dense<0.000000e+00> : vector<16xf32>
    %1 = vector.multi_reduction <add>, %0, %cst [1] : vector<16x32xf32> to vector<16xf32>
    %2 = vector.shape_cast %1 : vector<16xf32> to vector<16x1xf32>
    %cst_1 = arith.constant 3.200000e+01 : f32
    %3 = vector.broadcast %cst_1 : f32 to vector<16x1xf32>
    %4 = arith.divf %2, %3 : vector<16x1xf32>
    %5 = vector.broadcast %4 : vector<16x1xf32> to vector<16x32xf32>
    %6 = arith.subf %0, %5 : vector<16x32xf32>
    %7 = arith.mulf %6, %6 : vector<16x32xf32>
    %cst_2 = arith.constant dense<0.000000e+00> : vector<16xf32>
    %8 = vector.multi_reduction <add>, %7, %cst_2 [1] : vector<16x32xf32> to vector<16xf32>
    %9 = vector.shape_cast %8 : vector<16xf32> to vector<16x1xf32>
    %cst_3 = arith.constant 3.200000e+01 : f32
    %10 = vector.broadcast %cst_3 : f32 to vector<16x1xf32>
    %11 = arith.divf %9, %10 : vector<16x1xf32>
    %cst_4 = arith.constant 9.99999996E-13 : f32
    %12 = vector.broadcast %cst_4 : f32 to vector<16x1xf32>
    %13 = arith.addf %11, %12 : vector<16x1xf32>
    %14 = math.rsqrt %13 : vector<16x1xf32>
    %15 = vector.broadcast %14 : vector<16x1xf32> to vector<16x32xf32>
    %16 = arith.mulf %6, %15 : vector<16x32xf32>
    %c0_5 = arith.constant 0 : index
    %c0_6 = arith.constant 0 : index
    %17 = vector.load %arg3[%c0_5, %c0_6] : memref<1x32xf32, #tpu.memory_space<vmem>>, vector<1x32xf32>
    %18 = vector.broadcast %17 : vector<1x32xf32> to vector<16x32xf32>
    %19 = arith.mulf %16, %18 : vector<16x32xf32>
    %c0_7 = arith.constant 0 : index
    %c0_8 = arith.constant 0 : index
    %20 = vector.load %arg4[%c0_7, %c0_8] : memref<1x32xf32, #tpu.memory_space<vmem>>, vector<1x32xf32>
    %21 = vector.broadcast %20 : vector<1x32xf32> to vector<16x32xf32>
    %22 = arith.addf %19, %21 : vector<16x32xf32>
    %c0_9 = arith.constant 0 : index
    %c0_10 = arith.constant 0 : index
    %23 = vector.load %arg2[%c0_9, %c0_10] : memref<16x1xf32, #tpu.memory_space<vmem>>, vector<16x1xf32>
    %24 = vector.broadcast %23 : vector<16x1xf32> to vector<16x32xf32>
    %25 = arith.mulf %22, %24 : vector<16x32xf32>
    %c0_11 = arith.constant 0 : index
    %c0_12 = arith.constant 0 : index
    %26 = vector.load %arg5[%c0_11, %c0_12] : memref<16x32xf32, #tpu.memory_space<vmem>>, vector<16x32xf32>
    tpu.vector_store %arg5[%c0_11, %c0_12], %25 {strides = array<i32>} : memref<16x32xf32, #tpu.memory_space<vmem>>, vector<16x32xf32>,
    %27 = arith.truncf %25 : vector<16x32xf32> to vector<16x32xbf16>
    %c0_13 = arith.constant 0 : index
    %c0_14 = arith.constant 0 : index
    %28 = vector.load %arg6[%c0_13, %c0_14] : memref<16x32xbf16, #tpu.memory_space<vmem>>, vector<16x32xbf16>
    tpu.vector_store %arg6[%c0_13, %c0_14], %27 {strides = array<i32>} : memref<16x32xbf16, #tpu.memory_space<vmem>>, vector<16x32xbf16>,
    return
  }
  func.func @transform_0(%arg0: i32) -> (i32, i32) {
    %c0_i32 = arith.constant 0 : i32
    %c0_i32_0 = arith.constant 0 : i32
    return %arg0, %c0_i32 : i32, i32
  }
  func.func @transform_1(%arg0: i32) -> (i32, i32) {
    %c0_i32 = arith.constant 0 : i32
    %c0_i32_0 = arith.constant 0 : i32
    return %arg0, %c0_i32 : i32, i32
  }
  func.func @transform_2(%arg0: i32) -> (i32, i32) {
    %c0_i32 = arith.constant 0 : i32
    %c0_i32_0 = arith.constant 0 : i32
    %c0_i32_1 = arith.constant 0 : i32
    return %c0_i32, %c0_i32_0 : i32, i32
  }
  func.func @transform_3(%arg0: i32) -> (i32, i32) {
    %c0_i32 = arith.constant 0 : i32
    %c0_i32_0 = arith.constant 0 : i32
    %c0_i32_1 = arith.constant 0 : i32
    return %c0_i32, %c0_i32_0 : i32, i32
  }
  func.func @transform_4(%arg0: i32) -> (i32, i32) {
    %c0_i32 = arith.constant 0 : i32
    %c0_i32_0 = arith.constant 0 : i32
    return %arg0, %c0_i32 : i32, i32
  }
  func.func @transform_5(%arg0: i32) -> (i32, i32) {
    %c0_i32 = arith.constant 0 : i32
    %c0_i32_0 = arith.constant 0 : i32
    return %arg0, %c0_i32 : i32, i32
  }
}

module attributes {stable_mosaic.version = 11 : i64} {
  func.func @flash_attn_kernel(%arg0: i32, %arg1: i32, %arg2: i32, %arg3: memref<2xi32, #tpu.memory_space<smem>>, %arg4: memref<1x8x1x4x8xbf16, #tpu.memory_space<vmem>>, %arg5: memref<1x8x1x4x8xbf16, #tpu.memory_space<vmem>>, %arg6: memref<1x8x1x4x8xbf16, #tpu.memory_space<vmem>>, %arg7: memref<1x8x4x8xbf16, #tpu.memory_space<vmem>>, %arg8: memref<4x8x8xbf16, #tpu.memory_space<vmem>>, %arg9: memref<4x8x1xf32, #tpu.memory_space<vmem>>, %arg10: memref<4x8x1xf32, #tpu.memory_space<vmem>>, %arg11: memref<4x8x8xf32, #tpu.memory_space<vmem>>) attributes {dimension_semantics = [#tpu.dimension_semantics<parallel>, #tpu.dimension_semantics<parallel>, #tpu.dimension_semantics<arbitrary>], iteration_bounds = array<i64: 2, 1, 1>, scalar_prefetch = 1 : i64, scratch_operands = 4 : i64, tpu.core_type = #tpu.core_type<tc>, window_params = [{transform_indices = @transform_0, window_bounds = array<i64: 1, 8, 1, 4, 8>}, {transform_indices = @transform_1, window_bounds = array<i64: 1, 8, 1, 4, 8>}, {transform_indices = @transform_2, window_bounds = array<i64: 1, 8, 1, 4, 8>}, {transform_indices = @transform_3, window_bounds = array<i64: 1, 8, 4, 8>}]} {
    %c0_i32 = arith.constant 0 : i32
    %0 = arith.cmpi eq, %arg2, %c0_i32 : i32
    %1 = arith.extui %0 : i1 to i32
    %c0_i32_0 = arith.constant 0 : i32
    %2 = arith.cmpi ne, %1, %c0_i32_0 : i32
    scf.if %2 {
      %c0 = arith.constant 0 : index
      %c0_4 = arith.constant 0 : index
      %c0_5 = arith.constant 0 : index
      %c0_6 = arith.constant 0 : index
      %c0_7 = arith.constant 0 : index
      %12 = vector.load %arg4[%c0, %c0_4, %c0_5, %c0_6, %c0_7] : memref<1x8x1x4x8xbf16, #tpu.memory_space<vmem>>, vector<1x8x1x4x8xbf16>
      %13 = vector.shape_cast %12 : vector<1x8x1x4x8xbf16> to vector<8x4x8xbf16>
      %14 = tpu.transpose %13, [1, 0, 2] : vector<8x4x8xbf16> -> vector<4x8x8xbf16>
      %c0_8 = arith.constant 0 : index
      %c0_9 = arith.constant 0 : index
      %c0_10 = arith.constant 0 : index
      %15 = vector.load %arg8[%c0_8, %c0_9, %c0_10] : memref<4x8x8xbf16, #tpu.memory_space<vmem>>, vector<4x8x8xbf16>
      tpu.vector_store %arg8[%c0_8, %c0_9, %c0_10], %14 {strides = array<i32>} : memref<4x8x8xbf16, #tpu.memory_space<vmem>>, vector<4x8x8xbf16>,
      %cst = arith.constant 0xFF800000 : f32
      %16 = vector.broadcast %cst : f32 to vector<4x8x1xf32>
      %c0_11 = arith.constant 0 : index
      %c0_12 = arith.constant 0 : index
      %c0_13 = arith.constant 0 : index
      %17 = vector.load %arg9[%c0_11, %c0_12, %c0_13] : memref<4x8x1xf32, #tpu.memory_space<vmem>>, vector<4x8x1xf32>
      tpu.vector_store %arg9[%c0_11, %c0_12, %c0_13], %16 {strides = array<i32>} : memref<4x8x1xf32, #tpu.memory_space<vmem>>, vector<4x8x1xf32>,
      %cst_14 = arith.constant 0.000000e+00 : f32
      %18 = vector.broadcast %cst_14 : f32 to vector<4x8x1xf32>
      %c0_15 = arith.constant 0 : index
      %c0_16 = arith.constant 0 : index
      %c0_17 = arith.constant 0 : index
      %19 = vector.load %arg10[%c0_15, %c0_16, %c0_17] : memref<4x8x1xf32, #tpu.memory_space<vmem>>, vector<4x8x1xf32>
      tpu.vector_store %arg10[%c0_15, %c0_16, %c0_17], %18 {strides = array<i32>} : memref<4x8x1xf32, #tpu.memory_space<vmem>>, vector<4x8x1xf32>,
      %cst_18 = arith.constant 0.000000e+00 : f32
      %20 = vector.broadcast %cst_18 : f32 to vector<4x8x8xf32>
      %c0_19 = arith.constant 0 : index
      %c0_20 = arith.constant 0 : index
      %c0_21 = arith.constant 0 : index
      %21 = vector.load %arg11[%c0_19, %c0_20, %c0_21] : memref<4x8x8xf32, #tpu.memory_space<vmem>>, vector<4x8x8xf32>
      tpu.vector_store %arg11[%c0_19, %c0_20, %c0_21], %20 {strides = array<i32>} : memref<4x8x8xf32, #tpu.memory_space<vmem>>, vector<4x8x8xf32>,
    } else {
    }
    %c8_i32 = arith.constant 8 : i32
    %3 = arith.muli %arg2, %c8_i32 : i32
    %4 = arith.index_cast %arg0 : i32 to index
    %5 = memref.load %arg3[%4] : memref<2xi32, #tpu.memory_space<smem>>
    %6 = arith.cmpi slt, %3, %5 : i32
    %7 = arith.extui %6 : i1 to i32
    %c0_i32_1 = arith.constant 0 : i32
    %8 = arith.cmpi ne, %7, %c0_i32_1 : i32
    scf.if %8 {
      %c0 = arith.constant 0 : index
      %c0_4 = arith.constant 0 : index
      %c0_5 = arith.constant 0 : index
      %c0_6 = arith.constant 0 : index
      %c0_7 = arith.constant 0 : index
      %12 = vector.load %arg5[%c0, %c0_4, %c0_5, %c0_6, %c0_7] : memref<1x8x1x4x8xbf16, #tpu.memory_space<vmem>>, vector<1x8x1x4x8xbf16>
      %13 = vector.shape_cast %12 : vector<1x8x1x4x8xbf16> to vector<8x4x8xbf16>
      %14 = tpu.transpose %13, [1, 0, 2] : vector<8x4x8xbf16> -> vector<4x8x8xbf16>
      %c0_8 = arith.constant 0 : index
      %c0_9 = arith.constant 0 : index
      %c0_10 = arith.constant 0 : index
      %c0_11 = arith.constant 0 : index
      %c0_12 = arith.constant 0 : index
      %15 = vector.load %arg6[%c0_8, %c0_9, %c0_10, %c0_11, %c0_12] : memref<1x8x1x4x8xbf16, #tpu.memory_space<vmem>>, vector<1x8x1x4x8xbf16>
      %16 = vector.shape_cast %15 : vector<1x8x1x4x8xbf16> to vector<8x4x8xbf16>
      %17 = tpu.transpose %16, [1, 0, 2] : vector<8x4x8xbf16> -> vector<4x8x8xbf16>
      %c0_13 = arith.constant 0 : index
      %c0_14 = arith.constant 0 : index
      %c0_15 = arith.constant 0 : index
      %18 = vector.load %arg8[%c0_13, %c0_14, %c0_15] : memref<4x8x8xbf16, #tpu.memory_space<vmem>>, vector<4x8x8xbf16>
      "tpu.trace_start"() <{level = 10 : i32, message = "hqd,hkd->hqk"}> : () -> ()
      %cst = arith.constant dense<0.000000e+00> : vector<4x8x8xf32>
      %19 = tpu.matmul %18, %14, %cst {dimension_numbers = #tpu.dot_dimension_numbers<[2], [2], [1], [1], [0, 0, 0, 1, 1, 1], [0], [0]>} : vector<4x8x8xbf16>, vector<4x8x8xbf16>, vector<4x8x8xf32> -> vector<4x8x8xf32>
      "tpu.trace_stop"() : () -> ()
      %c8_i32_16 = arith.constant 8 : i32
      %20 = arith.muli %arg2, %c8_i32_16 : i32
      %21 = tpu.iota {dimensions = array<i32: 2>} : vector<1x1x8xi32>
      %22 = vector.broadcast %20 : i32 to vector<1x1x8xi32>
      %23 = arith.addi %22, %21 : vector<1x1x8xi32>
      %24 = arith.index_cast %arg0 : i32 to index
      %25 = memref.load %arg3[%24] : memref<2xi32, #tpu.memory_space<smem>>
      %26 = vector.broadcast %25 : i32 to vector<1x1x8xi32>
      %27 = arith.cmpi slt, %23, %26 : vector<1x1x8xi32>
      %cst_17 = arith.constant -1.000000e+30 : f32
      %28 = vector.shape_cast %27 : vector<1x1x8xi1> to vector<1x1x8xi1>
      %29 = vector.broadcast %28 : vector<1x1x8xi1> to vector<4x8x8xi1>
      %30 = vector.broadcast %cst_17 : f32 to vector<4x8x8xf32>
      %31 = arith.select %29, %19, %30 : vector<4x8x8xi1>, vector<4x8x8xf32>
      %c0_18 = arith.constant 0 : index
      %c0_19 = arith.constant 0 : index
      %c0_20 = arith.constant 0 : index
      %32 = vector.load %arg9[%c0_18, %c0_19, %c0_20] : memref<4x8x1xf32, #tpu.memory_space<vmem>>, vector<4x8x1xf32>
      %cst_21 = arith.constant dense<0xFF800000> : vector<4x8xf32>
      %33 = vector.multi_reduction <maximumf>, %31, %cst_21 [2] : vector<4x8x8xf32> to vector<4x8xf32>
      %34 = vector.shape_cast %33 : vector<4x8xf32> to vector<4x8x1xf32>
      %35 = arith.maximumf %32, %34 : vector<4x8x1xf32>
      %36 = arith.subf %32, %35 : vector<4x8x1xf32>
      %37 = math.exp %36 : vector<4x8x1xf32>
      %38 = vector.broadcast %35 : vector<4x8x1xf32> to vector<4x8x8xf32>
      %39 = arith.subf %31, %38 : vector<4x8x8xf32>
      %40 = math.exp %39 : vector<4x8x8xf32>
      %c0_22 = arith.constant 0 : index
      %c0_23 = arith.constant 0 : index
      %c0_24 = arith.constant 0 : index
      %41 = vector.load %arg10[%c0_22, %c0_23, %c0_24] : memref<4x8x1xf32, #tpu.memory_space<vmem>>, vector<4x8x1xf32>
      %42 = arith.mulf %37, %41 : vector<4x8x1xf32>
      %cst_25 = arith.constant dense<0.000000e+00> : vector<4x8xf32>
      %43 = vector.multi_reduction <add>, %40, %cst_25 [2] : vector<4x8x8xf32> to vector<4x8xf32>
      %44 = vector.shape_cast %43 : vector<4x8xf32> to vector<4x8x1xf32>
      %45 = arith.addf %42, %44 : vector<4x8x1xf32>
      %c0_26 = arith.constant 0 : index
      %c0_27 = arith.constant 0 : index
      %c0_28 = arith.constant 0 : index
      %46 = vector.load %arg10[%c0_26, %c0_27, %c0_28] : memref<4x8x1xf32, #tpu.memory_space<vmem>>, vector<4x8x1xf32>
      tpu.vector_store %arg10[%c0_26, %c0_27, %c0_28], %45 {strides = array<i32>} : memref<4x8x1xf32, #tpu.memory_space<vmem>>, vector<4x8x1xf32>,
      %c0_29 = arith.constant 0 : index
      %c0_30 = arith.constant 0 : index
      %c0_31 = arith.constant 0 : index
      %47 = vector.load %arg11[%c0_29, %c0_30, %c0_31] : memref<4x8x8xf32, #tpu.memory_space<vmem>>, vector<4x8x8xf32>
      %48 = vector.broadcast %37 : vector<4x8x1xf32> to vector<4x8x8xf32>
      %49 = arith.mulf %48, %47 : vector<4x8x8xf32>
      %50 = arith.truncf %40 : vector<4x8x8xf32> to vector<4x8x8xbf16>
      "tpu.trace_start"() <{level = 10 : i32, message = "hqk,hkd->hqd"}> : () -> ()
      %cst_32 = arith.constant dense<0.000000e+00> : vector<4x8x8xf32>
      %51 = tpu.matmul %50, %17, %cst_32 {dimension_numbers = #tpu.dot_dimension_numbers<[2], [1], [1], [2], [0, 0, 0, 1, 1, 2], [0], [0]>} : vector<4x8x8xbf16>, vector<4x8x8xbf16>, vector<4x8x8xf32> -> vector<4x8x8xf32>
      "tpu.trace_stop"() : () -> ()
      %52 = arith.addf %49, %51 : vector<4x8x8xf32>
      %c0_33 = arith.constant 0 : index
      %c0_34 = arith.constant 0 : index
      %c0_35 = arith.constant 0 : index
      %53 = vector.load %arg11[%c0_33, %c0_34, %c0_35] : memref<4x8x8xf32, #tpu.memory_space<vmem>>, vector<4x8x8xf32>
      tpu.vector_store %arg11[%c0_33, %c0_34, %c0_35], %52 {strides = array<i32>} : memref<4x8x8xf32, #tpu.memory_space<vmem>>, vector<4x8x8xf32>,
      %c0_36 = arith.constant 0 : index
      %c0_37 = arith.constant 0 : index
      %c0_38 = arith.constant 0 : index
      %54 = vector.load %arg9[%c0_36, %c0_37, %c0_38] : memref<4x8x1xf32, #tpu.memory_space<vmem>>, vector<4x8x1xf32>
      tpu.vector_store %arg9[%c0_36, %c0_37, %c0_38], %35 {strides = array<i32>} : memref<4x8x1xf32, #tpu.memory_space<vmem>>, vector<4x8x1xf32>,
    } else {
    }
    %c0_i32_2 = arith.constant 0 : i32
    %9 = arith.cmpi eq, %arg2, %c0_i32_2 : i32
    %10 = arith.extui %9 : i1 to i32
    %c0_i32_3 = arith.constant 0 : i32
    %11 = arith.cmpi ne, %10, %c0_i32_3 : i32
    scf.if %11 {
      %c0 = arith.constant 0 : index
      %c0_4 = arith.constant 0 : index
      %c0_5 = arith.constant 0 : index
      %12 = vector.load %arg10[%c0, %c0_4, %c0_5] : memref<4x8x1xf32, #tpu.memory_space<vmem>>, vector<4x8x1xf32>
      %cst = arith.constant 0.000000e+00 : f32
      %13 = vector.broadcast %cst : f32 to vector<4x8x1xf32>
      %14 = arith.cmpf oeq, %12, %13 : vector<4x8x1xf32>
      %cst_6 = arith.constant 1.000000e+00 : f32
      %15 = vector.broadcast %cst_6 : f32 to vector<4x8x1xf32>
      %16 = arith.select %14, %15, %12 : vector<4x8x1xi1>, vector<4x8x1xf32>
      %17 = tpu.reciprocal %16 {approx = true} : vector<4x8x1xf32> -> vector<4x8x1xf32>
      %c0_7 = arith.constant 0 : index
      %c0_8 = arith.constant 0 : index
      %c0_9 = arith.constant 0 : index
      %18 = vector.load %arg11[%c0_7, %c0_8, %c0_9] : memref<4x8x8xf32, #tpu.memory_space<vmem>>, vector<4x8x8xf32>
      %19 = vector.broadcast %17 : vector<4x8x1xf32> to vector<4x8x8xf32>
      %20 = arith.mulf %18, %19 : vector<4x8x8xf32>
      %21 = tpu.transpose %20, [1, 0, 2] : vector<4x8x8xf32> -> vector<8x4x8xf32>
      %22 = arith.truncf %21 : vector<8x4x8xf32> to vector<8x4x8xbf16>
      %c0_10 = arith.constant 0 : index
      %c0_11 = arith.constant 0 : index
      %c0_12 = arith.constant 0 : index
      %c0_13 = arith.constant 0 : index
      %23 = vector.load %arg7[%c0_10, %c0_11, %c0_12, %c0_13] : memref<1x8x4x8xbf16, #tpu.memory_space<vmem>>, vector<1x8x4x8xbf16>
      %24 = vector.shape_cast %23 : vector<1x8x4x8xbf16> to vector<8x4x8xbf16>
      %25 = vector.shape_cast %22 : vector<8x4x8xbf16> to vector<1x8x4x8xbf16>
      tpu.vector_store %arg7[%c0_10, %c0_11, %c0_12, %c0_13], %25 {strides = array<i32>} : memref<1x8x4x8xbf16, #tpu.memory_space<vmem>>, vector<1x8x4x8xbf16>,
    } else {
    }
    return
  }
  func.func @transform_0(%arg0: i32, %arg1: i32, %arg2: i32, %arg3: memref<2xi32, #tpu.memory_space<smem>>) -> (i32, i32, i32, i32, i32) {
    %c0_i32 = arith.constant 0 : i32
    %c0_i32_0 = arith.constant 0 : i32
    %c0_i32_1 = arith.constant 0 : i32
    %c0_i32_2 = arith.constant 0 : i32
    return %arg0, %arg1, %c0_i32, %c0_i32_0, %c0_i32_1 : i32, i32, i32, i32, i32
  }
  func.func @transform_1(%arg0: i32, %arg1: i32, %arg2: i32, %arg3: memref<2xi32, #tpu.memory_space<smem>>) -> (i32, i32, i32, i32, i32) {
    %0 = arith.index_cast %arg0 : i32 to index
    %1 = memref.load %arg3[%0] : memref<2xi32, #tpu.memory_space<smem>>
    %c7_i32 = arith.constant 7 : i32
    %2 = arith.addi %1, %c7_i32 : i32
    %c8_i32 = arith.constant 8 : i32
    %3 = arith.divsi %2, %c8_i32 : i32
    %c1_i32 = arith.constant 1 : i32
    %4 = arith.subi %3, %c1_i32 : i32
    %c0_i32 = arith.constant 0 : i32
    %5 = arith.maxsi %4, %c0_i32 : i32
    %6 = arith.minsi %arg2, %5 : i32
    %c1_i32_0 = arith.constant 1 : i32
    %c0_i32_1 = arith.constant 0 : i32
    %c0_i32_2 = arith.constant 0 : i32
    %c0_i32_3 = arith.constant 0 : i32
    return %arg0, %6, %c1_i32_0, %c0_i32_1, %c0_i32_2 : i32, i32, i32, i32, i32
  }
  func.func @transform_2(%arg0: i32, %arg1: i32, %arg2: i32, %arg3: memref<2xi32, #tpu.memory_space<smem>>) -> (i32, i32, i32, i32, i32) {
    %0 = arith.index_cast %arg0 : i32 to index
    %1 = memref.load %arg3[%0] : memref<2xi32, #tpu.memory_space<smem>>
    %c7_i32 = arith.constant 7 : i32
    %2 = arith.addi %1, %c7_i32 : i32
    %c8_i32 = arith.constant 8 : i32
    %3 = arith.divsi %2, %c8_i32 : i32
    %c1_i32 = arith.constant 1 : i32
    %4 = arith.subi %3, %c1_i32 : i32
    %c0_i32 = arith.constant 0 : i32
    %5 = arith.maxsi %4, %c0_i32 : i32
    %6 = arith.minsi %arg2, %5 : i32
    %c2_i32 = arith.constant 2 : i32
    %c0_i32_0 = arith.constant 0 : i32
    %c0_i32_1 = arith.constant 0 : i32
    %c0_i32_2 = arith.constant 0 : i32
    return %arg0, %6, %c2_i32, %c0_i32_0, %c0_i32_1 : i32, i32, i32, i32, i32
  }
  func.func @transform_3(%arg0: i32, %arg1: i32, %arg2: i32, %arg3: memref<2xi32, #tpu.memory_space<smem>>) -> (i32, i32, i32, i32) {
    %c0_i32 = arith.constant 0 : i32
    %c0_i32_0 = arith.constant 0 : i32
    %c0_i32_1 = arith.constant 0 : i32
    return %arg0, %arg1, %c0_i32, %c0_i32_0 : i32, i32, i32, i32
  }
}

module attributes {stable_mosaic.version = 11 : i64} {
  func.func @matmul_kernel(%arg0: i32, %arg1: i32, %arg2: i32, %arg3: memref<16x32xbf16, #tpu.memory_space<vmem>>, %arg4: memref<32x32xbf16, #tpu.memory_space<vmem>>, %arg5: memref<1x32xf32, #tpu.memory_space<vmem>>, %arg6: memref<16x32xf32, #tpu.memory_space<vmem>>, %arg7: memref<16x32xf32, #tpu.memory_space<vmem>>, %arg8: memref<16x32xf32, #tpu.memory_space<vmem>>) attributes {dimension_semantics = [#tpu.dimension_semantics<parallel>, #tpu.dimension_semantics<parallel>, #tpu.dimension_semantics<arbitrary>], iteration_bounds = array<i64: 1, 1, 1>, scalar_prefetch = 0 : i64, scratch_operands = 1 : i64, tpu.core_type = #tpu.core_type<tc>, window_params = [{transform_indices = @transform_0, window_bounds = array<i64: 16, 32>}, {transform_indices = @transform_1, window_bounds = array<i64: 32, 32>}, {transform_indices = @transform_2, window_bounds = array<i64: 1, 32>}, {transform_indices = @transform_3, window_bounds = array<i64: 16, 32>}, {transform_indices = @transform_4, window_bounds = array<i64: 16, 32>}]} {
    %c0_i32 = arith.constant 0 : i32
    %0 = arith.cmpi eq, %arg2, %c0_i32 : i32
    %1 = arith.extui %0 : i1 to i32
    %c0_i32_0 = arith.constant 0 : i32
    %2 = arith.cmpi ne, %1, %c0_i32_0 : i32
    scf.if %2 {
      %cst_10 = arith.constant 0.000000e+00 : f32
      %12 = vector.broadcast %cst_10 : f32 to vector<16x32xf32>
      %c0_11 = arith.constant 0 : index
      %c0_12 = arith.constant 0 : index
      %13 = vector.load %arg8[%c0_11, %c0_12] : memref<16x32xf32, #tpu.memory_space<vmem>>, vector<16x32xf32>
      tpu.vector_store %arg8[%c0_11, %c0_12], %12 {strides = array<i32>} : memref<16x32xf32, #tpu.memory_space<vmem>>, vector<16x32xf32>,
    } else {
    }
    %c0 = arith.constant 0 : index
    %c0_1 = arith.constant 0 : index
    %3 = vector.load %arg8[%c0, %c0_1] : memref<16x32xf32, #tpu.memory_space<vmem>>, vector<16x32xf32>
    %c0_2 = arith.constant 0 : index
    %c0_3 = arith.constant 0 : index
    %4 = vector.load %arg3[%c0_2, %c0_3] : memref<16x32xbf16, #tpu.memory_space<vmem>>, vector<16x32xbf16>
    %c0_4 = arith.constant 0 : index
    %c0_5 = arith.constant 0 : index
    %5 = vector.load %arg4[%c0_4, %c0_5] : memref<32x32xbf16, #tpu.memory_space<vmem>>, vector<32x32xbf16>
    %cst = arith.constant dense<0.000000e+00> : vector<16x32xf32>
    %6 = tpu.matmul %4, %5, %cst {dimension_numbers = #tpu.dot_dimension_numbers<[1], [0], [0], [1], [0, 0, 1, 1], [], []>} : vector<16x32xbf16>, vector<32x32xbf16>, vector<16x32xf32> -> vector<16x32xf32>
    %7 = arith.addf %3, %6 : vector<16x32xf32>
    %c0_6 = arith.constant 0 : index
    %c0_7 = arith.constant 0 : index
    %8 = vector.load %arg8[%c0_6, %c0_7] : memref<16x32xf32, #tpu.memory_space<vmem>>, vector<16x32xf32>
    tpu.vector_store %arg8[%c0_6, %c0_7], %7 {strides = array<i32>} : memref<16x32xf32, #tpu.memory_space<vmem>>, vector<16x32xf32>,
    %c0_i32_8 = arith.constant 0 : i32
    %9 = arith.cmpi eq, %arg2, %c0_i32_8 : i32
    %10 = arith.extui %9 : i1 to i32
    %c0_i32_9 = arith.constant 0 : i32
    %11 = arith.cmpi ne, %10, %c0_i32_9 : i32
    scf.if %11 {
      %c0_10 = arith.constant 0 : index
      %c0_11 = arith.constant 0 : index
      %12 = vector.load %arg8[%c0_10, %c0_11] : memref<16x32xf32, #tpu.memory_space<vmem>>, vector<16x32xf32>
      %c0_12 = arith.constant 0 : index
      %c0_13 = arith.constant 0 : index
      %13 = vector.load %arg5[%c0_12, %c0_13] : memref<1x32xf32, #tpu.memory_space<vmem>>, vector<1x32xf32>
      %14 = vector.broadcast %13 : vector<1x32xf32> to vector<16x32xf32>
      %15 = arith.addf %12, %14 : vector<16x32xf32>
      %c0_14 = arith.constant 0 : index
      %c0_15 = arith.constant 0 : index
      %16 = vector.load %arg6[%c0_14, %c0_15] : memref<16x32xf32, #tpu.memory_space<vmem>>, vector<16x32xf32>
      %17 = arith.addf %15, %16 : vector<16x32xf32>
      %c0_16 = arith.constant 0 : index
      %c0_17 = arith.constant 0 : index
      %18 = vector.load %arg7[%c0_16, %c0_17] : memref<16x32xf32, #tpu.memory_space<vmem>>, vector<16x32xf32>
      tpu.vector_store %arg7[%c0_16, %c0_17], %17 {strides = array<i32>} : memref<16x32xf32, #tpu.memory_space<vmem>>, vector<16x32xf32>,
    } else {
    }
    return
  }
  func.func @transform_0(%arg0: i32, %arg1: i32, %arg2: i32) -> (i32, i32) {
    %c0_i32 = arith.constant 0 : i32
    return %arg0, %arg2 : i32, i32
  }
  func.func @transform_1(%arg0: i32, %arg1: i32, %arg2: i32) -> (i32, i32) {
    %c0_i32 = arith.constant 0 : i32
    return %arg2, %arg1 : i32, i32
  }
  func.func @transform_2(%arg0: i32, %arg1: i32, %arg2: i32) -> (i32, i32) {
    %c0_i32 = arith.constant 0 : i32
    %c0_i32_0 = arith.constant 0 : i32
    return %c0_i32, %arg1 : i32, i32
  }
  func.func @transform_3(%arg0: i32, %arg1: i32, %arg2: i32) -> (i32, i32) {
    %c0_i32 = arith.constant 0 : i32
    return %arg0, %arg1 : i32, i32
  }
  func.func @transform_4(%arg0: i32, %arg1: i32, %arg2: i32) -> (i32, i32) {
    %c0_i32 = arith.constant 0 : i32
    return %arg0, %arg1 : i32, i32
  }
}

module attributes {stable_mosaic.version = 11 : i64} {
  func.func @ln_kernel(%arg0: i32, %arg1: memref<16x32xf32, #tpu.memory_space<vmem>>, %arg2: memref<1x32xf32, #tpu.memory_space<vmem>>, %arg3: memref<1x32xf32, #tpu.memory_space<vmem>>, %arg4: memref<16x32xf32, #tpu.memory_space<vmem>>, %arg5: memref<16x32xbf16, #tpu.memory_space<vmem>>) attributes {dimension_semantics = [#tpu.dimension_semantics<parallel>], iteration_bounds = array<i64: 1>, scalar_prefetch = 0 : i64, scratch_operands = 0 : i64, tpu.core_type = #tpu.core_type<tc>, window_params = [{transform_indices = @transform_0, window_bounds = array<i64: 16, 32>}, {pipeline_mode = #tpu.pipeline_mode<synchronous>, transform_indices = @transform_1, window_bounds = array<i64: 1, 32>}, {pipeline_mode = #tpu.pipeline_mode<synchronous>, transform_indices = @transform_2, window_bounds = array<i64: 1, 32>}, {transform_indices = @transform_3, window_bounds = array<i64: 16, 32>}, {transform_indices = @transform_4, window_bounds = array<i64: 16, 32>}]} {
    %c0 = arith.constant 0 : index
    %c0_0 = arith.constant 0 : index
    %0 = vector.load %arg1[%c0, %c0_0] : memref<16x32xf32, #tpu.memory_space<vmem>>, vector<16x32xf32>
    %cst = arith.constant dense<0.000000e+00> : vector<16xf32>
    %1 = vector.multi_reduction <add>, %0, %cst [1] : vector<16x32xf32> to vector<16xf32>
    %2 = vector.shape_cast %1 : vector<16xf32> to vector<16x1xf32>
    %cst_1 = arith.constant 3.200000e+01 : f32
    %3 = vector.broadcast %cst_1 : f32 to vector<16x1xf32>
    %4 = arith.divf %2, %3 : vector<16x1xf32>
    %5 = vector.broadcast %4 : vector<16x1xf32> to vector<16x32xf32>
    %6 = arith.subf %0, %5 : vector<16x32xf32>
    %7 = arith.mulf %6, %6 : vector<16x32xf32>
    %cst_2 = arith.constant dense<0.000000e+00> : vector<16xf32>
    %8 = vector.multi_reduction <add>, %7, %cst_2 [1] : vector<16x32xf32> to vector<16xf32>
    %9 = vector.shape_cast %8 : vector<16xf32> to vector<16x1xf32>
    %cst_3 = arith.constant 3.200000e+01 : f32
    %10 = vector.broadcast %cst_3 : f32 to vector<16x1xf32>
    %11 = arith.divf %9, %10 : vector<16x1xf32>
    %cst_4 = arith.constant 9.99999996E-13 : f32
    %12 = vector.broadcast %cst_4 : f32 to vector<16x1xf32>
    %13 = arith.addf %11, %12 : vector<16x1xf32>
    %14 = math.rsqrt %13 : vector<16x1xf32>
    %15 = vector.broadcast %14 : vector<16x1xf32> to vector<16x32xf32>
    %16 = arith.mulf %6, %15 : vector<16x32xf32>
    %c0_5 = arith.constant 0 : index
    %c0_6 = arith.constant 0 : index
    %17 = vector.load %arg2[%c0_5, %c0_6] : memref<1x32xf32, #tpu.memory_space<vmem>>, vector<1x32xf32>
    %18 = vector.broadcast %17 : vector<1x32xf32> to vector<16x32xf32>
    %19 = arith.mulf %16, %18 : vector<16x32xf32>
    %c0_7 = arith.constant 0 : index
    %c0_8 = arith.constant 0 : index
    %20 = vector.load %arg3[%c0_7, %c0_8] : memref<1x32xf32, #tpu.memory_space<vmem>>, vector<1x32xf32>
    %21 = vector.broadcast %20 : vector<1x32xf32> to vector<16x32xf32>
    %22 = arith.addf %19, %21 : vector<16x32xf32>
    %c0_9 = arith.constant 0 : index
    %c0_10 = arith.constant 0 : index
    %23 = vector.load %arg4[%c0_9, %c0_10] : memref<16x32xf32, #tpu.memory_space<vmem>>, vector<16x32xf32>
    tpu.vector_store %arg4[%c0_9, %c0_10], %22 {strides = array<i32>} : memref<16x32xf32, #tpu.memory_space<vmem>>, vector<16x32xf32>,
    %24 = arith.truncf %22 : vector<16x32xf32> to vector<16x32xbf16>
    %c0_11 = arith.constant 0 : index
    %c0_12 = arith.constant 0 : index
    %25 = vector.load %arg5[%c0_11, %c0_12] : memref<16x32xbf16, #tpu.memory_space<vmem>>, vector<16x32xbf16>
    tpu.vector_store %arg5[%c0_11, %c0_12], %24 {strides = array<i32>} : memref<16x32xbf16, #tpu.memory_space<vmem>>, vector<16x32xbf16>,
    return
  }
  func.func @transform_0(%arg0: i32) -> (i32, i32) {
    %c0_i32 = arith.constant 0 : i32
    %c0_i32_0 = arith.constant 0 : i32
    return %arg0, %c0_i32 : i32, i32
  }
  func.func @transform_1(%arg0: i32) -> (i32, i32) {
    %c0_i32 = arith.constant 0 : i32
    %c0_i32_0 = arith.constant 0 : i32
    %c0_i32_1 = arith.constant 0 : i32
    return %c0_i32, %c0_i32_0 : i32, i32
  }
  func.func @transform_2(%arg0: i32) -> (i32, i32) {
    %c0_i32 = arith.constant 0 : i32
    %c0_i32_0 = arith.constant 0 : i32
    %c0_i32_1 = arith.constant 0 : i32
    return %c0_i32, %c0_i32_0 : i32, i32
  }
  func.func @transform_3(%arg0: i32) -> (i32, i32) {
    %c0_i32 = arith.constant 0 : i32
    %c0_i32_0 = arith.constant 0 : i32
    return %arg0, %c0_i32 : i32, i32
  }
  func.func @transform_4(%arg0: i32) -> (i32, i32) {
    %c0_i32 = arith.constant 0 : i32
    %c0_i32_0 = arith.constant 0 : i32
    return %arg0, %c0_i32 : i32, i32
  }
}

module attributes {stable_mosaic.version = 11 : i64} {
  func.func @matmul_kernel(%arg0: i32, %arg1: i32, %arg2: i32, %arg3: memref<16x32xbf16, #tpu.memory_space<vmem>>, %arg4: memref<32x128xbf16, #tpu.memory_space<vmem>>, %arg5: memref<1x128xf32, #tpu.memory_space<vmem>>, %arg6: memref<16x128xbf16, #tpu.memory_space<vmem>>, %arg7: memref<16x128xf32, #tpu.memory_space<vmem>>) attributes {dimension_semantics = [#tpu.dimension_semantics<parallel>, #tpu.dimension_semantics<parallel>, #tpu.dimension_semantics<arbitrary>], iteration_bounds = array<i64: 1, 1, 1>, scalar_prefetch = 0 : i64, scratch_operands = 1 : i64, tpu.core_type = #tpu.core_type<tc>, window_params = [{transform_indices = @transform_0, window_bounds = array<i64: 16, 32>}, {transform_indices = @transform_1, window_bounds = array<i64: 32, 128>}, {transform_indices = @transform_2, window_bounds = array<i64: 1, 128>}, {transform_indices = @transform_3, window_bounds = array<i64: 16, 128>}]} {
    %c0_i32 = arith.constant 0 : i32
    %0 = arith.cmpi eq, %arg2, %c0_i32 : i32
    %1 = arith.extui %0 : i1 to i32
    %c0_i32_0 = arith.constant 0 : i32
    %2 = arith.cmpi ne, %1, %c0_i32_0 : i32
    scf.if %2 {
      %cst_10 = arith.constant 0.000000e+00 : f32
      %12 = vector.broadcast %cst_10 : f32 to vector<16x128xf32>
      %c0_11 = arith.constant 0 : index
      %c0_12 = arith.constant 0 : index
      %13 = vector.load %arg7[%c0_11, %c0_12] : memref<16x128xf32, #tpu.memory_space<vmem>>, vector<16x128xf32>
      tpu.vector_store %arg7[%c0_11, %c0_12], %12 {strides = array<i32>} : memref<16x128xf32, #tpu.memory_space<vmem>>, vector<16x128xf32>,
    } else {
    }
    %c0 = arith.constant 0 : index
    %c0_1 = arith.constant 0 : index
    %3 = vector.load %arg7[%c0, %c0_1] : memref<16x128xf32, #tpu.memory_space<vmem>>, vector<16x128xf32>
    %c0_2 = arith.constant 0 : index
    %c0_3 = arith.constant 0 : index
    %4 = vector.load %arg3[%c0_2, %c0_3] : memref<16x32xbf16, #tpu.memory_space<vmem>>, vector<16x32xbf16>
    %c0_4 = arith.constant 0 : index
    %c0_5 = arith.constant 0 : index
    %5 = vector.load %arg4[%c0_4, %c0_5] : memref<32x128xbf16, #tpu.memory_space<vmem>>, vector<32x128xbf16>
    %cst = arith.constant dense<0.000000e+00> : vector<16x128xf32>
    %6 = tpu.matmul %4, %5, %cst {dimension_numbers = #tpu.dot_dimension_numbers<[1], [0], [0], [1], [0, 0, 1, 1], [], []>} : vector<16x32xbf16>, vector<32x128xbf16>, vector<16x128xf32> -> vector<16x128xf32>
    %7 = arith.addf %3, %6 : vector<16x128xf32>
    %c0_6 = arith.constant 0 : index
    %c0_7 = arith.constant 0 : index
    %8 = vector.load %arg7[%c0_6, %c0_7] : memref<16x128xf32, #tpu.memory_space<vmem>>, vector<16x128xf32>
    tpu.vector_store %arg7[%c0_6, %c0_7], %7 {strides = array<i32>} : memref<16x128xf32, #tpu.memory_space<vmem>>, vector<16x128xf32>,
    %c0_i32_8 = arith.constant 0 : i32
    %9 = arith.cmpi eq, %arg2, %c0_i32_8 : i32
    %10 = arith.extui %9 : i1 to i32
    %c0_i32_9 = arith.constant 0 : i32
    %11 = arith.cmpi ne, %10, %c0_i32_9 : i32
    scf.if %11 {
      %c0_10 = arith.constant 0 : index
      %c0_11 = arith.constant 0 : index
      %12 = vector.load %arg7[%c0_10, %c0_11] : memref<16x128xf32, #tpu.memory_space<vmem>>, vector<16x128xf32>
      %c0_12 = arith.constant 0 : index
      %c0_13 = arith.constant 0 : index
      %13 = vector.load %arg5[%c0_12, %c0_13] : memref<1x128xf32, #tpu.memory_space<vmem>>, vector<1x128xf32>
      %14 = vector.broadcast %13 : vector<1x128xf32> to vector<16x128xf32>
      %15 = arith.addf %12, %14 : vector<16x128xf32>
      %cst_14 = arith.constant 5.000000e-01 : f32
      %16 = vector.broadcast %cst_14 : f32 to vector<16x128xf32>
      %17 = arith.mulf %16, %15 : vector<16x128xf32>
      %cst_15 = arith.constant 1.41421354 : f32
      %18 = vector.broadcast %cst_15 : f32 to vector<16x128xf32>
      %19 = arith.divf %15, %18 : vector<16x128xf32>
      %20 = math.erf %19 : vector<16x128xf32>
      %cst_16 = arith.constant 1.000000e+00 : f32
      %21 = vector.broadcast %cst_16 : f32 to vector<16x128xf32>
      %22 = arith.addf %21, %20 : vector<16x128xf32>
      %23 = arith.mulf %17, %22 : vector<16x128xf32>
      %24 = arith.truncf %23 : vector<16x128xf32> to vector<16x128xbf16>
      %c0_17 = arith.constant 0 : index
      %c0_18 = arith.constant 0 : index
      %25 = vector.load %arg6[%c0_17, %c0_18] : memref<16x128xbf16, #tpu.memory_space<vmem>>, vector<16x128xbf16>
      tpu.vector_store %arg6[%c0_17, %c0_18], %24 {strides = array<i32>} : memref<16x128xbf16, #tpu.memory_space<vmem>>, vector<16x128xbf16>,
    } else {
    }
    return
  }
  func.func @transform_0(%arg0: i32, %arg1: i32, %arg2: i32) -> (i32, i32) {
    %c0_i32 = arith.constant 0 : i32
    return %arg0, %arg2 : i32, i32
  }
  func.func @transform_1(%arg0: i32, %arg1: i32, %arg2: i32) -> (i32, i32) {
    %c0_i32 = arith.constant 0 : i32
    return %arg2, %arg1 : i32, i32
  }
  func.func @transform_2(%arg0: i32, %arg1: i32, %arg2: i32) -> (i32, i32) {
    %c0_i32 = arith.constant 0 : i32
    %c0_i32_0 = arith.constant 0 : i32
    return %c0_i32, %arg1 : i32, i32
  }
  func.func @transform_3(%arg0: i32, %arg1: i32, %arg2: i32) -> (i32, i32) {
    %c0_i32 = arith.constant 0 : i32
    return %arg0, %arg1 : i32, i32
  }
}

module attributes {stable_mosaic.version = 11 : i64} {
  func.func @matmul_kernel(%arg0: i32, %arg1: i32, %arg2: i32, %arg3: memref<16x128xbf16, #tpu.memory_space<vmem>>, %arg4: memref<128x32xbf16, #tpu.memory_space<vmem>>, %arg5: memref<1x32xf32, #tpu.memory_space<vmem>>, %arg6: memref<16x32xf32, #tpu.memory_space<vmem>>, %arg7: memref<16x32xf32, #tpu.memory_space<vmem>>, %arg8: memref<16x32xf32, #tpu.memory_space<vmem>>) attributes {dimension_semantics = [#tpu.dimension_semantics<parallel>, #tpu.dimension_semantics<parallel>, #tpu.dimension_semantics<arbitrary>], iteration_bounds = array<i64: 1, 1, 1>, scalar_prefetch = 0 : i64, scratch_operands = 1 : i64, tpu.core_type = #tpu.core_type<tc>, window_params = [{transform_indices = @transform_0, window_bounds = array<i64: 16, 128>}, {transform_indices = @transform_1, window_bounds = array<i64: 128, 32>}, {transform_indices = @transform_2, window_bounds = array<i64: 1, 32>}, {transform_indices = @transform_3, window_bounds = array<i64: 16, 32>}, {transform_indices = @transform_4, window_bounds = array<i64: 16, 32>}]} {
    %c0_i32 = arith.constant 0 : i32
    %0 = arith.cmpi eq, %arg2, %c0_i32 : i32
    %1 = arith.extui %0 : i1 to i32
    %c0_i32_0 = arith.constant 0 : i32
    %2 = arith.cmpi ne, %1, %c0_i32_0 : i32
    scf.if %2 {
      %cst_10 = arith.constant 0.000000e+00 : f32
      %12 = vector.broadcast %cst_10 : f32 to vector<16x32xf32>
      %c0_11 = arith.constant 0 : index
      %c0_12 = arith.constant 0 : index
      %13 = vector.load %arg8[%c0_11, %c0_12] : memref<16x32xf32, #tpu.memory_space<vmem>>, vector<16x32xf32>
      tpu.vector_store %arg8[%c0_11, %c0_12], %12 {strides = array<i32>} : memref<16x32xf32, #tpu.memory_space<vmem>>, vector<16x32xf32>,
    } else {
    }
    %c0 = arith.constant 0 : index
    %c0_1 = arith.constant 0 : index
    %3 = vector.load %arg8[%c0, %c0_1] : memref<16x32xf32, #tpu.memory_space<vmem>>, vector<16x32xf32>
    %c0_2 = arith.constant 0 : index
    %c0_3 = arith.constant 0 : index
    %4 = vector.load %arg3[%c0_2, %c0_3] : memref<16x128xbf16, #tpu.memory_space<vmem>>, vector<16x128xbf16>
    %c0_4 = arith.constant 0 : index
    %c0_5 = arith.constant 0 : index
    %5 = vector.load %arg4[%c0_4, %c0_5] : memref<128x32xbf16, #tpu.memory_space<vmem>>, vector<128x32xbf16>
    %cst = arith.constant dense<0.000000e+00> : vector<16x32xf32>
    %6 = tpu.matmul %4, %5, %cst {dimension_numbers = #tpu.dot_dimension_numbers<[1], [0], [0], [1], [0, 0, 1, 1], [], []>} : vector<16x128xbf16>, vector<128x32xbf16>, vector<16x32xf32> -> vector<16x32xf32>
    %7 = arith.addf %3, %6 : vector<16x32xf32>
    %c0_6 = arith.constant 0 : index
    %c0_7 = arith.constant 0 : index
    %8 = vector.load %arg8[%c0_6, %c0_7] : memref<16x32xf32, #tpu.memory_space<vmem>>, vector<16x32xf32>
    tpu.vector_store %arg8[%c0_6, %c0_7], %7 {strides = array<i32>} : memref<16x32xf32, #tpu.memory_space<vmem>>, vector<16x32xf32>,
    %c0_i32_8 = arith.constant 0 : i32
    %9 = arith.cmpi eq, %arg2, %c0_i32_8 : i32
    %10 = arith.extui %9 : i1 to i32
    %c0_i32_9 = arith.constant 0 : i32
    %11 = arith.cmpi ne, %10, %c0_i32_9 : i32
    scf.if %11 {
      %c0_10 = arith.constant 0 : index
      %c0_11 = arith.constant 0 : index
      %12 = vector.load %arg8[%c0_10, %c0_11] : memref<16x32xf32, #tpu.memory_space<vmem>>, vector<16x32xf32>
      %c0_12 = arith.constant 0 : index
      %c0_13 = arith.constant 0 : index
      %13 = vector.load %arg5[%c0_12, %c0_13] : memref<1x32xf32, #tpu.memory_space<vmem>>, vector<1x32xf32>
      %14 = vector.broadcast %13 : vector<1x32xf32> to vector<16x32xf32>
      %15 = arith.addf %12, %14 : vector<16x32xf32>
      %c0_14 = arith.constant 0 : index
      %c0_15 = arith.constant 0 : index
      %16 = vector.load %arg6[%c0_14, %c0_15] : memref<16x32xf32, #tpu.memory_space<vmem>>, vector<16x32xf32>
      %17 = arith.addf %15, %16 : vector<16x32xf32>
      %c0_16 = arith.constant 0 : index
      %c0_17 = arith.constant 0 : index
      %18 = vector.load %arg7[%c0_16, %c0_17] : memref<16x32xf32, #tpu.memory_space<vmem>>, vector<16x32xf32>
      tpu.vector_store %arg7[%c0_16, %c0_17], %17 {strides = array<i32>} : memref<16x32xf32, #tpu.memory_space<vmem>>, vector<16x32xf32>,
    } else {
    }
    return
  }
  func.func @transform_0(%arg0: i32, %arg1: i32, %arg2: i32) -> (i32, i32) {
    %c0_i32 = arith.constant 0 : i32
    return %arg0, %arg2 : i32, i32
  }
  func.func @transform_1(%arg0: i32, %arg1: i32, %arg2: i32) -> (i32, i32) {
    %c0_i32 = arith.constant 0 : i32
    return %arg2, %arg1 : i32, i32
  }
  func.func @transform_2(%arg0: i32, %arg1: i32, %arg2: i32) -> (i32, i32) {
    %c0_i32 = arith.constant 0 : i32
    %c0_i32_0 = arith.constant 0 : i32
    return %c0_i32, %arg1 : i32, i32
  }
  func.func @transform_3(%arg0: i32, %arg1: i32, %arg2: i32) -> (i32, i32) {
    %c0_i32 = arith.constant 0 : i32
    return %arg0, %arg1 : i32, i32
  }
  func.func @transform_4(%arg0: i32, %arg1: i32, %arg2: i32) -> (i32, i32) {
    %c0_i32 = arith.constant 0 : i32
    return %arg0, %arg1 : i32, i32
  }
}

module attributes {stable_mosaic.version = 11 : i64} {
  func.func @ln_kernel(%arg0: i32, %arg1: memref<16x32xf32, #tpu.memory_space<vmem>>, %arg2: memref<16x1xf32, #tpu.memory_space<vmem>>, %arg3: memref<1x32xf32, #tpu.memory_space<vmem>>, %arg4: memref<1x32xf32, #tpu.memory_space<vmem>>, %arg5: memref<16x32xf32, #tpu.memory_space<vmem>>, %arg6: memref<16x32xbf16, #tpu.memory_space<vmem>>) attributes {dimension_semantics = [#tpu.dimension_semantics<parallel>], iteration_bounds = array<i64: 1>, scalar_prefetch = 0 : i64, scratch_operands = 0 : i64, tpu.core_type = #tpu.core_type<tc>, window_params = [{transform_indices = @transform_0, window_bounds = array<i64: 16, 32>}, {transform_indices = @transform_1, window_bounds = array<i64: 16, 1>}, {pipeline_mode = #tpu.pipeline_mode<synchronous>, transform_indices = @transform_2, window_bounds = array<i64: 1, 32>}, {pipeline_mode = #tpu.pipeline_mode<synchronous>, transform_indices = @transform_3, window_bounds = array<i64: 1, 32>}, {transform_indices = @transform_4, window_bounds = array<i64: 16, 32>}, {transform_indices = @transform_5, window_bounds = array<i64: 16, 32>}]} {
    %c0 = arith.constant 0 : index
    %c0_0 = arith.constant 0 : index
    %0 = vector.load %arg1[%c0, %c0_0] : memref<16x32xf32, #tpu.memory_space<vmem>>, vector<16x32xf32>
    %cst = arith.constant dense<0.000000e+00> : vector<16xf32>
    %1 = vector.multi_reduction <add>, %0, %cst [1] : vector<16x32xf32> to vector<16xf32>
    %2 = vector.shape_cast %1 : vector<16xf32> to vector<16x1xf32>
    %cst_1 = arith.constant 3.200000e+01 : f32
    %3 = vector.broadcast %cst_1 : f32 to vector<16x1xf32>
    %4 = arith.divf %2, %3 : vector<16x1xf32>
    %5 = vector.broadcast %4 : vector<16x1xf32> to vector<16x32xf32>
    %6 = arith.subf %0, %5 : vector<16x32xf32>
    %7 = arith.mulf %6, %6 : vector<16x32xf32>
    %cst_2 = arith.constant dense<0.000000e+00> : vector<16xf32>
    %8 = vector.multi_reduction <add>, %7, %cst_2 [1] : vector<16x32xf32> to vector<16xf32>
    %9 = vector.shape_cast %8 : vector<16xf32> to vector<16x1xf32>
    %cst_3 = arith.constant 3.200000e+01 : f32
    %10 = vector.broadcast %cst_3 : f32 to vector<16x1xf32>
    %11 = arith.divf %9, %10 : vector<16x1xf32>
    %cst_4 = arith.constant 9.99999996E-13 : f32
    %12 = vector.broadcast %cst_4 : f32 to vector<16x1xf32>
    %13 = arith.addf %11, %12 : vector<16x1xf32>
    %14 = math.rsqrt %13 : vector<16x1xf32>
    %15 = vector.broadcast %14 : vector<16x1xf32> to vector<16x32xf32>
    %16 = arith.mulf %6, %15 : vector<16x32xf32>
    %c0_5 = arith.constant 0 : index
    %c0_6 = arith.constant 0 : index
    %17 = vector.load %arg3[%c0_5, %c0_6] : memref<1x32xf32, #tpu.memory_space<vmem>>, vector<1x32xf32>
    %18 = vector.broadcast %17 : vector<1x32xf32> to vector<16x32xf32>
    %19 = arith.mulf %16, %18 : vector<16x32xf32>
    %c0_7 = arith.constant 0 : index
    %c0_8 = arith.constant 0 : index
    %20 = vector.load %arg4[%c0_7, %c0_8] : memref<1x32xf32, #tpu.memory_space<vmem>>, vector<1x32xf32>
    %21 = vector.broadcast %20 : vector<1x32xf32> to vector<16x32xf32>
    %22 = arith.addf %19, %21 : vector<16x32xf32>
    %c0_9 = arith.constant 0 : index
    %c0_10 = arith.constant 0 : index
    %23 = vector.load %arg2[%c0_9, %c0_10] : memref<16x1xf32, #tpu.memory_space<vmem>>, vector<16x1xf32>
    %24 = vector.broadcast %23 : vector<16x1xf32> to vector<16x32xf32>
    %25 = arith.mulf %22, %24 : vector<16x32xf32>
    %c0_11 = arith.constant 0 : index
    %c0_12 = arith.constant 0 : index
    %26 = vector.load %arg5[%c0_11, %c0_12] : memref<16x32xf32, #tpu.memory_space<vmem>>, vector<16x32xf32>
    tpu.vector_store %arg5[%c0_11, %c0_12], %25 {strides = array<i32>} : memref<16x32xf32, #tpu.memory_space<vmem>>, vector<16x32xf32>,
    %27 = arith.truncf %25 : vector<16x32xf32> to vector<16x32xbf16>
    %c0_13 = arith.constant 0 : index
    %c0_14 = arith.constant 0 : index
    %28 = vector.load %arg6[%c0_13, %c0_14] : memref<16x32xbf16, #tpu.memory_space<vmem>>, vector<16x32xbf16>
    tpu.vector_store %arg6[%c0_13, %c0_14], %27 {strides = array<i32>} : memref<16x32xbf16, #tpu.memory_space<vmem>>, vector<16x32xbf16>,
    return
  }
  func.func @transform_0(%arg0: i32) -> (i32, i32) {
    %c0_i32 = arith.constant 0 : i32
    %c0_i32_0 = arith.constant 0 : i32
    return %arg0, %c0_i32 : i32, i32
  }
  func.func @transform_1(%arg0: i32) -> (i32, i32) {
    %c0_i32 = arith.constant 0 : i32
    %c0_i32_0 = arith.constant 0 : i32
    return %arg0, %c0_i32 : i32, i32
  }
  func.func @transform_2(%arg0: i32) -> (i32, i32) {
    %c0_i32 = arith.constant 0 : i32
    %c0_i32_0 = arith.constant 0 : i32
    %c0_i32_1 = arith.constant 0 : i32
    return %c0_i32, %c0_i32_0 : i32, i32
  }
  func.func @transform_3(%arg0: i32) -> (i32, i32) {
    %c0_i32 = arith.constant 0 : i32
    %c0_i32_0 = arith.constant 0 : i32
    %c0_i32_1 = arith.constant 0 : i32
    return %c0_i32, %c0_i32_0 : i32, i32
  }
  func.func @transform_4(%arg0: i32) -> (i32, i32) {
    %c0_i32 = arith.constant 0 : i32
    %c0_i32_0 = arith.constant 0 : i32
    return %arg0, %c0_i32 : i32, i32
  }
  func.func @transform_5(%arg0: i32) -> (i32, i32) {
    %c0_i32 = arith.constant 0 : i32
    %c0_i32_0 = arith.constant 0 : i32
    return %arg0, %c0_i32 : i32, i32
  }
}

</mosaic_0001>

<llo_original>
// kernel: transformer_fwd.16
$region0: #{transformer_fwd.16}
  #allocation0 [shape = 'u32[]', space=smem, size = 0x4, offset = 0x4, fixed_abs, tag = 'smem constant byte address 0x4 - core index']
  #allocation1 [shape = 'u32[144,128]{1,0:T(1,128)}', space=vmem, size = 0x12000, scoped, tag = 'internal scratch']
  #allocation2 [shape = 'f32[16,96]{1,0:T(8,128)}', space=vmem, size = 0x2000, scoped, tag = 'scratch operand']
  %s0 = inlined_call_operand.vmem [shape: bf16[16,32], index: 0, kind: input, shape index: {}]
  %s1 = inlined_call_operand.vmem [shape: bf16[32,96], index: 1, kind: input, shape index: {}]
  %s2 = inlined_call_operand.vmem [shape: f32[1,96], index: 2, kind: input, shape index: {}]
  %s3 = inlined_call_operand.vmem [shape: bf16[16,96], index: 3, kind: output, shape index: {}]
  %s4 = sld [smem:[#allocation0]]
  $region30: #{transformer_fwd.16} parent=0
    _
  %s6 = ssub.s32 1, %s4
  %s7 = scalar_select 0, %s6, %s4
  // Predicated region
  $region2: #{transformer_fwd.16} parent=0 // pred_check
    _
  $region3: #{transformer_fwd.16} parent=0 // pred_check_branch
    %9 = sbr.rel (0) target = $region5
  $region4: #{transformer_fwd.16} parent=0 // pred_region
    _
  $region5: #{transformer_fwd.16} parent=0 // pred_fallthru
    _
  // Predicated region
  $region6: #{transformer_fwd.16} parent=0 // pred_check
    _
  $region7: #{transformer_fwd.16} parent=0 // pred_check_branch
    %11 = sbr.rel (0) target = $region9
  $region8: #{transformer_fwd.16} parent=0 // pred_region
    _
  $region9: #{transformer_fwd.16} parent=0 // pred_fallthru
    _
  // Predicated region
  $region10: #{transformer_fwd.16} parent=0 // pred_check
    _
  $region11: #{transformer_fwd.16} parent=0 // pred_check_branch
    %13 = sbr.rel (0) target = $region13
  $region12: #{transformer_fwd.16} parent=0 // pred_region
    _
  $region13: #{transformer_fwd.16} parent=0 // pred_fallthru
    _
  %p15 = scmp.eq.s32.totalorder 0, 0
  // Predicated region
  $region14: #{transformer_fwd.16} parent=0 // pred_check
    %p16 = pneg %p15
  $region15: #{transformer_fwd.16} parent=0 // pred_check_branch
    %18 = sbr.rel (%p16) target = $region17
  $region16: #{transformer_fwd.16} parent=0 // pred_region
    %vm19 = vcmask 785408
    %20 = vst.msk [vmem:[#allocation2] sm:$0xff] %vm19, 0.0
    %21 = vst.msk [vmem:[#allocation2 + $0x8] sm:$0xff] %vm19, 0.0
  $region17: #{transformer_fwd.16} parent=0 // pred_fallthru
    _
  %v22 = vld [vmem:[#allocation2] sm:$0xff]
  %v23 = vld [vmem:[#allocation2 + $0x8] sm:$0xff]
  %v24 = vld [vmem:[%s0] sm:$0xf]
  %v25 = vld [vmem:[%s0 + $0x4] sm:$0xf]
  %v26 = vld [vmem:[%s1] sm:$0xf]
  %v27 = vld [vmem:[%s1 + $0x4] sm:$0xf]
  %v28 = vld [vmem:[%s1 + $0x8] sm:$0xf]
  %v29 = vld [vmem:[%s1 + $0xc] sm:$0xf]
  %v32 = vunpack.c.l.b16 %v24
  %v33 = vunpack.c.l.b16 %v25
  %v34 = vpack.c.b16 %v33, %v32
  %v39 = vunpack.c.l.b16 %v26
  %v40 = vunpack.c.l.b16 %v27
  %v41 = vunpack.c.l.b16 %v28
  %v42 = vunpack.c.l.b16 %v29
  %v43 = vpack.c.b16 %v40, %v39
  %v44 = vpack.c.b16 %v42, %v41
  %vm47 = vcmask 261120
  %v49 = vsel %vm47, %v34, 0
  %51 = vmatprep.subr.bf16.mxu0 0
  %52 = vmatpush1.bf16.msra.mxu0 %v43
  %53 = vmatprep.subr.bf16.mxu0 0
  %54 = vmatpush1.bf16.msra.mxu0 %v44
  %55 = vmatprep.subr.bf16.mxu0 0
  %56 = vmatpush1.bf16.msra.mxu0 0
  %57 = vmatprep.subr.bf16.mxu0 0
  %58 = vmatpush1.bf16.msra.mxu0 0
  %59 = vmatprep.subr.bf16.mxu0 0
  %60 = vmatpush1.bf16.msra.mxu0 0
  %61 = vmatprep.subr.bf16.mxu0 0
  %62 = vmatpush1.bf16.msra.mxu0 0
  %63 = vmatprep.subr.bf16.mxu0 0
  %64 = vmatpush1.bf16.msra.mxu0 0
  %65 = vmatprep.subr.bf16.mxu0 0
  %66 = vmatpush1.bf16.msra.mxu0 0
  %67 = vmatprep.subr.bf16.mxu0 0
  %68 = vmatpush1.bf16.msra.mxu0 0
  %69 = vmatprep.subr.bf16.mxu0 0
  %70 = vmatpush1.bf16.msra.mxu0 0
  %71 = vmatprep.subr.bf16.mxu0 0
  %72 = vmatpush1.bf16.msra.mxu0 0
  %73 = vmatprep.subr.bf16.mxu0 0
  %74 = vmatpush1.bf16.msra.mxu0 0
  %75 = vmatprep.subr.bf16.mxu0 0
  %76 = vmatpush1.bf16.msra.mxu0 0
  %77 = vmatprep.subr.bf16.mxu0 0
  %78 = vmatpush1.bf16.msra.mxu0 0
  %79 = vmatprep.subr.bf16.mxu0 0
  %80 = vmatpush1.bf16.msra.mxu0 0
  %81 = vmatprep.subr.bf16.mxu0 0
  %82 = vmatpush1.bf16.msra.mxu0 0
  %83 = vmatprep.mubr.bf16.mxu0 0
  %84 = vmatmul.mubr.bf16.gmra.mrb[0].mxu0 %v49
  %v85 = vpop.f32.mrb[0].mxu0
  %v86 = vadd.f32 0.0, %v85
  %v87 = vpop.f32.mrb[0].mxu0
  %v88 = vpop.f32.mrb[0].mxu0
  %v89 = vadd.f32 0.0, %v88
  %v90 = vpop.f32.mrb[0].mxu0
  %91 = vdwg.mxu0
  %v92 = vadd.f32 %v22, %v86
  %v93 = vadd.f32 %v23, %v89
  %vm94 = vcmask 785408
  %95 = vst.msk [vmem:[#allocation2] sm:$0xff] %vm94, %v92
  %96 = vst.msk [vmem:[#allocation2 + $0x8] sm:$0xff] %vm94, %v93
  // Predicated region
  $region18: #{transformer_fwd.16} parent=0 // pred_check
    %p97 = pneg %p15
  $region19: #{transformer_fwd.16} parent=0 // pred_check_branch
    %99 = sbr.rel (%p97) target = $region21
  $region20: #{transformer_fwd.16} parent=0 // pred_region
    %v100 = vld [vmem:[#allocation2] sm:$0xff]
    %v101 = vld [vmem:[#allocation2 + $0x8] sm:$0xff]
    %v102 = vld [vmem:[%s2] sm:$0x1]
    %v104 = vlaneseq
    %v105 = vshrl.u32 %v104, 7
    %v106 = vsub.s32 0, %v105
    %v107 = vrot.slane %v102, %v106
    %v109 = vadd.f32 %v100, %v107
    %v110 = vadd.f32 %v101, %v107
    %v111 = vpack.c.bf16 %v110, %v109
    %v113 = vunpack.c.l.b16 %v111
    %v114 = vunpack.c.h.b16 %v111
    %v115 = vpack.c.b16 %v113, %v113
    %v116 = vpack.c.b16 %v114, %v114
    %vm119 = vcmask 781312
    %120 = vst.msk [vmem:[%s3] sm:$0xf] %vm119, %v115
    %121 = vst.msk [vmem:[%s3 + $0x4] sm:$0xf] %vm119, %v116
  $region21: #{transformer_fwd.16} parent=0 // pred_fallthru
    _
  // Predicated region
  $region22: #{transformer_fwd.16} parent=0 // pred_check
    _
  $region23: #{transformer_fwd.16} parent=0 // pred_check_branch
    %123 = sbr.rel (0) target = $region25
  $region24: #{transformer_fwd.16} parent=0 // pred_region
    _
  $region25: #{transformer_fwd.16} parent=0 // pred_fallthru
    _
  // Predicated region
  $region26: #{transformer_fwd.16} parent=0 // pred_check
    _
  $region27: #{transformer_fwd.16} parent=0 // pred_check_branch
    %125 = sbr.rel (0) target = $region29
  $region28: #{transformer_fwd.16} parent=0 // pred_region
    _
  $region29: #{transformer_fwd.16} parent=0 // pred_fallthru
    _

// kernel: transformer_fwd.18
$region0: #{transformer_fwd.18}
  #allocation0 [shape = 'u32[]', space=smem, size = 0x4, offset = 0x4, fixed_abs, tag = 'smem constant byte address 0x4 - core index']
  #allocation1 [shape = 'u32[144,128]{1,0:T(1,128)}', space=vmem, size = 0x12000, scoped, tag = 'internal scratch']
  #allocation2 [shape = 'f32[16,32]{1,0:T(8,128)}', space=vmem, size = 0x2000, scoped, tag = 'scratch operand']
  %s0 = inlined_call_operand.vmem [shape: bf16[16,32], index: 0, kind: input, shape index: {}]
  %s1 = inlined_call_operand.vmem [shape: bf16[32,32], index: 1, kind: input, shape index: {}]
  %s2 = inlined_call_operand.vmem [shape: f32[1,32], index: 2, kind: input, shape index: {}]
  %s3 = inlined_call_operand.vmem [shape: f32[16,32], index: 3, kind: input, shape index: {}]
  %s4 = inlined_call_operand.vmem [shape: f32[16,32], index: 4, kind: output, shape index: {}]
  %s5 = sld [smem:[#allocation0]]
  $region34: #{transformer_fwd.18} parent=0
    _
  %s7 = ssub.s32 1, %s5
  %s8 = scalar_select 0, %s7, %s5
  // Predicated region
  $region2: #{transformer_fwd.18} parent=0 // pred_check
    _
  $region3: #{transformer_fwd.18} parent=0 // pred_check_branch
    %10 = sbr.rel (0) target = $region5
  $region4: #{transformer_fwd.18} parent=0 // pred_region
    _
  $region5: #{transformer_fwd.18} parent=0 // pred_fallthru
    _
  // Predicated region
  $region6: #{transformer_fwd.18} parent=0 // pred_check
    _
  $region7: #{transformer_fwd.18} parent=0 // pred_check_branch
    %12 = sbr.rel (0) target = $region9
  $region8: #{transformer_fwd.18} parent=0 // pred_region
    _
  $region9: #{transformer_fwd.18} parent=0 // pred_fallthru
    _
  // Predicated region
  $region10: #{transformer_fwd.18} parent=0 // pred_check
    _
  $region11: #{transformer_fwd.18} parent=0 // pred_check_branch
    %14 = sbr.rel (0) target = $region13
  $region12: #{transformer_fwd.18} parent=0 // pred_region
    _
  $region13: #{transformer_fwd.18} parent=0 // pred_fallthru
    _
  // Predicated region
  $region14: #{transformer_fwd.18} parent=0 // pred_check
    _
  $region15: #{transformer_fwd.18} parent=0 // pred_check_branch
    %16 = sbr.rel (0) target = $region17
  $region16: #{transformer_fwd.18} parent=0 // pred_region
    _
  $region17: #{transformer_fwd.18} parent=0 // pred_fallthru
    _
  %p18 = scmp.eq.s32.totalorder 0, 0
  // Predicated region
  $region18: #{transformer_fwd.18} parent=0 // pred_check
    %p19 = pneg %p18
  $region19: #{transformer_fwd.18} parent=0 // pred_check_branch
    %21 = sbr.rel (%p19) target = $region21
  $region20: #{transformer_fwd.18} parent=0 // pred_region
    %vm22 = vcmask 261120
    %23 = vst.msk [vmem:[#allocation2] sm:$0xff] %vm22, 0.0
    %24 = vst.msk [vmem:[#allocation2 + $0x8] sm:$0xff] %vm22, 0.0
  $region21: #{transformer_fwd.18} parent=0 // pred_fallthru
    _
  %v25 = vld [vmem:[#allocation2] sm:$0xff]
  %v26 = vld [vmem:[#allocation2 + $0x8] sm:$0xff]
  %v27 = vld [vmem:[%s0] sm:$0xf]
  %v28 = vld [vmem:[%s0 + $0x4] sm:$0xf]
  %v29 = vld [vmem:[%s1] sm:$0xf]
  %v30 = vld [vmem:[%s1 + $0x4] sm:$0xf]
  %v31 = vld [vmem:[%s1 + $0x8] sm:$0xf]
  %v32 = vld [vmem:[%s1 + $0xc] sm:$0xf]
  %v35 = vunpack.c.l.b16 %v27
  %v36 = vunpack.c.l.b16 %v28
  %v37 = vpack.c.b16 %v36, %v35
  %v42 = vunpack.c.l.b16 %v29
  %v43 = vunpack.c.l.b16 %v30
  %v44 = vunpack.c.l.b16 %v31
  %v45 = vunpack.c.l.b16 %v32
  %v46 = vpack.c.b16 %v43, %v42
  %v47 = vpack.c.b16 %v45, %v44
  %vm50 = vcmask 261120
  %v52 = vsel %vm50, %v37, 0
  %54 = vmatprep.subr.bf16.mxu0 0
  %55 = vmatpush1.bf16.msra.mxu0 %v46
  %56 = vmatprep.subr.bf16.mxu0 0
  %57 = vmatpush1.bf16.msra.mxu0 %v47
  %58 = vmatprep.subr.bf16.mxu0 0
  %59 = vmatpush1.bf16.msra.mxu0 0
  %60 = vmatprep.subr.bf16.mxu0 0
  %61 = vmatpush1.bf16.msra.mxu0 0
  %62 = vmatprep.subr.bf16.mxu0 0
  %63 = vmatpush1.bf16.msra.mxu0 0
  %64 = vmatprep.subr.bf16.mxu0 0
  %65 = vmatpush1.bf16.msra.mxu0 0
  %66 = vmatprep.subr.bf16.mxu0 0
  %67 = vmatpush1.bf16.msra.mxu0 0
  %68 = vmatprep.subr.bf16.mxu0 0
  %69 = vmatpush1.bf16.msra.mxu0 0
  %70 = vmatprep.subr.bf16.mxu0 0
  %71 = vmatpush1.bf16.msra.mxu0 0
  %72 = vmatprep.subr.bf16.mxu0 0
  %73 = vmatpush1.bf16.msra.mxu0 0
  %74 = vmatprep.subr.bf16.mxu0 0
  %75 = vmatpush1.bf16.msra.mxu0 0
  %76 = vmatprep.subr.bf16.mxu0 0
  %77 = vmatpush1.bf16.msra.mxu0 0
  %78 = vmatprep.subr.bf16.mxu0 0
  %79 = vmatpush1.bf16.msra.mxu0 0
  %80 = vmatprep.subr.bf16.mxu0 0
  %81 = vmatpush1.bf16.msra.mxu0 0
  %82 = vmatprep.subr.bf16.mxu0 0
  %83 = vmatpush1.bf16.msra.mxu0 0
  %84 = vmatprep.subr.bf16.mxu0 0
  %85 = vmatpush1.bf16.msra.mxu0 0
  %86 = vmatprep.mubr.bf16.mxu0 0
  %87 = vmatmul.mubr.bf16.gmra.mrb[0].mxu0 %v52
  %v88 = vpop.f32.mrb[0].mxu0
  %v89 = vadd.f32 0.0, %v88
  %v90 = vpop.f32.mrb[0].mxu0
  %v91 = vpop.f32.mrb[0].mxu0
  %v92 = vadd.f32 0.0, %v91
  %v93 = vpop.f32.mrb[0].mxu0
  %94 = vdwg.mxu0
  %v95 = vadd.f32 %v25, %v89
  %v96 = vadd.f32 %v26, %v92
  %97 = vst.msk [vmem:[#allocation2] sm:$0xff] %vm50, %v95
  %98 = vst.msk [vmem:[#allocation2 + $0x8] sm:$0xff] %vm50, %v96
  // Predicated region
  $region22: #{transformer_fwd.18} parent=0 // pred_check
    %p99 = pneg %p18
  $region23: #{transformer_fwd.18} parent=0 // pred_check_branch
    %101 = sbr.rel (%p99) target = $region25
  $region24: #{transformer_fwd.18} parent=0 // pred_region
    %v102 = vld [vmem:[#allocation2] sm:$0xff]
    %v103 = vld [vmem:[#allocation2 + $0x8] sm:$0xff]
    %v104 = vld [vmem:[%s2] sm:$0x1]
    %v106 = vlaneseq
    %v107 = vshrl.u32 %v106, 7
    %v108 = vsub.s32 0, %v107
    %v109 = vrot.slane %v104, %v108
    %v111 = vadd.f32 %v102, %v109
    %v112 = vadd.f32 %v103, %v109
    %v113 = vld [vmem:[%s3] sm:$0xff]
    %v114 = vld [vmem:[%s3 + $0x8] sm:$0xff]
    %v115 = vadd.f32 %v111, %v113
    %v116 = vadd.f32 %v112, %v114
    %117 = vst.msk [vmem:[%s4] sm:$0xff] %vm50, %v115
    %118 = vst.msk [vmem:[%s4 + $0x8] sm:$0xff] %vm50, %v116
  $region25: #{transformer_fwd.18} parent=0 // pred_fallthru
    _
  // Predicated region
  $region26: #{transformer_fwd.18} parent=0 // pred_check
    _
  $region27: #{transformer_fwd.18} parent=0 // pred_check_branch
    %120 = sbr.rel (0) target = $region29
  $region28: #{transformer_fwd.18} parent=0 // pred_region
    _
  $region29: #{transformer_fwd.18} parent=0 // pred_fallthru
    _
  // Predicated region
  $region30: #{transformer_fwd.18} parent=0 // pred_check
    _
  $region31: #{transformer_fwd.18} parent=0 // pred_check_branch
    %122 = sbr.rel (0) target = $region33
  $region32: #{transformer_fwd.18} parent=0 // pred_region
    _
  $region33: #{transformer_fwd.18} parent=0 // pred_fallthru
    _

// kernel: transformer_fwd.15
$region0: #{transformer_fwd.15}
  #allocation0 [shape = 'u32[]', space=smem, size = 0x4, offset = 0x4, fixed_abs, tag = 'smem constant byte address 0x4 - core index']
  #allocation1 [shape = 'u32[144,128]{1,0:T(1,128)}', space=vmem, size = 0x12000, scoped, tag = 'internal scratch']
  %s0 = inlined_call_operand.vmem [shape: f32[16,32], index: 0, kind: input, shape index: {}]
  %s1 = inlined_call_operand.vmem [shape: f32[16,1], index: 1, kind: input, shape index: {}]
  %s2 = inlined_call_operand.vmem [shape: f32[1,32], index: 2, kind: input, shape index: {}]
  %s3 = inlined_call_operand.vmem [shape: f32[1,32], index: 3, kind: input, shape index: {}]
  %s4 = inlined_call_operand.vmem [shape: f32[16,32], index: 4, kind: output, shape index: {0}]
  %s5 = inlined_call_operand.vmem [shape: bf16[16,32], index: 5, kind: output, shape index: {1}]
  %6 = xla_tuple %s4, %s5
  %s7 = sld [smem:[#allocation0]]
  $region34: #{transformer_fwd.15} parent=0
    _
  %s9 = ssub.s32 1, %s7
  %s10 = scalar_select 0, %s9, %s7
  // Predicated region
  $region2: #{transformer_fwd.15} parent=0 // pred_check
    _
  $region3: #{transformer_fwd.15} parent=0 // pred_check_branch
    %12 = sbr.rel (0) target = $region5
  $region4: #{transformer_fwd.15} parent=0 // pred_region
    _
  $region5: #{transformer_fwd.15} parent=0 // pred_fallthru
    _
  // Predicated region
  $region6: #{transformer_fwd.15} parent=0 // pred_check
    _
  $region7: #{transformer_fwd.15} parent=0 // pred_check_branch
    %14 = sbr.rel (0) target = $region9
  $region8: #{transformer_fwd.15} parent=0 // pred_region
    _
  $region9: #{transformer_fwd.15} parent=0 // pred_fallthru
    _
  // Predicated region
  $region10: #{transformer_fwd.15} parent=0 // pred_check
    _
  $region11: #{transformer_fwd.15} parent=0 // pred_check_branch
    %16 = sbr.rel (0) target = $region13
  $region12: #{transformer_fwd.15} parent=0 // pred_region
    _
  $region13: #{transformer_fwd.15} parent=0 // pred_fallthru
    _
  // Predicated region
  $region14: #{transformer_fwd.15} parent=0 // pred_check
    _
  $region15: #{transformer_fwd.15} parent=0 // pred_check_branch
    %18 = sbr.rel (0) target = $region17
  $region16: #{transformer_fwd.15} parent=0 // pred_region
    _
  $region17: #{transformer_fwd.15} parent=0 // pred_fallthru
    _
  %v19 = vld [vmem:[%s0] sm:$0xff]
  %v20 = vld [vmem:[%s0 + $0x8] sm:$0xff]
  %vm21 = vcmask 261120
  %v22 = vsel %vm21, %v19, 0.0
  %23 = vadd.xlane.f32.xlu0 %v22
  %v24 = vpop.xlane.xlu0 %23
  %v25 = vsel %vm21, %v20, 0.0
  %26 = vadd.xlane.f32.xlu0 %v25
  %v27 = vpop.xlane.xlu0 %26
  %v28 = vrcp.pop 32.0
  %v29 = vmul.f32 %v24, %v28
  %v30 = vmul.f32 %v27, %v28
  %v31 = vsub.f32 %v19, %v29
  %v32 = vsub.f32 %v20, %v30
  %v33 = vmul.f32 %v31, %v31
  %v34 = vmul.f32 %v32, %v32
  %v35 = vsel %vm21, %v33, 0.0
  %36 = vadd.xlane.f32.xlu0 %v35
  %v37 = vpop.xlane.xlu0 %36
  %v38 = vsel %vm21, %v34, 0.0
  %39 = vadd.xlane.f32.xlu0 %v38
  %v40 = vpop.xlane.xlu0 %39
  %v41 = vmul.f32 %v37, %v28
  %v42 = vmul.f32 %v40, %v28
  %v43 = vadd.f32 %v41, 1e-12
  %v44 = vadd.f32 %v42, 1e-12
  %v45 = vrsqrt.pop %v43
  %v46 = vrsqrt.pop %v44
  %v47 = vmul.f32 %v31, %v45
  %v48 = vmul.f32 %v32, %v46
  %v49 = vld [vmem:[%s2] sm:$0x1]
  %v51 = vlaneseq
  %v52 = vshrl.u32 %v51, 7
  %v53 = vsub.s32 0, %v52
  %v54 = vrot.slane %v49, %v53
  %v56 = vmul.f32 %v47, %v54
  %v57 = vmul.f32 %v48, %v54
  %v58 = vld [vmem:[%s3] sm:$0x1]
  %v60 = vlaneseq
  %v61 = vshrl.u32 %v60, 7
  %v62 = vsub.s32 0, %v61
  %v63 = vrot.slane %v58, %v62
  %v65 = vadd.f32 %v56, %v63
  %v66 = vadd.f32 %v57, %v63
  %v67 = vld [vmem:[%s1] sm:$0xff]
  %v68 = vld [vmem:[%s1 + $0x8] sm:$0xff]
  %70 = vset.pattern.permute.xlu0 0
  %71 = vperm.xlu0 %70, %v67
  %v72 = vpop.permute.xlu0 %71
  %75 = vset.pattern.permute.xlu0 0
  %76 = vperm.xlu0 %75, %v68
  %v77 = vpop.permute.xlu0 %76
  %v79 = vmul.f32 %v65, %v72
  %v80 = vmul.f32 %v66, %v77
  %81 = vst.msk [vmem:[%s4] sm:$0xff] %vm21, %v79
  %82 = vst.msk [vmem:[%s4 + $0x8] sm:$0xff] %vm21, %v80
  %v83 = vpack.c.bf16 %v80, %v79
  %v85 = vunpack.c.l.b16 %v83
  %v86 = vunpack.c.h.b16 %v83
  %v87 = vpack.c.b16 %v85, %v85
  %v88 = vpack.c.b16 %v86, %v86
  %vm91 = vcmask 257024
  %92 = vst.msk [vmem:[%s5] sm:$0xf] %vm91, %v87
  %93 = vst.msk [vmem:[%s5 + $0x4] sm:$0xf] %vm91, %v88
  // Predicated region
  $region18: #{transformer_fwd.15} parent=0 // pred_check
    _
  $region19: #{transformer_fwd.15} parent=0 // pred_check_branch
    %95 = sbr.rel (0) target = $region21
  $region20: #{transformer_fwd.15} parent=0 // pred_region
    _
  $region21: #{transformer_fwd.15} parent=0 // pred_fallthru
    _
  // Predicated region
  $region22: #{transformer_fwd.15} parent=0 // pred_check
    _
  $region23: #{transformer_fwd.15} parent=0 // pred_check_branch
    %97 = sbr.rel (0) target = $region25
  $region24: #{transformer_fwd.15} parent=0 // pred_region
    _
  $region25: #{transformer_fwd.15} parent=0 // pred_fallthru
    _
  // Predicated region
  $region26: #{transformer_fwd.15} parent=0 // pred_check
    _
  $region27: #{transformer_fwd.15} parent=0 // pred_check_branch
    %99 = sbr.rel (0) target = $region29
  $region28: #{transformer_fwd.15} parent=0 // pred_region
    _
  $region29: #{transformer_fwd.15} parent=0 // pred_fallthru
    _
  // Predicated region
  $region30: #{transformer_fwd.15} parent=0 // pred_check
    _
  $region31: #{transformer_fwd.15} parent=0 // pred_check_branch
    %101 = sbr.rel (0) target = $region33
  $region32: #{transformer_fwd.15} parent=0 // pred_region
    _
  $region33: #{transformer_fwd.15} parent=0 // pred_fallthru
    _

// kernel: transformer_fwd.17
$region0: #{transformer_fwd.17}
  #allocation0 [shape = 'u32[]', space=smem, size = 0x4, offset = 0x4, fixed_abs, tag = 'smem constant byte address 0x4 - core index']
  #allocation1 [shape = 'u32[144,128]{1,0:T(1,128)}', space=vmem, size = 0x12000, scoped, tag = 'internal scratch']
  #allocation2 [shape = 'bf16[4,8,8]{2,1,0:T(8,128)(2,1)}', space=vmem, size = 0x2000, scoped, tag = 'scratch operand']
  #allocation3 [shape = 'f32[4,8,1]{2,1,0:T(8,128)}', space=vmem, size = 0x4000, scoped, tag = 'scratch operand']
  #allocation4 [shape = 'f32[4,8,1]{2,1,0:T(8,128)}', space=vmem, size = 0x4000, scoped, tag = 'scratch operand']
  #allocation5 [shape = 'f32[4,8,8]{2,1,0:T(8,128)}', space=vmem, size = 0x4000, scoped, tag = 'scratch operand']
  #allocation6 [shape = 's32[1]{0}', space=sflag, size = 0x4, scoped, tag = 'scoped memory for transformer_fwd.17']
  #allocation7 [shape = 'u8[512]{0}', space=smem, size = 0x200, scoped, tag = 'prefetched SMEM operand 0']
  %s0 = inlined_call_operand.vmem [shape: s32[2], index: 0, kind: input, shape index: {}]
  %s1 = inlined_call_operand.vmem [shape: bf16[2,8,3,4,8], index: 1, kind: input, shape index: {}, may-alias: {1,2,3}]
  %s2 = inlined_call_operand.vmem [shape: bf16[2,8,3,4,8], index: 2, kind: input, shape index: {}, may-alias: {1,2,3}]
  %s3 = inlined_call_operand.vmem [shape: bf16[2,8,3,4,8], index: 3, kind: input, shape index: {}, may-alias: {1,2,3}]
  %s4 = inlined_call_operand.vmem [shape: bf16[2,8,4,8], index: 4, kind: output, shape index: {}]
  %s5 = sld [smem:[#allocation0]]
  $region180: #{transformer_fwd.17} parent=0
    _
  %s7 = ssub.s32 1, %s5
  %s8 = scalar_select 0, %s7, %s5
  %s9 = sshll.u32 %s0, 4
  %s10 = int_to_ptr.vmem [resolvable:$true] %s9
  %12 = dma.vmem_to_smem %s10, 16, [#allocation7], [#allocation6]
  %13 = dma.done [#allocation6], 16
  %14 = sfence
  $region1: #{transformer_fwd.17} parent=0
    #allocation8 [shape = 'u8[16384]{0}', space=vmem, size = 0x4000, scoped, tag = 'input window, operand 1']
    #allocation9 [shape = 'u8[16384]{0}', space=vmem, size = 0x4000, scoped, tag = 'input window, operand 2']
    #allocation10 [shape = 'u8[16384]{0}', space=vmem, size = 0x4000, scoped, tag = 'input window, operand 3']
    loop: start=0, step=1, limit=4
    $region2: #{transformer_fwd.17} parent=1 // loop_pre_header
      _
    $region3: #{transformer_fwd.17} parent=1 // loop_header
      %s16 = sphi 0, %s20
      %p17 = scmp.ge.s32.totalorder %s16, 4
      %s23 = sphi 0, %s42
      %s24 = sphi 0, %s38
      %s25 = sphi 0, %s34
      %s26 = sphi 0, %s23
      %s27 = sphi 0, %s24
      %s28 = sphi 0, %s25
      %s29 = sphi 0, %s26
      %s30 = sphi 0, %s27
      %s31 = sphi 0, %s28
      %s47 = sphi 0, %s49
      %s50 = sphi 0, %s47
      %s51 = sphi 0, %s50
      %s67 = sphi 0, %s51
      %s101 = sphi 0, %s103
      %s104 = sphi 0, %s101
      %s105 = sphi 0, %s104
      %s121 = sphi 0, %s105
      %s155 = sphi 0, %s157
      %s158 = sphi 0, %s155
      %s159 = sphi 0, %s158
      %s175 = sphi 0, %s159
      %s183 = sphi 0, %s185
      %s186 = sphi 0, %s183
      %s187 = sphi 0, %s186
      %s203 = sphi 0, %s187
    $region4: #{transformer_fwd.17} parent=1 // loop_header_branch
      %19 = sbr.rel (%p17) target = $region8
    $region5: #{transformer_fwd.17} parent=1 // loop_body
      %s21 = ssub.s32 %s16, 1
      %s22 = ssub.s32 %s16, 2
      %s32 = sadd.s32 1, %s25
      %p33 = scmp.ge.s32.totalorder %s32, 1
      %s34 = scalar_select %p33, 0, %s32
      %s35 = sadd.s32 1, %s24
      %s36 = scalar_select %p33, %s35, %s24
      %p37 = scmp.ge.s32.totalorder %s36, 1
      %s38 = scalar_select %p37, 0, %s36
      %s39 = sadd.s32 1, %s23
      %s40 = scalar_select %p37, %s39, %s23
      %p41 = scmp.ge.s32.totalorder %s40, 2
      %s42 = scalar_select %p41, 0, %s40
      %s43 = ssub.s32 %s23, %s42
      %s44 = ssub.s32 %s24, %s38
      %s45 = sor.u32 %s43, %s44
      %p46 = scmp.eq.s32.totalorder %s45, 0
      %s48 = sadd.s32 %s47, 1
      %s49 = scalar_select %p46, %s47, %s48
      %p52 = pneg %p46
      %p53 = scmp.eq.s32.totalorder %s16, 1
      %p54 = por %p52, %p53
      %p55 = scmp.ne.s32.totalorder %s47, %s50
      %p56 = scmp.eq.s32.totalorder %s16, 0
      %p57 = por %p55, %p56
      %p58 = scmp.ne.s32.totalorder %s47, %s50
      %p59 = scmp.eq.s32.totalorder %s21, 1
      %p60 = por %p58, %p59
      %p61 = scmp.ne.s32.totalorder %s50, %s51
      %p62 = scmp.eq.s32.totalorder %s21, 0
      %p63 = por %p61, %p62
      %p64 = scmp.ne.s32.totalorder %s50, %s51
      %p65 = scmp.eq.s32.totalorder %s22, 1
      %p66 = por %p64, %p65
      %p68 = scmp.ne.s32.totalorder %s51, %s67
      %p69 = scmp.eq.s32.totalorder %s22, 0
      %p70 = por %p68, %p69
      %s71 = sld [smem:[#allocation7 + %s23]]
      %s72 = sadd.s32 %s71, 7
      %p73 = scmp.lt.s32.totalorder %s72, 0
      %s74 = ssub.s32 0, %s72
      %s75 = scalar_select %p73, %s74, %s72
      %s76 = sshrl.u32 %s75, 3
      %s77 = ssub.s32 0, %s76
      %s78 = scalar_select %p73, %s77, %s76
      %s79 = ssub.s32 %s78, 1
      %p80 = scmp.gt.s32.totalorder %s79, 0
      %s81 = scalar_select %p80, %s79, 0
      %p82 = scmp.lt.s32.totalorder %s25, %s81
      %s83 = scalar_select %p82, %s25, %s81
      %s84 = sld [smem:[#allocation7 + %s42]]
      %s85 = sadd.s32 %s84, 7
      %p86 = scmp.lt.s32.totalorder %s85, 0
      %s87 = ssub.s32 0, %s85
      %s88 = scalar_select %p86, %s87, %s85
      %s89 = sshrl.u32 %s88, 3
      %s90 = ssub.s32 0, %s89
      %s91 = scalar_select %p86, %s90, %s89
      %s92 = ssub.s32 %s91, 1
      %p93 = scmp.gt.s32.totalorder %s92, 0
      %s94 = scalar_select %p93, %s92, 0
      %p95 = scmp.lt.s32.totalorder %s34, %s94
      %s96 = scalar_select %p95, %s34, %s94
      %s97 = ssub.s32 %s23, %s42
      %s98 = ssub.s32 %s83, %s96
      %s99 = sor.u32 %s97, %s98
      %p100 = scmp.eq.s32.totalorder %s99, 0
      %s102 = sadd.s32 %s101, 1
      %s103 = scalar_select %p100, %s101, %s102
      %p106 = pneg %p100
      %p107 = scmp.eq.s32.totalorder %s16, 1
      %p108 = por %p106, %p107
      %p109 = scmp.ne.s32.totalorder %s101, %s104
      %p110 = scmp.eq.s32.totalorder %s16, 0
      %p111 = por %p109, %p110
      %p112 = scmp.ne.s32.totalorder %s101, %s104
      %p113 = scmp.eq.s32.totalorder %s21, 1
      %p114 = por %p112, %p113
      %p115 = scmp.ne.s32.totalorder %s104, %s105
      %p116 = scmp.eq.s32.totalorder %s21, 0
      %p117 = por %p115, %p116
      %p118 = scmp.ne.s32.totalorder %s104, %s105
      %p119 = scmp.eq.s32.totalorder %s22, 1
      %p120 = por %p118, %p119
      %p122 = scmp.ne.s32.totalorder %s105, %s121
      %p123 = scmp.eq.s32.totalorder %s22, 0
      %p124 = por %p122, %p123
      %s125 = sld [smem:[#allocation7 + %s23]]
      %s126 = sadd.s32 %s125, 7
      %p127 = scmp.lt.s32.totalorder %s126, 0
      %s128 = ssub.s32 0, %s126
      %s129 = scalar_select %p127, %s128, %s126
      %s130 = sshrl.u32 %s129, 3
      %s131 = ssub.s32 0, %s130
      %s132 = scalar_select %p127, %s131, %s130
      %s133 = ssub.s32 %s132, 1
      %p134 = scmp.gt.s32.totalorder %s133, 0
      %s135 = scalar_select %p134, %s133, 0
      %p136 = scmp.lt.s32.totalorder %s25, %s135
      %s137 = scalar_select %p136, %s25, %s135
      %s138 = sld [smem:[#allocation7 + %s42]]
      %s139 = sadd.s32 %s138, 7
      %p140 = scmp.lt.s32.totalorder %s139, 0
      %s141 = ssub.s32 0, %s139
      %s142 = scalar_select %p140, %s141, %s139
      %s143 = sshrl.u32 %s142, 3
      %s144 = ssub.s32 0, %s143
      %s145 = scalar_select %p140, %s144, %s143
      %s146 = ssub.s32 %s145, 1
      %p147 = scmp.gt.s32.totalorder %s146, 0
      %s148 = scalar_select %p147, %s146, 0
      %p149 = scmp.lt.s32.totalorder %s34, %s148
      %s150 = scalar_select %p149, %s34, %s148
      %s151 = ssub.s32 %s23, %s42
      %s152 = ssub.s32 %s137, %s150
      %s153 = sor.u32 %s151, %s152
      %p154 = scmp.eq.s32.totalorder %s153, 0
      %s156 = sadd.s32 %s155, 1
      %s157 = scalar_select %p154, %s155, %s156
      %p160 = pneg %p154
      %p161 = scmp.eq.s32.totalorder %s16, 1
      %p162 = por %p160, %p161
      %p163 = scmp.ne.s32.totalorder %s155, %s158
      %p164 = scmp.eq.s32.totalorder %s16, 0
      %p165 = por %p163, %p164
      %p166 = scmp.ne.s32.totalorder %s155, %s158
      %p167 = scmp.eq.s32.totalorder %s21, 1
      %p168 = por %p166, %p167
      %p169 = scmp.ne.s32.totalorder %s158, %s159
      %p170 = scmp.eq.s32.totalorder %s21, 0
      %p171 = por %p169, %p170
      %p172 = scmp.ne.s32.totalorder %s158, %s159
      %p173 = scmp.eq.s32.totalorder %s22, 1
      %p174 = por %p172, %p173
      %p176 = scmp.ne.s32.totalorder %s159, %s175
      %p177 = scmp.eq.s32.totalorder %s22, 0
      %p178 = por %p176, %p177
      %s179 = ssub.s32 %s23, %s42
      %s180 = ssub.s32 %s24, %s38
      %s181 = sor.u32 %s179, %s180
      %p182 = scmp.eq.s32.totalorder %s181, 0
      %s184 = sadd.s32 %s183, 1
      %s185 = scalar_select %p182, %s183, %s184
      %p188 = pneg %p182
      %p189 = scmp.eq.s32.totalorder %s16, 1
      %p190 = por %p188, %p189
      %p191 = scmp.ne.s32.totalorder %s183, %s186
      %p192 = scmp.eq.s32.totalorder %s16, 0
      %p193 = por %p191, %p192
      %p194 = scmp.ne.s32.totalorder %s183, %s186
      %p195 = scmp.eq.s32.totalorder %s21, 1
      %p196 = por %p194, %p195
      %p197 = scmp.ne.s32.totalorder %s186, %s187
      %p198 = scmp.eq.s32.totalorder %s21, 0
      %p199 = por %p197, %p198
      %p200 = scmp.ne.s32.totalorder %s186, %s187
      %p201 = scmp.eq.s32.totalorder %s22, 1
      %p202 = por %p200, %p201
      %p204 = scmp.ne.s32.totalorder %s187, %s203
      %p205 = scmp.eq.s32.totalorder %s22, 0
      %p206 = por %p204, %p205
      %p207 = scmp.le.s32.totalorder 1, %s16
      %p208 = scmp.lt.s32.totalorder %s16, 3
      %p209 = pnand %p207, %p208
      %p210 = pneg %p209
      // Predicated region
      $region9: #{transformer_fwd.17} parent=5 // pred_check
        _
      $region10: #{transformer_fwd.17} parent=5 // pred_check_branch
        %212 = sbr.rel (%p209) target = $region12
      $region11: #{transformer_fwd.17} parent=5 // pred_region
        %s213 = ssub.s32 %s16, 1
      $region12: #{transformer_fwd.17} parent=5 // pred_fallthru
        _
      %p214 = scmp.lt.s32.totalorder %s16, 2
      // Predicated region
      $region13: #{transformer_fwd.17} parent=5 // pred_check
        %p215 = pneg %p214
      $region14: #{transformer_fwd.17} parent=5 // pred_check_branch
        %217 = sbr.rel (%p215) target = $region16
      $region15: #{transformer_fwd.17} parent=5 // pred_region
        // Predicated region
        $region17: #{transformer_fwd.17} parent=15 // pred_check
          %p218 = pneg %p57
        $region18: #{transformer_fwd.17} parent=15 // pred_check_branch
          %220 = sbr.rel (%p218) target = $region20
        $region19: #{transformer_fwd.17} parent=15 // pred_region
          %s221 = sand.u32 %s47, 1
          %s222 = sand.u32 %s47, 1
          %s223 = smul.addr %s222, 16
          %s224 = scalar_lea.vmem [#allocation8], %s223
          %s225 = smul.u32 8, %s24
          %s226 = smul.addr %s225, 3
          %s227 = smul.addr %s23, 24
          %s228 = sadd.s32 %s226, %s227
          %s229 = smul.addr %s228, 2
          %s230 = scalar_lea.vmem %s1, %s229
          // Predicated region
          $region21: #{transformer_fwd.17} parent=19 // pred_check
            _
          $region22: #{transformer_fwd.17} parent=19 // pred_check_branch
            %232 = sbr.rel (0) target = $region24
          $region23: #{transformer_fwd.17} parent=19 // pred_region
            // Predicated region
            $region25: #{transformer_fwd.17} parent=23 // pred_check
              _
            $region26: #{transformer_fwd.17} parent=23 // pred_check_branch
              %234 = sbr.rel target = $region28
            $region27: #{transformer_fwd.17} parent=23 // pred_region
              // Predicated region
              $region40: #{transformer_fwd.17} parent=27 // pred_check
                _
              $region41: #{transformer_fwd.17} parent=27 // pred_check_branch
                %263 = sbr.rel (0) target = $region43
              $region42: #{transformer_fwd.17} parent=27 // pred_region
                loop: start=0, step=1, limit=1
                $region44: #{transformer_fwd.17} parent=42 // loop_pre_header
                  _
                $region45: #{transformer_fwd.17} parent=42 // loop_header
                  %s265 = sphi 0, %s269
                  %p266 = scmp.ge.s32.totalorder %s265, 1
                  %s270 = sphi %s230, %s230
                  %s271 = sphi %s224, %s224
                $region46: #{transformer_fwd.17} parent=42 // loop_header_branch
                  %268 = sbr.rel (%p266) target = $region50
                $region47: #{transformer_fwd.17} parent=42 // loop_body
                  _
                $region48: #{transformer_fwd.17} parent=42 // loop_footer
                  %s269 = sadd.s32 1, %s265
                $region49: #{transformer_fwd.17} parent=42 // loop_footer_branch
                  %264 = sbr.rel target = $region45
                $region50: #{transformer_fwd.17} parent=42 // loop_exit
                  _
                loop: start=0, step=1, limit=1
                $region51: #{transformer_fwd.17} parent=42 // loop_pre_header
                  _
                $region52: #{transformer_fwd.17} parent=42 // loop_header
                  %s274 = sphi 0, %s278
                  %p275 = scmp.ge.s32.totalorder %s274, 1
                  %s279 = sphi %s230, %s230
                  %s280 = sphi %s224, %s224
                $region53: #{transformer_fwd.17} parent=42 // loop_header_branch
                  %277 = sbr.rel (%p275) target = $region57
                $region54: #{transformer_fwd.17} parent=42 // loop_body
                  %v281 = vld [vmem:[%s279] sm:$0x3]
                  %282 = vst [vmem:[%s280] sm:$0x3] %v281
                  %v283 = vld [vmem:[%s279 + $0x6] sm:$0x3]
                  %284 = vst [vmem:[%s280 + $0x2] sm:$0x3] %v283
                  %v285 = vld [vmem:[%s279 + $0xc] sm:$0x3]
                  %286 = vst [vmem:[%s280 + $0x4] sm:$0x3] %v285
                  %v287 = vld [vmem:[%s279 + $0x12] sm:$0x3]
                  %288 = vst [vmem:[%s280 + $0x6] sm:$0x3] %v287
                  %v289 = vld [vmem:[%s279 + $0x18] sm:$0x3]
                  %290 = vst [vmem:[%s280 + $0x8] sm:$0x3] %v289
                  %v291 = vld [vmem:[%s279 + $0x1e] sm:$0x3]
                  %292 = vst [vmem:[%s280 + $0xa] sm:$0x3] %v291
                  %v293 = vld [vmem:[%s279 + $0x24] sm:$0x3]
                  %294 = vst [vmem:[%s280 + $0xc] sm:$0x3] %v293
                  %v295 = vld [vmem:[%s279 + $0x2a] sm:$0x3]
                  %296 = vst [vmem:[%s280 + $0xe] sm:$0x3] %v295
                $region55: #{transformer_fwd.17} parent=42 // loop_footer
                  %s278 = sadd.s32 1, %s274
                $region56: #{transformer_fwd.17} parent=42 // loop_footer_branch
                  %273 = sbr.rel target = $region52
                $region57: #{transformer_fwd.17} parent=42 // loop_exit
                  _
              $region43: #{transformer_fwd.17} parent=27 // pred_fallthru
                _
            $region28: #{transformer_fwd.17} parent=23 // pred_fallthru
              _
            // Predicated region
            $region29: #{transformer_fwd.17} parent=23 // pred_check
              _
            $region30: #{transformer_fwd.17} parent=23 // pred_check_branch
              %236 = sbr.rel (0) target = $region32
            $region31: #{transformer_fwd.17} parent=23 // pred_region
              loop: start=0, step=1, limit=1
              $region33: #{transformer_fwd.17} parent=31 // loop_pre_header
                _
              $region34: #{transformer_fwd.17} parent=31 // loop_header
                %s239 = sphi 0, %s243
                %p240 = scmp.ge.s32.totalorder %s239, 1
                %s244 = sphi %s230, %s230
                %s245 = sphi %s224, %s224
              $region35: #{transformer_fwd.17} parent=31 // loop_header_branch
                %242 = sbr.rel (%p240) target = $region39
              $region36: #{transformer_fwd.17} parent=31 // loop_body
                %v246 = vld [vmem:[%s244] sm:$0x3]
                %247 = vst [vmem:[%s245] sm:$0x3] %v246
                %v248 = vld [vmem:[%s244 + $0x6] sm:$0x3]
                %249 = vst [vmem:[%s245 + $0x2] sm:$0x3] %v248
                %v250 = vld [vmem:[%s244 + $0xc] sm:$0x3]
                %251 = vst [vmem:[%s245 + $0x4] sm:$0x3] %v250
                %v252 = vld [vmem:[%s244 + $0x12] sm:$0x3]
                %253 = vst [vmem:[%s245 + $0x6] sm:$0x3] %v252
                %v254 = vld [vmem:[%s244 + $0x18] sm:$0x3]
                %255 = vst [vmem:[%s245 + $0x8] sm:$0x3] %v254
                %v256 = vld [vmem:[%s244 + $0x1e] sm:$0x3]
                %257 = vst [vmem:[%s245 + $0xa] sm:$0x3] %v256
                %v258 = vld [vmem:[%s244 + $0x24] sm:$0x3]
                %259 = vst [vmem:[%s245 + $0xc] sm:$0x3] %v258
                %v260 = vld [vmem:[%s244 + $0x2a] sm:$0x3]
                %261 = vst [vmem:[%s245 + $0xe] sm:$0x3] %v260
              $region37: #{transformer_fwd.17} parent=31 // loop_footer
                %s243 = sadd.s32 1, %s239
              $region38: #{transformer_fwd.17} parent=31 // loop_footer_branch
                %238 = sbr.rel target = $region34
              $region39: #{transformer_fwd.17} parent=31 // loop_exit
                _
            $region32: #{transformer_fwd.17} parent=23 // pred_fallthru
              _
          $region24: #{transformer_fwd.17} parent=19 // pred_fallthru
            _
          %297 = vnop
        $region20: #{transformer_fwd.17} parent=15 // pred_fallthru
          _
        // Predicated region
        $region58: #{transformer_fwd.17} parent=15 // pred_check
          %p298 = pneg %p111
        $region59: #{transformer_fwd.17} parent=15 // pred_check_branch
          %300 = sbr.rel (%p298) target = $region61
        $region60: #{transformer_fwd.17} parent=15 // pred_region
          %s301 = sand.u32 %s101, 1
          %s302 = sand.u32 %s101, 1
          %s303 = smul.addr %s302, 16
          %s304 = scalar_lea.vmem [#allocation9], %s303
          %s305 = sld [smem:[#allocation7 + %s23]]
          %s306 = sadd.s32 %s305, 7
          %p307 = scmp.lt.s32.totalorder %s306, 0
          %s308 = ssub.s32 0, %s306
          %s309 = scalar_select %p307, %s308, %s306
          %s310 = sshrl.u32 %s309, 3
          %s311 = ssub.s32 0, %s310
          %s312 = scalar_select %p307, %s311, %s310
          %s313 = ssub.s32 %s312, 1
          %p314 = scmp.gt.s32.totalorder %s313, 0
          %s315 = scalar_select %p314, %s313, 0
          %p316 = scmp.lt.s32.totalorder %s25, %s315
          %s317 = scalar_select %p316, %s25, %s315
          %s318 = smul.u32 8, %s317
          %s319 = smul.addr %s318, 3
          %s320 = sadd.s32 1, %s319
          %s321 = smul.addr %s23, 24
          %s322 = sadd.s32 %s320, %s321
          %s323 = smul.addr %s322, 2
          %s324 = scalar_lea.vmem %s2, %s323
          // Predicated region
          $region62: #{transformer_fwd.17} parent=60 // pred_check
            _
          $region63: #{transformer_fwd.17} parent=60 // pred_check_branch
            %326 = sbr.rel (0) target = $region65
          $region64: #{transformer_fwd.17} parent=60 // pred_region
            // Predicated region
            $region66: #{transformer_fwd.17} parent=64 // pred_check
              _
            $region67: #{transformer_fwd.17} parent=64 // pred_check_branch
              %328 = sbr.rel target = $region69
            $region68: #{transformer_fwd.17} parent=64 // pred_region
              // Predicated region
              $region81: #{transformer_fwd.17} parent=68 // pred_check
                _
              $region82: #{transformer_fwd.17} parent=68 // pred_check_branch
                %357 = sbr.rel (0) target = $region84
              $region83: #{transformer_fwd.17} parent=68 // pred_region
                loop: start=0, step=1, limit=1
                $region85: #{transformer_fwd.17} parent=83 // loop_pre_header
                  _
                $region86: #{transformer_fwd.17} parent=83 // loop_header
                  %s359 = sphi 0, %s363
                  %p360 = scmp.ge.s32.totalorder %s359, 1
                  %s364 = sphi %s324, %s324
                  %s365 = sphi %s304, %s304
                $region87: #{transformer_fwd.17} parent=83 // loop_header_branch
                  %362 = sbr.rel (%p360) target = $region91
                $region88: #{transformer_fwd.17} parent=83 // loop_body
                  _
                $region89: #{transformer_fwd.17} parent=83 // loop_footer
                  %s363 = sadd.s32 1, %s359
                $region90: #{transformer_fwd.17} parent=83 // loop_footer_branch
                  %358 = sbr.rel target = $region86
                $region91: #{transformer_fwd.17} parent=83 // loop_exit
                  _
                loop: start=0, step=1, limit=1
                $region92: #{transformer_fwd.17} parent=83 // loop_pre_header
                  _
                $region93: #{transformer_fwd.17} parent=83 // loop_header
                  %s368 = sphi 0, %s372
                  %p369 = scmp.ge.s32.totalorder %s368, 1
                  %s373 = sphi %s324, %s324
                  %s374 = sphi %s304, %s304
                $region94: #{transformer_fwd.17} parent=83 // loop_header_branch
                  %371 = sbr.rel (%p369) target = $region98
                $region95: #{transformer_fwd.17} parent=83 // loop_body
                  %v375 = vld [vmem:[%s373] sm:$0x3]
                  %376 = vst [vmem:[%s374] sm:$0x3] %v375
                  %v377 = vld [vmem:[%s373 + $0x6] sm:$0x3]
                  %378 = vst [vmem:[%s374 + $0x2] sm:$0x3] %v377
                  %v379 = vld [vmem:[%s373 + $0xc] sm:$0x3]
                  %380 = vst [vmem:[%s374 + $0x4] sm:$0x3] %v379
                  %v381 = vld [vmem:[%s373 + $0x12] sm:$0x3]
                  %382 = vst [vmem:[%s374 + $0x6] sm:$0x3] %v381
                  %v383 = vld [vmem:[%s373 + $0x18] sm:$0x3]
                  %384 = vst [vmem:[%s374 + $0x8] sm:$0x3] %v383
                  %v385 = vld [vmem:[%s373 + $0x1e] sm:$0x3]
                  %386 = vst [vmem:[%s374 + $0xa] sm:$0x3] %v385
                  %v387 = vld [vmem:[%s373 + $0x24] sm:$0x3]
                  %388 = vst [vmem:[%s374 + $0xc] sm:$0x3] %v387
                  %v389 = vld [vmem:[%s373 + $0x2a] sm:$0x3]
                  %390 = vst [vmem:[%s374 + $0xe] sm:$0x3] %v389
                $region96: #{transformer_fwd.17} parent=83 // loop_footer
                  %s372 = sadd.s32 1, %s368
                $region97: #{transformer_fwd.17} parent=83 // loop_footer_branch
                  %367 = sbr.rel target = $region93
                $region98: #{transformer_fwd.17} parent=83 // loop_exit
                  _
              $region84: #{transformer_fwd.17} parent=68 // pred_fallthru
                _
            $region69: #{transformer_fwd.17} parent=64 // pred_fallthru
              _
            // Predicated region
            $region70: #{transformer_fwd.17} parent=64 // pred_check
              _
            $region71: #{transformer_fwd.17} parent=64 // pred_check_branch
              %330 = sbr.rel (0) target = $region73
            $region72: #{transformer_fwd.17} parent=64 // pred_region
              loop: start=0, step=1, limit=1
              $region74: #{transformer_fwd.17} parent=72 // loop_pre_header
                _
              $region75: #{transformer_fwd.17} parent=72 // loop_header
                %s333 = sphi 0, %s337
                %p334 = scmp.ge.s32.totalorder %s333, 1
                %s338 = sphi %s324, %s324
                %s339 = sphi %s304, %s304
              $region76: #{transformer_fwd.17} parent=72 // loop_header_branch
                %336 = sbr.rel (%p334) target = $region80
              $region77: #{transformer_fwd.17} parent=72 // loop_body
                %v340 = vld [vmem:[%s338] sm:$0x3]
                %341 = vst [vmem:[%s339] sm:$0x3] %v340
                %v342 = vld [vmem:[%s338 + $0x6] sm:$0x3]
                %343 = vst [vmem:[%s339 + $0x2] sm:$0x3] %v342
                %v344 = vld [vmem:[%s338 + $0xc] sm:$0x3]
                %345 = vst [vmem:[%s339 + $0x4] sm:$0x3] %v344
                %v346 = vld [vmem:[%s338 + $0x12] sm:$0x3]
                %347 = vst [vmem:[%s339 + $0x6] sm:$0x3] %v346
                %v348 = vld [vmem:[%s338 + $0x18] sm:$0x3]
                %349 = vst [vmem:[%s339 + $0x8] sm:$0x3] %v348
                %v350 = vld [vmem:[%s338 + $0x1e] sm:$0x3]
                %351 = vst [vmem:[%s339 + $0xa] sm:$0x3] %v350
                %v352 = vld [vmem:[%s338 + $0x24] sm:$0x3]
                %353 = vst [vmem:[%s339 + $0xc] sm:$0x3] %v352
                %v354 = vld [vmem:[%s338 + $0x2a] sm:$0x3]
                %355 = vst [vmem:[%s339 + $0xe] sm:$0x3] %v354
              $region78: #{transformer_fwd.17} parent=72 // loop_footer
                %s337 = sadd.s32 1, %s333
              $region79: #{transformer_fwd.17} parent=72 // loop_footer_branch
                %332 = sbr.rel target = $region75
              $region80: #{transformer_fwd.17} parent=72 // loop_exit
                _
            $region73: #{transformer_fwd.17} parent=64 // pred_fallthru
              _
          $region65: #{transformer_fwd.17} parent=60 // pred_fallthru
            _
          %391 = vnop
        $region61: #{transformer_fwd.17} parent=15 // pred_fallthru
          _
        // Predicated region
        $region99: #{transformer_fwd.17} parent=15 // pred_check
          %p392 = pneg %p165
        $region100: #{transformer_fwd.17} parent=15 // pred_check_branch
          %394 = sbr.rel (%p392) target = $region102
        $region101: #{transformer_fwd.17} parent=15 // pred_region
          %s395 = sand.u32 %s155, 1
          %s396 = sand.u32 %s155, 1
          %s397 = smul.addr %s396, 16
          %s398 = scalar_lea.vmem [#allocation10], %s397
          %s399 = sld [smem:[#allocation7 + %s23]]
          %s400 = sadd.s32 %s399, 7
          %p401 = scmp.lt.s32.totalorder %s400, 0
          %s402 = ssub.s32 0, %s400
          %s403 = scalar_select %p401, %s402, %s400
          %s404 = sshrl.u32 %s403, 3
          %s405 = ssub.s32 0, %s404
          %s406 = scalar_select %p401, %s405, %s404
          %s407 = ssub.s32 %s406, 1
          %p408 = scmp.gt.s32.totalorder %s407, 0
          %s409 = scalar_select %p408, %s407, 0
          %p410 = scmp.lt.s32.totalorder %s25, %s409
          %s411 = scalar_select %p410, %s25, %s409
          %s412 = smul.u32 8, %s411
          %s413 = smul.addr %s412, 3
          %s414 = sadd.s32 2, %s413
          %s415 = smul.addr %s23, 24
          %s416 = sadd.s32 %s414, %s415
          %s417 = smul.addr %s416, 2
          %s418 = scalar_lea.vmem %s3, %s417
          // Predicated region
          $region103: #{transformer_fwd.17} parent=101 // pred_check
            _
          $region104: #{transformer_fwd.17} parent=101 // pred_check_branch
            %420 = sbr.rel (0) target = $region106
          $region105: #{transformer_fwd.17} parent=101 // pred_region
            // Predicated region
            $region107: #{transformer_fwd.17} parent=105 // pred_check
              _
            $region108: #{transformer_fwd.17} parent=105 // pred_check_branch
              %422 = sbr.rel target = $region110
            $region109: #{transformer_fwd.17} parent=105 // pred_region
              // Predicated region
              $region122: #{transformer_fwd.17} parent=109 // pred_check
                _
              $region123: #{transformer_fwd.17} parent=109 // pred_check_branch
                %451 = sbr.rel (0) target = $region125
              $region124: #{transformer_fwd.17} parent=109 // pred_region
                loop: start=0, step=1, limit=1
                $region126: #{transformer_fwd.17} parent=124 // loop_pre_header
                  _
                $region127: #{transformer_fwd.17} parent=124 // loop_header
                  %s453 = sphi 0, %s457
                  %p454 = scmp.ge.s32.totalorder %s453, 1
                  %s458 = sphi %s418, %s418
                  %s459 = sphi %s398, %s398
                $region128: #{transformer_fwd.17} parent=124 // loop_header_branch
                  %456 = sbr.rel (%p454) target = $region132
                $region129: #{transformer_fwd.17} parent=124 // loop_body
                  _
                $region130: #{transformer_fwd.17} parent=124 // loop_footer
                  %s457 = sadd.s32 1, %s453
                $region131: #{transformer_fwd.17} parent=124 // loop_footer_branch
                  %452 = sbr.rel target = $region127
                $region132: #{transformer_fwd.17} parent=124 // loop_exit
                  _
                loop: start=0, step=1, limit=1
                $region133: #{transformer_fwd.17} parent=124 // loop_pre_header
                  _
                $region134: #{transformer_fwd.17} parent=124 // loop_header
                  %s462 = sphi 0, %s466
                  %p463 = scmp.ge.s32.totalorder %s462, 1
                  %s467 = sphi %s418, %s418
                  %s468 = sphi %s398, %s398
                $region135: #{transformer_fwd.17} parent=124 // loop_header_branch
                  %465 = sbr.rel (%p463) target = $region139
                $region136: #{transformer_fwd.17} parent=124 // loop_body
                  %v469 = vld [vmem:[%s467] sm:$0x3]
                  %470 = vst [vmem:[%s468] sm:$0x3] %v469
                  %v471 = vld [vmem:[%s467 + $0x6] sm:$0x3]
                  %472 = vst [vmem:[%s468 + $0x2] sm:$0x3] %v471
                  %v473 = vld [vmem:[%s467 + $0xc] sm:$0x3]
                  %474 = vst [vmem:[%s468 + $0x4] sm:$0x3] %v473
                  %v475 = vld [vmem:[%s467 + $0x12] sm:$0x3]
                  %476 = vst [vmem:[%s468 + $0x6] sm:$0x3] %v475
                  %v477 = vld [vmem:[%s467 + $0x18] sm:$0x3]
                  %478 = vst [vmem:[%s468 + $0x8] sm:$0x3] %v477
                  %v479 = vld [vmem:[%s467 + $0x1e] sm:$0x3]
                  %480 = vst [vmem:[%s468 + $0xa] sm:$0x3] %v479
                  %v481 = vld [vmem:[%s467 + $0x24] sm:$0x3]
                  %482 = vst [vmem:[%s468 + $0xc] sm:$0x3] %v481
                  %v483 = vld [vmem:[%s467 + $0x2a] sm:$0x3]
                  %484 = vst [vmem:[%s468 + $0xe] sm:$0x3] %v483
                $region137: #{transformer_fwd.17} parent=124 // loop_footer
                  %s466 = sadd.s32 1, %s462
                $region138: #{transformer_fwd.17} parent=124 // loop_footer_branch
                  %461 = sbr.rel target = $region134
                $region139: #{transformer_fwd.17} parent=124 // loop_exit
                  _
              $region125: #{transformer_fwd.17} parent=109 // pred_fallthru
                _
            $region110: #{transformer_fwd.17} parent=105 // pred_fallthru
              _
            // Predicated region
            $region111: #{transformer_fwd.17} parent=105 // pred_check
              _
            $region112: #{transformer_fwd.17} parent=105 // pred_check_branch
              %424 = sbr.rel (0) target = $region114
            $region113: #{transformer_fwd.17} parent=105 // pred_region
              loop: start=0, step=1, limit=1
              $region115: #{transformer_fwd.17} parent=113 // loop_pre_header
                _
              $region116: #{transformer_fwd.17} parent=113 // loop_header
                %s427 = sphi 0, %s431
                %p428 = scmp.ge.s32.totalorder %s427, 1
                %s432 = sphi %s418, %s418
                %s433 = sphi %s398, %s398
              $region117: #{transformer_fwd.17} parent=113 // loop_header_branch
                %430 = sbr.rel (%p428) target = $region121
              $region118: #{transformer_fwd.17} parent=113 // loop_body
                %v434 = vld [vmem:[%s432] sm:$0x3]
                %435 = vst [vmem:[%s433] sm:$0x3] %v434
                %v436 = vld [vmem:[%s432 + $0x6] sm:$0x3]
                %437 = vst [vmem:[%s433 + $0x2] sm:$0x3] %v436
                %v438 = vld [vmem:[%s432 + $0xc] sm:$0x3]
                %439 = vst [vmem:[%s433 + $0x4] sm:$0x3] %v438
                %v440 = vld [vmem:[%s432 + $0x12] sm:$0x3]
                %441 = vst [vmem:[%s433 + $0x6] sm:$0x3] %v440
                %v442 = vld [vmem:[%s432 + $0x18] sm:$0x3]
                %443 = vst [vmem:[%s433 + $0x8] sm:$0x3] %v442
                %v444 = vld [vmem:[%s432 + $0x1e] sm:$0x3]
                %445 = vst [vmem:[%s433 + $0xa] sm:$0x3] %v444
                %v446 = vld [vmem:[%s432 + $0x24] sm:$0x3]
                %447 = vst [vmem:[%s433 + $0xc] sm:$0x3] %v446
                %v448 = vld [vmem:[%s432 + $0x2a] sm:$0x3]
                %449 = vst [vmem:[%s433 + $0xe] sm:$0x3] %v448
              $region119: #{transformer_fwd.17} parent=113 // loop_footer
                %s431 = sadd.s32 1, %s427
              $region120: #{transformer_fwd.17} parent=113 // loop_footer_branch
                %426 = sbr.rel target = $region116
              $region121: #{transformer_fwd.17} parent=113 // loop_exit
                _
            $region114: #{transformer_fwd.17} parent=105 // pred_fallthru
              _
          $region106: #{transformer_fwd.17} parent=101 // pred_fallthru
            _
          %485 = vnop
        $region102: #{transformer_fwd.17} parent=15 // pred_fallthru
          _
      $region16: #{transformer_fwd.17} parent=5 // pred_fallthru
        _
      %p486 = scmp.le.s32.totalorder 1, %s16
      %p487 = scmp.lt.s32.totalorder %s16, 3
      %p488 = pnand %p486, %p487
      %p489 = pneg %p488
      // Predicated region
      $region140: #{transformer_fwd.17} parent=5 // pred_check
        _
      $region141: #{transformer_fwd.17} parent=5 // pred_check_branch
        %491 = sbr.rel (%p488) target = $region143
      $region142: #{transformer_fwd.17} parent=5 // pred_region
        %s492 = ssub.s32 %s16, 1
        %s493 = sand.u32 %s50, 1
        %s494 = sand.u32 %s50, 1
        %s495 = smul.addr %s494, 16
        %s496 = scalar_lea.vmem [#allocation8], %s495
        // Predicated region
        $region144: #{transformer_fwd.17} parent=142 // pred_check
          %p497 = pneg %p63
        $region145: #{transformer_fwd.17} parent=142 // pred_check_branch
          %499 = sbr.rel (%p497) target = $region147
        $region146: #{transformer_fwd.17} parent=142 // pred_region
          _
        $region147: #{transformer_fwd.17} parent=142 // pred_fallthru
          _
        %s500 = sand.u32 %s104, 1
        %s501 = sand.u32 %s104, 1
        %s502 = smul.addr %s501, 16
        %s503 = scalar_lea.vmem [#allocation9], %s502
        // Predicated region
        $region148: #{transformer_fwd.17} parent=142 // pred_check
          %p504 = pneg %p117
        $region149: #{transformer_fwd.17} parent=142 // pred_check_branch
          %506 = sbr.rel (%p504) target = $region151
        $region150: #{transformer_fwd.17} parent=142 // pred_region
          _
        $region151: #{transformer_fwd.17} parent=142 // pred_fallthru
          _
        %s507 = sand.u32 %s158, 1
        %s508 = sand.u32 %s158, 1
        %s509 = smul.addr %s508, 16
        %s510 = scalar_lea.vmem [#allocation10], %s509
        // Predicated region
        $region152: #{transformer_fwd.17} parent=142 // pred_check
          %p511 = pneg %p171
        $region153: #{transformer_fwd.17} parent=142 // pred_check_branch
          %513 = sbr.rel (%p511) target = $region155
        $region154: #{transformer_fwd.17} parent=142 // pred_region
          _
        $region155: #{transformer_fwd.17} parent=142 // pred_fallthru
          _
        %s514 = sand.u32 %s50, 1
        %s515 = sand.u32 %s50, 1
        %s516 = smul.addr %s515, 16
        %s517 = scalar_lea.vmem [#allocation8], %s516
        %p518 = pneg %p63
        %p519 = pneg %p60
        %s520 = sand.u32 %s104, 1
        %s521 = sand.u32 %s104, 1
        %s522 = smul.addr %s521, 16
        %s523 = scalar_lea.vmem [#allocation9], %s522
        %p524 = pneg %p117
        %p525 = pneg %p114
        %s526 = sand.u32 %s158, 1
        %s527 = sand.u32 %s158, 1
        %s528 = smul.addr %s527, 16
        %s529 = scalar_lea.vmem [#allocation10], %s528
        %p530 = pneg %p171
        %p531 = pneg %p168
        %p532 = pneg %p199
        %p533 = pneg %p196
        %s534 = smul.u32 8, %s27
        %p535 = scmp.lt.s32.totalorder %s26, 1
        %s536 = scalar_select %p535, %s26, 1
        %p537 = scmp.lt.s32.totalorder %s534, 7
        %s538 = scalar_select %p537, %s534, 7
        %s539 = smul.addr %s536, 8
        %s540 = sadd.s32 %s538, %s539
        %s541 = smul.addr %s540, 2
        %s542 = scalar_lea.vmem %s4, %s541
        %s543 = smul.u32 8, %s27
        %s544 = sld [smem:[#allocation7 + %s26]]
        %s545 = sadd.s32 %s544, 7
        %p546 = scmp.lt.s32.totalorder %s545, 0
        %s547 = ssub.s32 0, %s545
        %s548 = scalar_select %p546, %s547, %s545
        %s549 = sshrl.u32 %s548, 3
        %s550 = ssub.s32 0, %s549
        %s551 = scalar_select %p546, %s550, %s549
        %s552 = ssub.s32 %s551, 1
        %p553 = scmp.gt.s32.totalorder %s552, 0
        %s554 = scalar_select %p553, %s552, 0
        %p555 = scmp.lt.s32.totalorder %s28, %s554
        %s556 = scalar_select %p555, %s28, %s554
        %s557 = smul.u32 8, %s556
        %s558 = sld [smem:[#allocation7 + %s26]]
        %s559 = sadd.s32 %s558, 7
        %p560 = scmp.lt.s32.totalorder %s559, 0
        %s561 = ssub.s32 0, %s559
        %s562 = scalar_select %p560, %s561, %s559
        %s563 = sshrl.u32 %s562, 3
        %s564 = ssub.s32 0, %s563
        %s565 = scalar_select %p560, %s564, %s563
        %s566 = ssub.s32 %s565, 1
        %p567 = scmp.gt.s32.totalorder %s566, 0
        %s568 = scalar_select %p567, %s566, 0
        %p569 = scmp.lt.s32.totalorder %s28, %s568
        %s570 = scalar_select %p569, %s28, %s568
        %s571 = smul.u32 8, %s570
        %s572 = smul.u32 8, %s27
        %p573 = scmp.lt.s32.totalorder %s26, 1
        %s574 = scalar_select %p573, %s26, 1
        %p575 = scmp.lt.s32.totalorder %s572, 7
        %s576 = scalar_select %p575, %s572, 7
        %s577 = smul.addr %s574, 8
        %s578 = sadd.s32 %s576, %s577
        %s579 = smul.addr %s578, 2
        %s580 = scalar_lea.vmem %s4, %s579
        %s581 = smul.u32 8, %s27
        %p583 = scmp.eq.s32.totalorder %s28, 0
        // Predicated region
        $region156: #{transformer_fwd.17} parent=142 // pred_check
          %p584 = pneg %p583
        $region157: #{transformer_fwd.17} parent=142 // pred_check_branch
          %586 = sbr.rel (%p584) target = $region159
        $region158: #{transformer_fwd.17} parent=142 // pred_region
          %v587 = vld [vmem:[%s496] sm:$0x3]
          %v588 = vld [vmem:[%s496 + $0x2] sm:$0x3]
          %v589 = vld [vmem:[%s496 + $0x4] sm:$0x3]
          %v590 = vld [vmem:[%s496 + $0x6] sm:$0x3]
          %v591 = vld [vmem:[%s496 + $0x8] sm:$0x3]
          %v592 = vld [vmem:[%s496 + $0xa] sm:$0x3]
          %v593 = vld [vmem:[%s496 + $0xc] sm:$0x3]
          %v594 = vld [vmem:[%s496 + $0xe] sm:$0x3]
          %v595 = vcombine.low %v587, %v589
          %v597 = vunpack.c.l.s4 1934713408
          %v598 = vunpack.c.0.s8 %v597
          %v599 = vlaneseq
          %v600 = vshrl.u32 %v599, 7
          %v601 = vsub.s32 %v598, %v600
          %v602 = vrot.slane %v595, %v601
          %v603 = vcombine.high %v602, 0
          %v604 = vcombine.low %v588, %v590
          %v606 = vunpack.c.l.s4 1934713408
          %v607 = vunpack.c.0.s8 %v606
          %v608 = vlaneseq
          %v609 = vshrl.u32 %v608, 7
          %v610 = vsub.s32 %v607, %v609
          %v611 = vrot.slane %v604, %v610
          %v612 = vcombine.high %v611, 0
          %v613 = vcombine.low %v591, %v593
          %v615 = vunpack.c.l.s4 1934713408
          %v616 = vunpack.c.0.s8 %v615
          %v617 = vlaneseq
          %v618 = vshrl.u32 %v617, 7
          %v619 = vsub.s32 %v616, %v618
          %v620 = vrot.slane %v613, %v619
          %v621 = vcombine.high %v620, 0
          %v622 = vcombine.low %v592, %v594
          %v624 = vunpack.c.l.s4 1934713408
          %v625 = vunpack.c.0.s8 %v624
          %v626 = vlaneseq
          %v627 = vshrl.u32 %v626, 7
          %v628 = vsub.s32 %v625, %v627
          %v629 = vrot.slane %v622, %v628
          %v630 = vcombine.high %v629, 0
          %v633 = vpack.i.b16 %v611, %v602
          %v634 = vshrl.u32 %v602, 16
          %v635 = vshrl.u32 %v611, 16
          %v636 = vpack.i.b16 %v635, %v634
          %v639 = vpack.i.b16 %v612, %v603
          %v640 = vshrl.u32 %v603, 16
          %v641 = vshrl.u32 %v612, 16
          %v642 = vpack.i.b16 %v641, %v640
          %v645 = vpack.i.b16 %v629, %v620
          %v646 = vshrl.u32 %v620, 16
          %v647 = vshrl.u32 %v629, 16
          %v648 = vpack.i.b16 %v647, %v646
          %v651 = vpack.i.b16 %v630, %v621
          %v652 = vshrl.u32 %v621, 16
          %v653 = vshrl.u32 %v630, 16
          %v654 = vpack.i.b16 %v653, %v652
          %v655 = vcombine.low %v633, %v645
          %v657 = vunpack.c.l.s4 1983009808
          %v658 = vunpack.c.0.s8 %v657
          %v659 = vlaneseq
          %v660 = vshrl.u32 %v659, 7
          %v661 = vsub.s32 %v658, %v660
          %v662 = vrot.slane %v655, %v661
          %v663 = vcombine.low %v636, %v648
          %v665 = vunpack.c.l.s4 1983009808
          %v666 = vunpack.c.0.s8 %v665
          %v667 = vlaneseq
          %v668 = vshrl.u32 %v667, 7
          %v669 = vsub.s32 %v666, %v668
          %v670 = vrot.slane %v663, %v669
          %v671 = vcombine.low %v639, %v651
          %v673 = vunpack.c.l.s4 1983009808
          %v674 = vunpack.c.0.s8 %v673
          %v675 = vlaneseq
          %v676 = vshrl.u32 %v675, 7
          %v677 = vsub.s32 %v674, %v676
          %v678 = vrot.slane %v671, %v677
          %v679 = vcombine.low %v642, %v654
          %v681 = vunpack.c.l.s4 1983009808
          %v682 = vunpack.c.0.s8 %v681
          %v683 = vlaneseq
          %v684 = vshrl.u32 %v683, 7
          %v685 = vsub.s32 %v682, %v684
          %v686 = vrot.slane %v679, %v685
          %vm691 = vcmask 60416
          %692 = vst.msk [vmem:[#allocation2] sm:$0xf] %vm691, %v662
          %693 = vst.msk [vmem:[#allocation2 + $0x4] sm:$0xf] %vm691, %v670
          %694 = vst.msk [vmem:[#allocation2 + $0x8] sm:$0xf] %vm691, %v678
          %695 = vst.msk [vmem:[#allocation2 + $0xc] sm:$0xf] %vm691, %v686
          %vm696 = vcmask 7168
          %697 = vst.msk [vmem:[#allocation3] sm:$0xff] %vm696, -inf
          %698 = vst.msk [vmem:[#allocation3 + $0x8] sm:$0xff] %vm696, -inf
          %699 = vst.msk [vmem:[#allocation3 + $0x10] sm:$0xff] %vm696, -inf
          %700 = vst.msk [vmem:[#allocation3 + $0x18] sm:$0xff] %vm696, -inf
          %701 = vst.msk [vmem:[#allocation4] sm:$0xff] %vm696, 0.0
          %702 = vst.msk [vmem:[#allocation4 + $0x8] sm:$0xff] %vm696, 0.0
          %703 = vst.msk [vmem:[#allocation4 + $0x10] sm:$0xff] %vm696, 0.0
          %704 = vst.msk [vmem:[#allocation4 + $0x18] sm:$0xff] %vm696, 0.0
          %vm705 = vcmask 64512
          %706 = vst.msk [vmem:[#allocation5] sm:$0xff] %vm705, 0.0
          %707 = vst.msk [vmem:[#allocation5 + $0x8] sm:$0xff] %vm705, 0.0
          %708 = vst.msk [vmem:[#allocation5 + $0x10] sm:$0xff] %vm705, 0.0
          %709 = vst.msk [vmem:[#allocation5 + $0x18] sm:$0xff] %vm705, 0.0
        $region159: #{transformer_fwd.17} parent=142 // pred_fallthru
          _
        %s710 = smul.u32 %s28, 8
        %s711 = sld [smem:[#allocation7 + %s26]]
        %p712 = scmp.lt.s32.totalorder %s710, %s711
        // Predicated region
        $region160: #{transformer_fwd.17} parent=142 // pred_check
          %p713 = pneg %p712
        $region161: #{transformer_fwd.17} parent=142 // pred_check_branch
          %715 = sbr.rel (%p713) target = $region163
        $region162: #{transformer_fwd.17} parent=142 // pred_region
          %v716 = vld [vmem:[%s503] sm:$0x3]
          %v717 = vld [vmem:[%s503 + $0x2] sm:$0x3]
          %v718 = vld [vmem:[%s503 + $0x4] sm:$0x3]
          %v719 = vld [vmem:[%s503 + $0x6] sm:$0x3]
          %v720 = vld [vmem:[%s503 + $0x8] sm:$0x3]
          %v721 = vld [vmem:[%s503 + $0xa] sm:$0x3]
          %v722 = vld [vmem:[%s503 + $0xc] sm:$0x3]
          %v723 = vld [vmem:[%s503 + $0xe] sm:$0x3]
          %v724 = vcombine.low %v716, %v718
          %v726 = vunpack.c.l.s4 1934713408
          %v727 = vunpack.c.0.s8 %v726
          %v728 = vlaneseq
          %v729 = vshrl.u32 %v728, 7
          %v730 = vsub.s32 %v727, %v729
          %v731 = vrot.slane %v724, %v730
          %v732 = vcombine.high %v731, 0
          %v733 = vcombine.low %v717, %v719
          %v735 = vunpack.c.l.s4 1934713408
          %v736 = vunpack.c.0.s8 %v735
          %v737 = vlaneseq
          %v738 = vshrl.u32 %v737, 7
          %v739 = vsub.s32 %v736, %v738
          %v740 = vrot.slane %v733, %v739
          %v741 = vcombine.high %v740, 0
          %v742 = vcombine.low %v720, %v722
          %v744 = vunpack.c.l.s4 1934713408
          %v745 = vunpack.c.0.s8 %v744
          %v746 = vlaneseq
          %v747 = vshrl.u32 %v746, 7
          %v748 = vsub.s32 %v745, %v747
          %v749 = vrot.slane %v742, %v748
          %v750 = vcombine.high %v749, 0
          %v751 = vcombine.low %v721, %v723
          %v753 = vunpack.c.l.s4 1934713408
          %v754 = vunpack.c.0.s8 %v753
          %v755 = vlaneseq
          %v756 = vshrl.u32 %v755, 7
          %v757 = vsub.s32 %v754, %v756
          %v758 = vrot.slane %v751, %v757
          %v759 = vcombine.high %v758, 0
          %v762 = vpack.i.b16 %v740, %v731
          %v763 = vshrl.u32 %v731, 16
          %v764 = vshrl.u32 %v740, 16
          %v765 = vpack.i.b16 %v764, %v763
          %v768 = vpack.i.b16 %v741, %v732
          %v769 = vshrl.u32 %v732, 16
          %v770 = vshrl.u32 %v741, 16
          %v771 = vpack.i.b16 %v770, %v769
          %v774 = vpack.i.b16 %v758, %v749
          %v775 = vshrl.u32 %v749, 16
          %v776 = vshrl.u32 %v758, 16
          %v777 = vpack.i.b16 %v776, %v775
          %v780 = vpack.i.b16 %v759, %v750
          %v781 = vshrl.u32 %v750, 16
          %v782 = vshrl.u32 %v759, 16
          %v783 = vpack.i.b16 %v782, %v781
          %v784 = vld [vmem:[%s510] sm:$0x3]
          %v785 = vld [vmem:[%s510 + $0x2] sm:$0x3]
          %v786 = vld [vmem:[%s510 + $0x4] sm:$0x3]
          %v787 = vld [vmem:[%s510 + $0x6] sm:$0x3]
          %v788 = vld [vmem:[%s510 + $0x8] sm:$0x3]
          %v789 = vld [vmem:[%s510 + $0xa] sm:$0x3]
          %v790 = vld [vmem:[%s510 + $0xc] sm:$0x3]
          %v791 = vld [vmem:[%s510 + $0xe] sm:$0x3]
          %v792 = vcombine.low %v784, %v786
          %v794 = vunpack.c.l.s4 1934713408
          %v795 = vunpack.c.0.s8 %v794
          %v796 = vlaneseq
          %v797 = vshrl.u32 %v796, 7
          %v798 = vsub.s32 %v795, %v797
          %v799 = vrot.slane %v792, %v798
          %v800 = vcombine.high %v799, 0
          %v801 = vcombine.low %v785, %v787
          %v803 = vunpack.c.l.s4 1934713408
          %v804 = vunpack.c.0.s8 %v803
          %v805 = vlaneseq
          %v806 = vshrl.u32 %v805, 7
          %v807 = vsub.s32 %v804, %v806
          %v808 = vrot.slane %v801, %v807
          %v809 = vcombine.high %v808, 0
          %v810 = vcombine.low %v788, %v790
          %v812 = vunpack.c.l.s4 1934713408
          %v813 = vunpack.c.0.s8 %v812
          %v814 = vlaneseq
          %v815 = vshrl.u32 %v814, 7
          %v816 = vsub.s32 %v813, %v815
          %v817 = vrot.slane %v810, %v816
          %v818 = vcombine.high %v817, 0
          %v819 = vcombine.low %v789, %v791
          %v821 = vunpack.c.l.s4 1934713408
          %v822 = vunpack.c.0.s8 %v821
          %v823 = vlaneseq
          %v824 = vshrl.u32 %v823, 7
          %v825 = vsub.s32 %v822, %v824
          %v826 = vrot.slane %v819, %v825
          %v827 = vcombine.high %v826, 0
          %v830 = vpack.i.b16 %v808, %v799
          %v831 = vshrl.u32 %v799, 16
          %v832 = vshrl.u32 %v808, 16
          %v833 = vpack.i.b16 %v832, %v831
          %v836 = vpack.i.b16 %v809, %v800
          %v837 = vshrl.u32 %v800, 16
          %v838 = vshrl.u32 %v809, 16
          %v839 = vpack.i.b16 %v838, %v837
          %v842 = vpack.i.b16 %v826, %v817
          %v843 = vshrl.u32 %v817, 16
          %v844 = vshrl.u32 %v826, 16
          %v845 = vpack.i.b16 %v844, %v843
          %v848 = vpack.i.b16 %v827, %v818
          %v849 = vshrl.u32 %v818, 16
          %v850 = vshrl.u32 %v827, 16
          %v851 = vpack.i.b16 %v850, %v849
          %v852 = vld [vmem:[#allocation2] sm:$0xf]
          %v853 = vld [vmem:[#allocation2 + $0x4] sm:$0xf]
          %v854 = vld [vmem:[#allocation2 + $0x8] sm:$0xf]
          %v855 = vld [vmem:[#allocation2 + $0xc] sm:$0xf]
          %v856 = vcombine.low %v762, %v774
          %v858 = vunpack.c.l.s4 1983009808
          %v859 = vunpack.c.0.s8 %v858
          %v860 = vlaneseq
          %v861 = vshrl.u32 %v860, 7
          %v862 = vsub.s32 %v859, %v861
          %v863 = vrot.slane %v856, %v862
          %vm864 = vcmask 64512
          %v866 = vsel %vm864, %v852, 0
          %v869 = vsel %vm864, %v863, 0
          %871 = vmatprep.subr.bf16.mxu0 0
          %872 = vmatpush1.bf16.xpose.msra.mxu0 %v869
          %873 = vmatprep.subr.bf16.mxu0 0
          %874 = vmatpush1.bf16.xpose.msra.mxu0 0
          %875 = vmatprep.subr.bf16.mxu0 0
          %876 = vmatpush1.bf16.xpose.msra.mxu0 0
          %877 = vmatprep.subr.bf16.mxu0 0
          %878 = vmatpush1.bf16.xpose.msra.mxu0 0
          %879 = vmatprep.subr.bf16.mxu0 0
          %880 = vmatpush1.bf16.xpose.msra.mxu0 0
          %881 = vmatprep.subr.bf16.mxu0 0
          %882 = vmatpush1.bf16.xpose.msra.mxu0 0
          %883 = vmatprep.subr.bf16.mxu0 0
          %884 = vmatpush1.bf16.xpose.msra.mxu0 0
          %885 = vmatprep.subr.bf16.mxu0 0
          %886 = vmatpush1.bf16.xpose.msra.mxu0 0
          %887 = vmatprep.subr.bf16.mxu0 0
          %888 = vmatpush1.bf16.xpose.msra.mxu0 0
          %889 = vmatprep.subr.bf16.mxu0 0
          %890 = vmatpush1.bf16.xpose.msra.mxu0 0
          %891 = vmatprep.subr.bf16.mxu0 0
          %892 = vmatpush1.bf16.xpose.msra.mxu0 0
          %893 = vmatprep.subr.bf16.mxu0 0
          %894 = vmatpush1.bf16.xpose.msra.mxu0 0
          %895 = vmatprep.subr.bf16.mxu0 0
          %896 = vmatpush1.bf16.xpose.msra.mxu0 0
          %897 = vmatprep.subr.bf16.mxu0 0
          %898 = vmatpush1.bf16.xpose.msra.mxu0 0
          %899 = vmatprep.subr.bf16.mxu0 0
          %900 = vmatpush1.bf16.xpose.msra.mxu0 0
          %901 = vmatprep.subr.bf16.mxu0 0
          %902 = vmatpush1.bf16.xpose.msra.mxu0 0
          %903 = vmatprep.mubr.bf16.mxu0 0
          %904 = vmatmul.mubr.bf16.gmra.mrb[0].mxu0 %v866
          %v905 = vpop.f32.mrb[0].mxu0
          %v906 = vadd.f32 0.0, %v905
          %v907 = vpop.f32.mrb[0].mxu0
          %v908 = vpop.f32.mrb[0].mxu0
          %v909 = vpop.f32.mrb[0].mxu0
          %910 = vdwg.mxu0
          %v911 = vcombine.low %v765, %v777
          %v913 = vunpack.c.l.s4 1983009808
          %v914 = vunpack.c.0.s8 %v913
          %v915 = vlaneseq
          %v916 = vshrl.u32 %v915, 7
          %v917 = vsub.s32 %v914, %v916
          %v918 = vrot.slane %v911, %v917
          %v920 = vsel %vm864, %v853, 0
          %v923 = vsel %vm864, %v918, 0
          %925 = vmatprep.subr.bf16.mxu0 0
          %926 = vmatpush1.bf16.xpose.msra.mxu0 %v923
          %927 = vmatprep.subr.bf16.mxu0 0
          %928 = vmatpush1.bf16.xpose.msra.mxu0 0
          %929 = vmatprep.subr.bf16.mxu0 0
          %930 = vmatpush1.bf16.xpose.msra.mxu0 0
          %931 = vmatprep.subr.bf16.mxu0 0
          %932 = vmatpush1.bf16.xpose.msra.mxu0 0
          %933 = vmatprep.subr.bf16.mxu0 0
          %934 = vmatpush1.bf16.xpose.msra.mxu0 0
          %935 = vmatprep.subr.bf16.mxu0 0
          %936 = vmatpush1.bf16.xpose.msra.mxu0 0
          %937 = vmatprep.subr.bf16.mxu0 0
          %938 = vmatpush1.bf16.xpose.msra.mxu0 0
          %939 = vmatprep.subr.bf16.mxu0 0
          %940 = vmatpush1.bf16.xpose.msra.mxu0 0
          %941 = vmatprep.subr.bf16.mxu0 0
          %942 = vmatpush1.bf16.xpose.msra.mxu0 0
          %943 = vmatprep.subr.bf16.mxu0 0
          %944 = vmatpush1.bf16.xpose.msra.mxu0 0
          %945 = vmatprep.subr.bf16.mxu0 0
          %946 = vmatpush1.bf16.xpose.msra.mxu0 0
          %947 = vmatprep.subr.bf16.mxu0 0
          %948 = vmatpush1.bf16.xpose.msra.mxu0 0
          %949 = vmatprep.subr.bf16.mxu0 0
          %950 = vmatpush1.bf16.xpose.msra.mxu0 0
          %951 = vmatprep.subr.bf16.mxu0 0
          %952 = vmatpush1.bf16.xpose.msra.mxu0 0
          %953 = vmatprep.subr.bf16.mxu0 0
          %954 = vmatpush1.bf16.xpose.msra.mxu0 0
          %955 = vmatprep.subr.bf16.mxu0 0
          %956 = vmatpush1.bf16.xpose.msra.mxu0 0
          %957 = vmatprep.mubr.bf16.mxu0 0
          %958 = vmatmul.mubr.bf16.gmra.mrb[0].mxu0 %v920
          %v959 = vpop.f32.mrb[0].mxu0
          %v960 = vadd.f32 0.0, %v959
          %v961 = vpop.f32.mrb[0].mxu0
          %v962 = vpop.f32.mrb[0].mxu0
          %v963 = vpop.f32.mrb[0].mxu0
          %964 = vdwg.mxu0
          %v965 = vcombine.low %v768, %v780
          %v967 = vunpack.c.l.s4 1983009808
          %v968 = vunpack.c.0.s8 %v967
          %v969 = vlaneseq
          %v970 = vshrl.u32 %v969, 7
          %v971 = vsub.s32 %v968, %v970
          %v972 = vrot.slane %v965, %v971
          %v974 = vsel %vm864, %v854, 0
          %v977 = vsel %vm864, %v972, 0
          %979 = vmatprep.subr.bf16.mxu0 0
          %980 = vmatpush1.bf16.xpose.msra.mxu0 %v977
          %981 = vmatprep.subr.bf16.mxu0 0
          %982 = vmatpush1.bf16.xpose.msra.mxu0 0
          %983 = vmatprep.subr.bf16.mxu0 0
          %984 = vmatpush1.bf16.xpose.msra.mxu0 0
          %985 = vmatprep.subr.bf16.mxu0 0
          %986 = vmatpush1.bf16.xpose.msra.mxu0 0
          %987 = vmatprep.subr.bf16.mxu0 0
          %988 = vmatpush1.bf16.xpose.msra.mxu0 0
          %989 = vmatprep.subr.bf16.mxu0 0
          %990 = vmatpush1.bf16.xpose.msra.mxu0 0
          %991 = vmatprep.subr.bf16.mxu0 0
          %992 = vmatpush1.bf16.xpose.msra.mxu0 0
          %993 = vmatprep.subr.bf16.mxu0 0
          %994 = vmatpush1.bf16.xpose.msra.mxu0 0
          %995 = vmatprep.subr.bf16.mxu0 0
          %996 = vmatpush1.bf16.xpose.msra.mxu0 0
          %997 = vmatprep.subr.bf16.mxu0 0
          %998 = vmatpush1.bf16.xpose.msra.mxu0 0
          %999 = vmatprep.subr.bf16.mxu0 0
          %1000 = vmatpush1.bf16.xpose.msra.mxu0 0
          %1001 = vmatprep.subr.bf16.mxu0 0
          %1002 = vmatpush1.bf16.xpose.msra.mxu0 0
          %1003 = vmatprep.subr.bf16.mxu0 0
          %1004 = vmatpush1.bf16.xpose.msra.mxu0 0
          %1005 = vmatprep.subr.bf16.mxu0 0
          %1006 = vmatpush1.bf16.xpose.msra.mxu0 0
          %1007 = vmatprep.subr.bf16.mxu0 0
          %1008 = vmatpush1.bf16.xpose.msra.mxu0 0
          %1009 = vmatprep.subr.bf16.mxu0 0
          %1010 = vmatpush1.bf16.xpose.msra.mxu0 0
          %1011 = vmatprep.mubr.bf16.mxu0 0
          %1012 = vmatmul.mubr.bf16.gmra.mrb[0].mxu0 %v974
          %v1013 = vpop.f32.mrb[0].mxu0
          %v1014 = vadd.f32 0.0, %v1013
          %v1015 = vpop.f32.mrb[0].mxu0
          %v1016 = vpop.f32.mrb[0].mxu0
          %v1017 = vpop.f32.mrb[0].mxu0
          %1018 = vdwg.mxu0
          %v1019 = vcombine.low %v771, %v783
          %v1021 = vunpack.c.l.s4 1983009808
          %v1022 = vunpack.c.0.s8 %v1021
          %v1023 = vlaneseq
          %v1024 = vshrl.u32 %v1023, 7
          %v1025 = vsub.s32 %v1022, %v1024
          %v1026 = vrot.slane %v1019, %v1025
          %v1028 = vsel %vm864, %v855, 0
          %v1031 = vsel %vm864, %v1026, 0
          %1033 = vmatprep.subr.bf16.mxu0 0
          %1034 = vmatpush1.bf16.xpose.msra.mxu0 %v1031
          %1035 = vmatprep.subr.bf16.mxu0 0
          %1036 = vmatpush1.bf16.xpose.msra.mxu0 0
          %1037 = vmatprep.subr.bf16.mxu0 0
          %1038 = vmatpush1.bf16.xpose.msra.mxu0 0
          %1039 = vmatprep.subr.bf16.mxu0 0
          %1040 = vmatpush1.bf16.xpose.msra.mxu0 0
          %1041 = vmatprep.subr.bf16.mxu0 0
          %1042 = vmatpush1.bf16.xpose.msra.mxu0 0
          %1043 = vmatprep.subr.bf16.mxu0 0
          %1044 = vmatpush1.bf16.xpose.msra.mxu0 0
          %1045 = vmatprep.subr.bf16.mxu0 0
          %1046 = vmatpush1.bf16.xpose.msra.mxu0 0
          %1047 = vmatprep.subr.bf16.mxu0 0
          %1048 = vmatpush1.bf16.xpose.msra.mxu0 0
          %1049 = vmatprep.subr.bf16.mxu0 0
          %1050 = vmatpush1.bf16.xpose.msra.mxu0 0
          %1051 = vmatprep.subr.bf16.mxu0 0
          %1052 = vmatpush1.bf16.xpose.msra.mxu0 0
          %1053 = vmatprep.subr.bf16.mxu0 0
          %1054 = vmatpush1.bf16.xpose.msra.mxu0 0
          %1055 = vmatprep.subr.bf16.mxu0 0
          %1056 = vmatpush1.bf16.xpose.msra.mxu0 0
          %1057 = vmatprep.subr.bf16.mxu0 0
          %1058 = vmatpush1.bf16.xpose.msra.mxu0 0
          %1059 = vmatprep.subr.bf16.mxu0 0
          %1060 = vmatpush1.bf16.xpose.msra.mxu0 0
          %1061 = vmatprep.subr.bf16.mxu0 0
          %1062 = vmatpush1.bf16.xpose.msra.mxu0 0
          %1063 = vmatprep.subr.bf16.mxu0 0
          %1064 = vmatpush1.bf16.xpose.msra.mxu0 0
          %1065 = vmatprep.mubr.bf16.mxu0 0
          %1066 = vmatmul.mubr.bf16.gmra.mrb[0].mxu0 %v1028
          %v1067 = vpop.f32.mrb[0].mxu0
          %v1068 = vadd.f32 0.0, %v1067
          %v1069 = vpop.f32.mrb[0].mxu0
          %v1070 = vpop.f32.mrb[0].mxu0
          %v1071 = vpop.f32.mrb[0].mxu0
          %1072 = vdwg.mxu0
          %v1073 = vlaneseq
          %v1074 = vand.u32 %v1073, 127
          %v1075 = vstv %s710
          %v1076 = vadd.s32 %v1075, %v1074
          %s1077 = sld [smem:[#allocation7 + %s26]]
          %v1078 = vstv %s1077
          %vm1079 = vcmp.lt.s32.totalorder %v1076, %v1078
          %v1080 = vsel %vm1079, 1, 0
          %vm1081 = vcmp.eq.s32.totalorder %v1080, 1
          %v1082 = vsel %vm1081, %v906, -1e+30
          %v1083 = vsel %vm1081, %v960, -1e+30
          %v1084 = vsel %vm1081, %v1014, -1e+30
          %v1085 = vsel %vm1081, %v1068, -1e+30
          %v1086 = vld [vmem:[#allocation3] sm:$0xff]
          %v1087 = vld [vmem:[#allocation3 + $0x8] sm:$0xff]
          %v1088 = vld [vmem:[#allocation3 + $0x10] sm:$0xff]
          %v1089 = vld [vmem:[#allocation3 + $0x18] sm:$0xff]
          %v1090 = vsel %vm864, %v1082, -inf
          %1091 = vmax.xlane.f32.xlu0 %v1090
          %v1092 = vpop.xlane.xlu0 %1091
          %v1093 = vsel %vm864, %v1083, -inf
          %1094 = vmax.xlane.f32.xlu0 %v1093
          %v1095 = vpop.xlane.xlu0 %1094
          %v1096 = vsel %vm864, %v1084, -inf
          %1097 = vmax.xlane.f32.xlu0 %v1096
          %v1098 = vpop.xlane.xlu0 %1097
          %v1099 = vsel %vm864, %v1085, -inf
          %1100 = vmax.xlane.f32.xlu0 %v1099
          %v1101 = vpop.xlane.xlu0 %1100
          %v1102 = vmax.f32 %v1086, %v1092
          %v1103 = vmax.f32 %v1087, %v1095
          %v1104 = vmax.f32 %v1088, %v1098
          %v1105 = vmax.f32 %v1089, %v1101
          %v1106 = vsub.f32 %v1086, %v1102
          %v1107 = vsub.f32 %v1087, %v1103
          %v1108 = vsub.f32 %v1088, %v1104
          %v1109 = vsub.f32 %v1089, %v1105
          %v1110 = vmul.f32 %v1106, 1.442695
          %v1111 = vpow.pop %v1110
          %v1112 = vmul.f32 %v1107, 1.442695
          %v1113 = vpow.pop %v1112
          %v1114 = vmul.f32 %v1108, 1.442695
          %v1115 = vpow.pop %v1114
          %v1116 = vmul.f32 %v1109, 1.442695
          %v1117 = vpow.pop %v1116
          %1119 = vset.pattern.permute.xlu0 0
          %1120 = vperm.xlu0 %1119, %v1102
          %v1121 = vpop.permute.xlu0 %1120
          %1124 = vset.pattern.permute.xlu0 0
          %1125 = vperm.xlu0 %1124, %v1103
          %v1126 = vpop.permute.xlu0 %1125
          %1129 = vset.pattern.permute.xlu0 0
          %1130 = vperm.xlu0 %1129, %v1104
          %v1131 = vpop.permute.xlu0 %1130
          %1134 = vset.pattern.permute.xlu0 0
          %1135 = vperm.xlu0 %1134, %v1105
          %v1136 = vpop.permute.xlu0 %1135
          %v1138 = vsub.f32 %v1082, %v1121
          %v1139 = vsub.f32 %v1083, %v1126
          %v1140 = vsub.f32 %v1084, %v1131
          %v1141 = vsub.f32 %v1085, %v1136
          %v1142 = vmul.f32 %v1138, 1.442695
          %v1143 = vpow.pop %v1142
          %v1144 = vmul.f32 %v1139, 1.442695
          %v1145 = vpow.pop %v1144
          %v1146 = vmul.f32 %v1140, 1.442695
          %v1147 = vpow.pop %v1146
          %v1148 = vmul.f32 %v1141, 1.442695
          %v1149 = vpow.pop %v1148
          %v1150 = vld [vmem:[#allocation4] sm:$0xff]
          %v1151 = vld [vmem:[#allocation4 + $0x8] sm:$0xff]
          %v1152 = vld [vmem:[#allocation4 + $0x10] sm:$0xff]
          %v1153 = vld [vmem:[#allocation4 + $0x18] sm:$0xff]
          %v1154 = vmul.f32 %v1111, %v1150
          %v1155 = vmul.f32 %v1113, %v1151
          %v1156 = vmul.f32 %v1115, %v1152
          %v1157 = vmul.f32 %v1117, %v1153
          %v1158 = vsel %vm864, %v1143, 0.0
          %1159 = vadd.xlane.f32.xlu0 %v1158
          %v1160 = vpop.xlane.xlu0 %1159
          %v1161 = vsel %vm864, %v1145, 0.0
          %1162 = vadd.xlane.f32.xlu0 %v1161
          %v1163 = vpop.xlane.xlu0 %1162
          %v1164 = vsel %vm864, %v1147, 0.0
          %1165 = vadd.xlane.f32.xlu0 %v1164
          %v1166 = vpop.xlane.xlu0 %1165
          %v1167 = vsel %vm864, %v1149, 0.0
          %1168 = vadd.xlane.f32.xlu0 %v1167
          %v1169 = vpop.xlane.xlu0 %1168
          %v1170 = vadd.f32 %v1154, %v1160
          %v1171 = vadd.f32 %v1155, %v1163
          %v1172 = vadd.f32 %v1156, %v1166
          %v1173 = vadd.f32 %v1157, %v1169
          %vm1174 = vcmask 7168
          %1175 = vst.msk [vmem:[#allocation4] sm:$0xff] %vm1174, %v1170
          %1176 = vst.msk [vmem:[#allocation4 + $0x8] sm:$0xff] %vm1174, %v1171
          %1177 = vst.msk [vmem:[#allocation4 + $0x10] sm:$0xff] %vm1174, %v1172
          %1178 = vst.msk [vmem:[#allocation4 + $0x18] sm:$0xff] %vm1174, %v1173
          %v1179 = vld [vmem:[#allocation5] sm:$0xff]
          %v1180 = vld [vmem:[#allocation5 + $0x8] sm:$0xff]
          %v1181 = vld [vmem:[#allocation5 + $0x10] sm:$0xff]
          %v1182 = vld [vmem:[#allocation5 + $0x18] sm:$0xff]
          %1184 = vset.pattern.permute.xlu0 0
          %1185 = vperm.xlu0 %1184, %v1111
          %v1186 = vpop.permute.xlu0 %1185
          %1189 = vset.pattern.permute.xlu0 0
          %1190 = vperm.xlu0 %1189, %v1113
          %v1191 = vpop.permute.xlu0 %1190
          %1194 = vset.pattern.permute.xlu0 0
          %1195 = vperm.xlu0 %1194, %v1115
          %v1196 = vpop.permute.xlu0 %1195
          %1199 = vset.pattern.permute.xlu0 0
          %1200 = vperm.xlu0 %1199, %v1117
          %v1201 = vpop.permute.xlu0 %1200
          %v1203 = vmul.f32 %v1186, %v1179
          %v1204 = vmul.f32 %v1191, %v1180
          %v1205 = vmul.f32 %v1196, %v1181
          %v1206 = vmul.f32 %v1201, %v1182
          %v1207 = vpack.c.bf16 %v1143, %v1143
          %v1208 = vpack.c.bf16 %v1145, %v1145
          %v1209 = vpack.c.bf16 %v1147, %v1147
          %v1210 = vpack.c.bf16 %v1149, %v1149
          %v1211 = vcombine.low %v830, %v842
          %v1213 = vunpack.c.l.s4 1983009808
          %v1214 = vunpack.c.0.s8 %v1213
          %v1215 = vlaneseq
          %v1216 = vshrl.u32 %v1215, 7
          %v1217 = vsub.s32 %v1214, %v1216
          %v1218 = vrot.slane %v1211, %v1217
          %v1220 = vsel %vm864, %v1207, 0
          %vm1222 = vcmask 1043456
          %v1224 = vsel %vm1222, %v1218, 0
          %1226 = vmatprep.subr.bf16.mxu0 0
          %1227 = vmatpush1.bf16.msra.mxu0 %v1224
          %1228 = vmatprep.subr.bf16.mxu0 0
          %1229 = vmatpush1.bf16.msra.mxu0 0
          %1230 = vmatprep.subr.bf16.mxu0 0
          %1231 = vmatpush1.bf16.msra.mxu0 0
          %1232 = vmatprep.subr.bf16.mxu0 0
          %1233 = vmatpush1.bf16.msra.mxu0 0
          %1234 = vmatprep.subr.bf16.mxu0 0
          %1235 = vmatpush1.bf16.msra.mxu0 0
          %1236 = vmatprep.subr.bf16.mxu0 0
          %1237 = vmatpush1.bf16.msra.mxu0 0
          %1238 = vmatprep.subr.bf16.mxu0 0
          %1239 = vmatpush1.bf16.msra.mxu0 0
          %1240 = vmatprep.subr.bf16.mxu0 0
          %1241 = vmatpush1.bf16.msra.mxu0 0
          %1242 = vmatprep.subr.bf16.mxu0 0
          %1243 = vmatpush1.bf16.msra.mxu0 0
          %1244 = vmatprep.subr.bf16.mxu0 0
          %1245 = vmatpush1.bf16.msra.mxu0 0
          %1246 = vmatprep.subr.bf16.mxu0 0
          %1247 = vmatpush1.bf16.msra.mxu0 0
          %1248 = vmatprep.subr.bf16.mxu0 0
          %1249 = vmatpush1.bf16.msra.mxu0 0
          %1250 = vmatprep.subr.bf16.mxu0 0
          %1251 = vmatpush1.bf16.msra.mxu0 0
          %1252 = vmatprep.subr.bf16.mxu0 0
          %1253 = vmatpush1.bf16.msra.mxu0 0
          %1254 = vmatprep.subr.bf16.mxu0 0
          %1255 = vmatpush1.bf16.msra.mxu0 0
          %1256 = vmatprep.subr.bf16.mxu0 0
          %1257 = vmatpush1.bf16.msra.mxu0 0
          %1258 = vmatprep.mubr.bf16.mxu0 0
          %1259 = vmatmul.mubr.bf16.gmra.mrb[0].mxu0 %v1220
          %v1260 = vpop.f32.mrb[0].mxu0
          %v1261 = vadd.f32 0.0, %v1260
          %v1262 = vpop.f32.mrb[0].mxu0
          %v1263 = vpop.f32.mrb[0].mxu0
          %v1264 = vpop.f32.mrb[0].mxu0
          %1265 = vdwg.mxu0
          %v1266 = vcombine.low %v833, %v845
          %v1268 = vunpack.c.l.s4 1983009808
          %v1269 = vunpack.c.0.s8 %v1268
          %v1270 = vlaneseq
          %v1271 = vshrl.u32 %v1270, 7
          %v1272 = vsub.s32 %v1269, %v1271
          %v1273 = vrot.slane %v1266, %v1272
          %v1275 = vsel %vm864, %v1208, 0
          %v1278 = vsel %vm1222, %v1273, 0
          %1280 = vmatprep.subr.bf16.mxu0 0
          %1281 = vmatpush1.bf16.msra.mxu0 %v1278
          %1282 = vmatprep.subr.bf16.mxu0 0
          %1283 = vmatpush1.bf16.msra.mxu0 0
          %1284 = vmatprep.subr.bf16.mxu0 0
          %1285 = vmatpush1.bf16.msra.mxu0 0
          %1286 = vmatprep.subr.bf16.mxu0 0
          %1287 = vmatpush1.bf16.msra.mxu0 0
          %1288 = vmatprep.subr.bf16.mxu0 0
          %1289 = vmatpush1.bf16.msra.mxu0 0
          %1290 = vmatprep.subr.bf16.mxu0 0
          %1291 = vmatpush1.bf16.msra.mxu0 0
          %1292 = vmatprep.subr.bf16.mxu0 0
          %1293 = vmatpush1.bf16.msra.mxu0 0
          %1294 = vmatprep.subr.bf16.mxu0 0
          %1295 = vmatpush1.bf16.msra.mxu0 0
          %1296 = vmatprep.subr.bf16.mxu0 0
          %1297 = vmatpush1.bf16.msra.mxu0 0
          %1298 = vmatprep.subr.bf16.mxu0 0
          %1299 = vmatpush1.bf16.msra.mxu0 0
          %1300 = vmatprep.subr.bf16.mxu0 0
          %1301 = vmatpush1.bf16.msra.mxu0 0
          %1302 = vmatprep.subr.bf16.mxu0 0
          %1303 = vmatpush1.bf16.msra.mxu0 0
          %1304 = vmatprep.subr.bf16.mxu0 0
          %1305 = vmatpush1.bf16.msra.mxu0 0
          %1306 = vmatprep.subr.bf16.mxu0 0
          %1307 = vmatpush1.bf16.msra.mxu0 0
          %1308 = vmatprep.subr.bf16.mxu0 0
          %1309 = vmatpush1.bf16.msra.mxu0 0
          %1310 = vmatprep.subr.bf16.mxu0 0
          %1311 = vmatpush1.bf16.msra.mxu0 0
          %1312 = vmatprep.mubr.bf16.mxu0 0
          %1313 = vmatmul.mubr.bf16.gmra.mrb[0].mxu0 %v1275
          %v1314 = vpop.f32.mrb[0].mxu0
          %v1315 = vadd.f32 0.0, %v1314
          %v1316 = vpop.f32.mrb[0].mxu0
          %v1317 = vpop.f32.mrb[0].mxu0
          %v1318 = vpop.f32.mrb[0].mxu0
          %1319 = vdwg.mxu0
          %v1320 = vcombine.low %v836, %v848
          %v1322 = vunpack.c.l.s4 1983009808
          %v1323 = vunpack.c.0.s8 %v1322
          %v1324 = vlaneseq
          %v1325 = vshrl.u32 %v1324, 7
          %v1326 = vsub.s32 %v1323, %v1325
          %v1327 = vrot.slane %v1320, %v1326
          %v1329 = vsel %vm864, %v1209, 0
          %v1332 = vsel %vm1222, %v1327, 0
          %1334 = vmatprep.subr.bf16.mxu0 0
          %1335 = vmatpush1.bf16.msra.mxu0 %v1332
          %1336 = vmatprep.subr.bf16.mxu0 0
          %1337 = vmatpush1.bf16.msra.mxu0 0
          %1338 = vmatprep.subr.bf16.mxu0 0
          %1339 = vmatpush1.bf16.msra.mxu0 0
          %1340 = vmatprep.subr.bf16.mxu0 0
          %1341 = vmatpush1.bf16.msra.mxu0 0
          %1342 = vmatprep.subr.bf16.mxu0 0
          %1343 = vmatpush1.bf16.msra.mxu0 0
          %1344 = vmatprep.subr.bf16.mxu0 0
          %1345 = vmatpush1.bf16.msra.mxu0 0
          %1346 = vmatprep.subr.bf16.mxu0 0
          %1347 = vmatpush1.bf16.msra.mxu0 0
          %1348 = vmatprep.subr.bf16.mxu0 0
          %1349 = vmatpush1.bf16.msra.mxu0 0
          %1350 = vmatprep.subr.bf16.mxu0 0
          %1351 = vmatpush1.bf16.msra.mxu0 0
          %1352 = vmatprep.subr.bf16.mxu0 0
          %1353 = vmatpush1.bf16.msra.mxu0 0
          %1354 = vmatprep.subr.bf16.mxu0 0
          %1355 = vmatpush1.bf16.msra.mxu0 0
          %1356 = vmatprep.subr.bf16.mxu0 0
          %1357 = vmatpush1.bf16.msra.mxu0 0
          %1358 = vmatprep.subr.bf16.mxu0 0
          %1359 = vmatpush1.bf16.msra.mxu0 0
          %1360 = vmatprep.subr.bf16.mxu0 0
          %1361 = vmatpush1.bf16.msra.mxu0 0
          %1362 = vmatprep.subr.bf16.mxu0 0
          %1363 = vmatpush1.bf16.msra.mxu0 0
          %1364 = vmatprep.subr.bf16.mxu0 0
          %1365 = vmatpush1.bf16.msra.mxu0 0
          %1366 = vmatprep.mubr.bf16.mxu0 0
          %1367 = vmatmul.mubr.bf16.gmra.mrb[0].mxu0 %v1329
          %v1368 = vpop.f32.mrb[0].mxu0
          %v1369 = vadd.f32 0.0, %v1368
          %v1370 = vpop.f32.mrb[0].mxu0
          %v1371 = vpop.f32.mrb[0].mxu0
          %v1372 = vpop.f32.mrb[0].mxu0
          %1373 = vdwg.mxu0
          %v1374 = vcombine.low %v839, %v851
          %v1376 = vunpack.c.l.s4 1983009808
          %v1377 = vunpack.c.0.s8 %v1376
          %v1378 = vlaneseq
          %v1379 = vshrl.u32 %v1378, 7
          %v1380 = vsub.s32 %v1377, %v1379
          %v1381 = vrot.slane %v1374, %v1380
          %v1383 = vsel %vm864, %v1210, 0
          %v1386 = vsel %vm1222, %v1381, 0
          %1388 = vmatprep.subr.bf16.mxu0 0
          %1389 = vmatpush1.bf16.msra.mxu0 %v1386
          %1390 = vmatprep.subr.bf16.mxu0 0
          %1391 = vmatpush1.bf16.msra.mxu0 0
          %1392 = vmatprep.subr.bf16.mxu0 0
          %1393 = vmatpush1.bf16.msra.mxu0 0
          %1394 = vmatprep.subr.bf16.mxu0 0
          %1395 = vmatpush1.bf16.msra.mxu0 0
          %1396 = vmatprep.subr.bf16.mxu0 0
          %1397 = vmatpush1.bf16.msra.mxu0 0
          %1398 = vmatprep.subr.bf16.mxu0 0
          %1399 = vmatpush1.bf16.msra.mxu0 0
          %1400 = vmatprep.subr.bf16.mxu0 0
          %1401 = vmatpush1.bf16.msra.mxu0 0
          %1402 = vmatprep.subr.bf16.mxu0 0
          %1403 = vmatpush1.bf16.msra.mxu0 0
          %1404 = vmatprep.subr.bf16.mxu0 0
          %1405 = vmatpush1.bf16.msra.mxu0 0
          %1406 = vmatprep.subr.bf16.mxu0 0
          %1407 = vmatpush1.bf16.msra.mxu0 0
          %1408 = vmatprep.subr.bf16.mxu0 0
          %1409 = vmatpush1.bf16.msra.mxu0 0
          %1410 = vmatprep.subr.bf16.mxu0 0
          %1411 = vmatpush1.bf16.msra.mxu0 0
          %1412 = vmatprep.subr.bf16.mxu0 0
          %1413 = vmatpush1.bf16.msra.mxu0 0
          %1414 = vmatprep.subr.bf16.mxu0 0
          %1415 = vmatpush1.bf16.msra.mxu0 0
          %1416 = vmatprep.subr.bf16.mxu0 0
          %1417 = vmatpush1.bf16.msra.mxu0 0
          %1418 = vmatprep.subr.bf16.mxu0 0
          %1419 = vmatpush1.bf16.msra.mxu0 0
          %1420 = vmatprep.mubr.bf16.mxu0 0
          %1421 = vmatmul.mubr.bf16.gmra.mrb[0].mxu0 %v1383
          %v1422 = vpop.f32.mrb[0].mxu0
          %v1423 = vadd.f32 0.0, %v1422
          %v1424 = vpop.f32.mrb[0].mxu0
          %v1425 = vpop.f32.mrb[0].mxu0
          %v1426 = vpop.f32.mrb[0].mxu0
          %1427 = vdwg.mxu0
          %v1428 = vadd.f32 %v1203, %v1261
          %v1429 = vadd.f32 %v1204, %v1315
          %v1430 = vadd.f32 %v1205, %v1369
          %v1431 = vadd.f32 %v1206, %v1423
          %1432 = vst.msk [vmem:[#allocation5] sm:$0xff] %vm864, %v1428
          %1433 = vst.msk [vmem:[#allocation5 + $0x8] sm:$0xff] %vm864, %v1429
          %1434 = vst.msk [vmem:[#allocation5 + $0x10] sm:$0xff] %vm864, %v1430
          %1435 = vst.msk [vmem:[#allocation5 + $0x18] sm:$0xff] %vm864, %v1431
          %1436 = vst.msk [vmem:[#allocation3] sm:$0xff] %vm1174, %v1102
          %1437 = vst.msk [vmem:[#allocation3 + $0x8] sm:$0xff] %vm1174, %v1103
          %1438 = vst.msk [vmem:[#allocation3 + $0x10] sm:$0xff] %vm1174, %v1104
          %1439 = vst.msk [vmem:[#allocation3 + $0x18] sm:$0xff] %vm1174, %v1105
        $region163: #{transformer_fwd.17} parent=142 // pred_fallthru
          _
        // Predicated region
        $region164: #{transformer_fwd.17} parent=142 // pred_check
          %p1440 = pneg %p583
        $region165: #{transformer_fwd.17} parent=142 // pred_check_branch
          %1442 = sbr.rel (%p1440) target = $region167
        $region166: #{transformer_fwd.17} parent=142 // pred_region
          %v1443 = vld [vmem:[#allocation4] sm:$0xff]
          %v1444 = vld [vmem:[#allocation4 + $0x8] sm:$0xff]
          %v1445 = vld [vmem:[#allocation4 + $0x10] sm:$0xff]
          %v1446 = vld [vmem:[#allocation4 + $0x18] sm:$0xff]
          %vm1447 = vcmp.eq.f32.partialorder %v1443, 0.0
          %vm1448 = vcmp.eq.f32.partialorder %v1444, 0.0
          %vm1449 = vcmp.eq.f32.partialorder %v1445, 0.0
          %vm1450 = vcmp.eq.f32.partialorder %v1446, 0.0
          %v1451 = vsel %vm1447, 1.0, %v1443
          %v1452 = vsel %vm1448, 1.0, %v1444
          %v1453 = vsel %vm1449, 1.0, %v1445
          %v1454 = vsel %vm1450, 1.0, %v1446
          %v1455 = vrcp.pop %v1451
          %v1456 = vrcp.pop %v1452
          %v1457 = vrcp.pop %v1453
          %v1458 = vrcp.pop %v1454
          %v1459 = vld [vmem:[#allocation5] sm:$0xff]
          %v1460 = vld [vmem:[#allocation5 + $0x8] sm:$0xff]
          %v1461 = vld [vmem:[#allocation5 + $0x10] sm:$0xff]
          %v1462 = vld [vmem:[#allocation5 + $0x18] sm:$0xff]
          %1464 = vset.pattern.permute.xlu0 0
          %1465 = vperm.xlu0 %1464, %v1455
          %v1466 = vpop.permute.xlu0 %1465
          %1469 = vset.pattern.permute.xlu0 0
          %1470 = vperm.xlu0 %1469, %v1456
          %v1471 = vpop.permute.xlu0 %1470
          %1474 = vset.pattern.permute.xlu0 0
          %1475 = vperm.xlu0 %1474, %v1457
          %v1476 = vpop.permute.xlu0 %1475
          %1479 = vset.pattern.permute.xlu0 0
          %1480 = vperm.xlu0 %1479, %v1458
          %v1481 = vpop.permute.xlu0 %1480
          %v1483 = vmul.f32 %v1459, %v1466
          %v1484 = vmul.f32 %v1460, %v1471
          %v1485 = vmul.f32 %v1461, %v1476
          %v1486 = vmul.f32 %v1462, %v1481
          %v1487 = vcombine.low %v1483, %v1485
          %v1488 = vcombine.high %v1483, %v1485
          %v1490 = vunpack.c.l.s4 1983009808
          %v1491 = vunpack.c.0.s8 %v1490
          %v1492 = vlaneseq
          %v1493 = vshrl.u32 %v1492, 7
          %v1494 = vsub.s32 %v1491, %v1493
          %v1495 = vrot.slane %v1487, %v1494
          %v1497 = vunpack.c.l.s4 1983009808
          %v1498 = vunpack.c.0.s8 %v1497
          %v1499 = vlaneseq
          %v1500 = vshrl.u32 %v1499, 7
          %v1501 = vsub.s32 %v1498, %v1500
          %v1502 = vrot.slane %v1488, %v1501
          %v1503 = vcombine.low %v1484, %v1486
          %v1504 = vcombine.high %v1484, %v1486
          %v1506 = vunpack.c.l.s4 1983009808
          %v1507 = vunpack.c.0.s8 %v1506
          %v1508 = vlaneseq
          %v1509 = vshrl.u32 %v1508, 7
          %v1510 = vsub.s32 %v1507, %v1509
          %v1511 = vrot.slane %v1503, %v1510
          %v1513 = vunpack.c.l.s4 1983009808
          %v1514 = vunpack.c.0.s8 %v1513
          %v1515 = vlaneseq
          %v1516 = vshrl.u32 %v1515, 7
          %v1517 = vsub.s32 %v1514, %v1516
          %v1518 = vrot.slane %v1504, %v1517
          %v1519 = vcombine.low %v1495, %v1511
          %v1520 = vcombine.high %v1495, %v1511
          %v1522 = vunpack.c.l.s4 1934713408
          %v1523 = vunpack.c.0.s8 %v1522
          %v1524 = vlaneseq
          %v1525 = vshrl.u32 %v1524, 7
          %v1526 = vsub.s32 %v1523, %v1525
          %v1527 = vrot.slane %v1519, %v1526
          %v1529 = vunpack.c.l.s4 1934713408
          %v1530 = vunpack.c.0.s8 %v1529
          %v1531 = vlaneseq
          %v1532 = vshrl.u32 %v1531, 7
          %v1533 = vsub.s32 %v1530, %v1532
          %v1534 = vrot.slane %v1520, %v1533
          %v1535 = vcombine.low %v1502, %v1518
          %v1536 = vcombine.high %v1502, %v1518
          %v1538 = vunpack.c.l.s4 1934713408
          %v1539 = vunpack.c.0.s8 %v1538
          %v1540 = vlaneseq
          %v1541 = vshrl.u32 %v1540, 7
          %v1542 = vsub.s32 %v1539, %v1541
          %v1543 = vrot.slane %v1535, %v1542
          %v1545 = vunpack.c.l.s4 1934713408
          %v1546 = vunpack.c.0.s8 %v1545
          %v1547 = vlaneseq
          %v1548 = vshrl.u32 %v1547, 7
          %v1549 = vsub.s32 %v1546, %v1548
          %v1550 = vrot.slane %v1536, %v1549
          %v1551 = vcombine.high %v1527, 0.0
          %v1552 = vcombine.high %v1534, 0.0
          %v1553 = vcombine.high %v1543, 0.0
          %v1554 = vcombine.high %v1550, 0.0
          %v1555 = vpack.c.bf16 %v1527, %v1527
          %v1556 = vpack.c.bf16 %v1551, %v1551
          %v1557 = vpack.c.bf16 %v1534, %v1534
          %v1558 = vpack.c.bf16 %v1552, %v1552
          %v1559 = vpack.c.bf16 %v1543, %v1543
          %v1560 = vpack.c.bf16 %v1553, %v1553
          %v1561 = vpack.c.bf16 %v1550, %v1550
          %v1562 = vpack.c.bf16 %v1554, %v1554
          %vm1563 = vcmask 58368
          %1564 = vst.msk [vmem:[%s580] sm:$0x3] %vm1563, %v1555
          %1565 = vst.msk [vmem:[%s580 + $0x2] sm:$0x3] %vm1563, %v1556
          %1566 = vst.msk [vmem:[%s580 + $0x4] sm:$0x3] %vm1563, %v1557
          %1567 = vst.msk [vmem:[%s580 + $0x6] sm:$0x3] %vm1563, %v1558
          %1568 = vst.msk [vmem:[%s580 + $0x8] sm:$0x3] %vm1563, %v1559
          %1569 = vst.msk [vmem:[%s580 + $0xa] sm:$0x3] %vm1563, %v1560
          %1570 = vst.msk [vmem:[%s580 + $0xc] sm:$0x3] %vm1563, %v1561
          %1571 = vst.msk [vmem:[%s580 + $0xe] sm:$0x3] %vm1563, %v1562
        $region167: #{transformer_fwd.17} parent=142 // pred_fallthru
          _
        %s1572 = smul.u32 8, %s27
        %p1573 = scmp.lt.s32.totalorder %s26, 1
        %s1574 = scalar_select %p1573, %s26, 1
        %p1575 = scmp.lt.s32.totalorder %s1572, 7
        %s1576 = scalar_select %p1575, %s1572, 7
        %s1577 = smul.addr %s1574, 8
        %s1578 = sadd.s32 %s1576, %s1577
        %s1579 = smul.addr %s1578, 2
        %s1580 = scalar_lea.vmem %s4, %s1579
        // Predicated region
        $region168: #{transformer_fwd.17} parent=142 // pred_check
          %p1581 = pneg %p196
        $region169: #{transformer_fwd.17} parent=142 // pred_check_branch
          %1583 = sbr.rel (%p1581) target = $region171
        $region170: #{transformer_fwd.17} parent=142 // pred_region
          %s1584 = smul.u32 8, %s27
        $region171: #{transformer_fwd.17} parent=142 // pred_fallthru
          _
      $region143: #{transformer_fwd.17} parent=5 // pred_fallthru
        _
      %p1585 = scmp.le.s32.totalorder 2, %s16
      // Predicated region
      $region172: #{transformer_fwd.17} parent=5 // pred_check
        %p1586 = pneg %p1585
      $region173: #{transformer_fwd.17} parent=5 // pred_check_branch
        %1588 = sbr.rel (%p1586) target = $region175
      $region174: #{transformer_fwd.17} parent=5 // pred_region
        %s1589 = ssub.s32 %s16, 2
        // Predicated region
        $region176: #{transformer_fwd.17} parent=174 // pred_check
          %p1590 = pneg %p202
        $region177: #{transformer_fwd.17} parent=174 // pred_check_branch
          %1592 = sbr.rel (%p1590) target = $region179
        $region178: #{transformer_fwd.17} parent=174 // pred_region
          %s1593 = smul.u32 8, %s30
          %p1594 = scmp.lt.s32.totalorder %s29, 1
          %s1595 = scalar_select %p1594, %s29, 1
          %p1596 = scmp.lt.s32.totalorder %s1593, 7
          %s1597 = scalar_select %p1596, %s1593, 7
          %s1598 = smul.addr %s1595, 8
          %s1599 = sadd.s32 %s1597, %s1598
          %s1600 = smul.addr %s1599, 2
          %s1601 = scalar_lea.vmem %s4, %s1600
        $region179: #{transformer_fwd.17} parent=174 // pred_fallthru
          _
      $region175: #{transformer_fwd.17} parent=5 // pred_fallthru
        _
    $region6: #{transformer_fwd.17} parent=1 // loop_footer
      %s20 = sadd.s32 1, %s16
    $region7: #{transformer_fwd.17} parent=1 // loop_footer_branch
      %15 = sbr.rel target = $region3
    $region8: #{transformer_fwd.17} parent=1 // loop_exit
      _

// kernel: transformer_fwd.19
$region0: #{transformer_fwd.19}
  #allocation0 [shape = 'u32[]', space=smem, size = 0x4, offset = 0x4, fixed_abs, tag = 'smem constant byte address 0x4 - core index']
  #allocation1 [shape = 'u32[144,128]{1,0:T(1,128)}', space=vmem, size = 0x12000, scoped, tag = 'internal scratch']
  %s0 = inlined_call_operand.vmem [shape: f32[16,32], index: 0, kind: input, shape index: {}]
  %s1 = inlined_call_operand.vmem [shape: f32[1,32], index: 1, kind: input, shape index: {}]
  %s2 = inlined_call_operand.vmem [shape: f32[1,32], index: 2, kind: input, shape index: {}]
  %s3 = inlined_call_operand.vmem [shape: f32[16,32], index: 3, kind: output, shape index: {0}]
  %s4 = inlined_call_operand.vmem [shape: bf16[16,32], index: 4, kind: output, shape index: {1}]
  %5 = xla_tuple %s3, %s4
  %s6 = sld [smem:[#allocation0]]
  $region30: #{transformer_fwd.19} parent=0
    _
  %s8 = ssub.s32 1, %s6
  %s9 = scalar_select 0, %s8, %s6
  // Predicated region
  $region2: #{transformer_fwd.19} parent=0 // pred_check
    _
  $region3: #{transformer_fwd.19} parent=0 // pred_check_branch
    %11 = sbr.rel (0) target = $region5
  $region4: #{transformer_fwd.19} parent=0 // pred_region
    _
  $region5: #{transformer_fwd.19} parent=0 // pred_fallthru
    _
  // Predicated region
  $region6: #{transformer_fwd.19} parent=0 // pred_check
    _
  $region7: #{transformer_fwd.19} parent=0 // pred_check_branch
    %13 = sbr.rel (0) target = $region9
  $region8: #{transformer_fwd.19} parent=0 // pred_region
    _
  $region9: #{transformer_fwd.19} parent=0 // pred_fallthru
    _
  // Predicated region
  $region10: #{transformer_fwd.19} parent=0 // pred_check
    _
  $region11: #{transformer_fwd.19} parent=0 // pred_check_branch
    %15 = sbr.rel (0) target = $region13
  $region12: #{transformer_fwd.19} parent=0 // pred_region
    _
  $region13: #{transformer_fwd.19} parent=0 // pred_fallthru
    _
  %v16 = vld [vmem:[%s0] sm:$0xff]
  %v17 = vld [vmem:[%s0 + $0x8] sm:$0xff]
  %vm18 = vcmask 261120
  %v19 = vsel %vm18, %v16, 0.0
  %20 = vadd.xlane.f32.xlu0 %v19
  %v21 = vpop.xlane.xlu0 %20
  %v22 = vsel %vm18, %v17, 0.0
  %23 = vadd.xlane.f32.xlu0 %v22
  %v24 = vpop.xlane.xlu0 %23
  %v25 = vrcp.pop 32.0
  %v26 = vmul.f32 %v21, %v25
  %v27 = vmul.f32 %v24, %v25
  %v28 = vsub.f32 %v16, %v26
  %v29 = vsub.f32 %v17, %v27
  %v30 = vmul.f32 %v28, %v28
  %v31 = vmul.f32 %v29, %v29
  %v32 = vsel %vm18, %v30, 0.0
  %33 = vadd.xlane.f32.xlu0 %v32
  %v34 = vpop.xlane.xlu0 %33
  %v35 = vsel %vm18, %v31, 0.0
  %36 = vadd.xlane.f32.xlu0 %v35
  %v37 = vpop.xlane.xlu0 %36
  %v38 = vmul.f32 %v34, %v25
  %v39 = vmul.f32 %v37, %v25
  %v40 = vadd.f32 %v38, 1e-12
  %v41 = vadd.f32 %v39, 1e-12
  %v42 = vrsqrt.pop %v40
  %v43 = vrsqrt.pop %v41
  %v44 = vmul.f32 %v28, %v42
  %v45 = vmul.f32 %v29, %v43
  %v46 = vld [vmem:[%s1] sm:$0x1]
  %v48 = vlaneseq
  %v49 = vshrl.u32 %v48, 7
  %v50 = vsub.s32 0, %v49
  %v51 = vrot.slane %v46, %v50
  %v53 = vmul.f32 %v44, %v51
  %v54 = vmul.f32 %v45, %v51
  %v55 = vld [vmem:[%s2] sm:$0x1]
  %v57 = vlaneseq
  %v58 = vshrl.u32 %v57, 7
  %v59 = vsub.s32 0, %v58
  %v60 = vrot.slane %v55, %v59
  %v62 = vadd.f32 %v53, %v60
  %v63 = vadd.f32 %v54, %v60
  %64 = vst.msk [vmem:[%s3] sm:$0xff] %vm18, %v62
  %65 = vst.msk [vmem:[%s3 + $0x8] sm:$0xff] %vm18, %v63
  %v66 = vpack.c.bf16 %v63, %v62
  %v68 = vunpack.c.l.b16 %v66
  %v69 = vunpack.c.h.b16 %v66
  %v70 = vpack.c.b16 %v68, %v68
  %v71 = vpack.c.b16 %v69, %v69
  %vm74 = vcmask 257024
  %75 = vst.msk [vmem:[%s4] sm:$0xf] %vm74, %v70
  %76 = vst.msk [vmem:[%s4 + $0x4] sm:$0xf] %vm74, %v71
  // Predicated region
  $region14: #{transformer_fwd.19} parent=0 // pred_check
    _
  $region15: #{transformer_fwd.19} parent=0 // pred_check_branch
    %78 = sbr.rel (0) target = $region17
  $region16: #{transformer_fwd.19} parent=0 // pred_region
    _
  $region17: #{transformer_fwd.19} parent=0 // pred_fallthru
    _
  // Predicated region
  $region18: #{transformer_fwd.19} parent=0 // pred_check
    _
  $region19: #{transformer_fwd.19} parent=0 // pred_check_branch
    %80 = sbr.rel (0) target = $region21
  $region20: #{transformer_fwd.19} parent=0 // pred_region
    _
  $region21: #{transformer_fwd.19} parent=0 // pred_fallthru
    _
  // Predicated region
  $region22: #{transformer_fwd.19} parent=0 // pred_check
    _
  $region23: #{transformer_fwd.19} parent=0 // pred_check_branch
    %82 = sbr.rel (0) target = $region25
  $region24: #{transformer_fwd.19} parent=0 // pred_region
    _
  $region25: #{transformer_fwd.19} parent=0 // pred_fallthru
    _
  // Predicated region
  $region26: #{transformer_fwd.19} parent=0 // pred_check
    _
  $region27: #{transformer_fwd.19} parent=0 // pred_check_branch
    %84 = sbr.rel (0) target = $region29
  $region28: #{transformer_fwd.19} parent=0 // pred_region
    _
  $region29: #{transformer_fwd.19} parent=0 // pred_fallthru
    _

// kernel: transformer_fwd.20
$region0: #{transformer_fwd.20}
  #allocation0 [shape = 'u32[]', space=smem, size = 0x4, offset = 0x4, fixed_abs, tag = 'smem constant byte address 0x4 - core index']
  #allocation1 [shape = 'u32[144,128]{1,0:T(1,128)}', space=vmem, size = 0x12000, scoped, tag = 'internal scratch']
  #allocation2 [shape = 'f32[16,128]{1,0:T(8,128)}', space=vmem, size = 0x2000, scoped, tag = 'scratch operand']
  %s0 = inlined_call_operand.vmem [shape: bf16[16,32], index: 0, kind: input, shape index: {}]
  %s1 = inlined_call_operand.vmem [shape: bf16[32,128], index: 1, kind: input, shape index: {}]
  %s2 = inlined_call_operand.vmem [shape: f32[1,128], index: 2, kind: input, shape index: {}]
  %s3 = inlined_call_operand.vmem [shape: bf16[16,128], index: 3, kind: output, shape index: {}]
  %s4 = sld [smem:[#allocation0]]
  $region30: #{transformer_fwd.20} parent=0
    _
  %s6 = ssub.s32 1, %s4
  %s7 = scalar_select 0, %s6, %s4
  // Predicated region
  $region2: #{transformer_fwd.20} parent=0 // pred_check
    _
  $region3: #{transformer_fwd.20} parent=0 // pred_check_branch
    %9 = sbr.rel (0) target = $region5
  $region4: #{transformer_fwd.20} parent=0 // pred_region
    _
  $region5: #{transformer_fwd.20} parent=0 // pred_fallthru
    _
  // Predicated region
  $region6: #{transformer_fwd.20} parent=0 // pred_check
    _
  $region7: #{transformer_fwd.20} parent=0 // pred_check_branch
    %11 = sbr.rel (0) target = $region9
  $region8: #{transformer_fwd.20} parent=0 // pred_region
    _
  $region9: #{transformer_fwd.20} parent=0 // pred_fallthru
    _
  // Predicated region
  $region10: #{transformer_fwd.20} parent=0 // pred_check
    _
  $region11: #{transformer_fwd.20} parent=0 // pred_check_branch
    %13 = sbr.rel (0) target = $region13
  $region12: #{transformer_fwd.20} parent=0 // pred_region
    _
  $region13: #{transformer_fwd.20} parent=0 // pred_fallthru
    _
  %p15 = scmp.eq.s32.totalorder 0, 0
  // Predicated region
  $region14: #{transformer_fwd.20} parent=0 // pred_check
    %p16 = pneg %p15
  $region15: #{transformer_fwd.20} parent=0 // pred_check_branch
    %18 = sbr.rel (%p16) target = $region17
  $region16: #{transformer_fwd.20} parent=0 // pred_region
    %19 = vst [vmem:[#allocation2] sm:$0xff] 0.0
    %20 = vst [vmem:[#allocation2 + $0x8] sm:$0xff] 0.0
  $region17: #{transformer_fwd.20} parent=0 // pred_fallthru
    _
  %v21 = vld [vmem:[#allocation2] sm:$0xff]
  %v22 = vld [vmem:[#allocation2 + $0x8] sm:$0xff]
  %v23 = vld [vmem:[%s0] sm:$0xf]
  %v24 = vld [vmem:[%s0 + $0x4] sm:$0xf]
  %v25 = vld [vmem:[%s1] sm:$0xf]
  %v26 = vld [vmem:[%s1 + $0x4] sm:$0xf]
  %v27 = vld [vmem:[%s1 + $0x8] sm:$0xf]
  %v28 = vld [vmem:[%s1 + $0xc] sm:$0xf]
  %v31 = vunpack.c.l.b16 %v23
  %v32 = vunpack.c.l.b16 %v24
  %v33 = vpack.c.b16 %v32, %v31
  %v38 = vunpack.c.l.b16 %v25
  %v39 = vunpack.c.l.b16 %v26
  %v40 = vunpack.c.l.b16 %v27
  %v41 = vunpack.c.l.b16 %v28
  %v42 = vpack.c.b16 %v39, %v38
  %v43 = vpack.c.b16 %v41, %v40
  %vm46 = vcmask 261120
  %v48 = vsel %vm46, %v33, 0
  %50 = vmatprep.subr.bf16.mxu0 0
  %51 = vmatpush1.bf16.msra.mxu0 %v42
  %52 = vmatprep.subr.bf16.mxu0 0
  %53 = vmatpush1.bf16.msra.mxu0 %v43
  %54 = vmatprep.subr.bf16.mxu0 0
  %55 = vmatpush1.bf16.msra.mxu0 0
  %56 = vmatprep.subr.bf16.mxu0 0
  %57 = vmatpush1.bf16.msra.mxu0 0
  %58 = vmatprep.subr.bf16.mxu0 0
  %59 = vmatpush1.bf16.msra.mxu0 0
  %60 = vmatprep.subr.bf16.mxu0 0
  %61 = vmatpush1.bf16.msra.mxu0 0
  %62 = vmatprep.subr.bf16.mxu0 0
  %63 = vmatpush1.bf16.msra.mxu0 0
  %64 = vmatprep.subr.bf16.mxu0 0
  %65 = vmatpush1.bf16.msra.mxu0 0
  %66 = vmatprep.subr.bf16.mxu0 0
  %67 = vmatpush1.bf16.msra.mxu0 0
  %68 = vmatprep.subr.bf16.mxu0 0
  %69 = vmatpush1.bf16.msra.mxu0 0
  %70 = vmatprep.subr.bf16.mxu0 0
  %71 = vmatpush1.bf16.msra.mxu0 0
  %72 = vmatprep.subr.bf16.mxu0 0
  %73 = vmatpush1.bf16.msra.mxu0 0
  %74 = vmatprep.subr.bf16.mxu0 0
  %75 = vmatpush1.bf16.msra.mxu0 0
  %76 = vmatprep.subr.bf16.mxu0 0
  %77 = vmatpush1.bf16.msra.mxu0 0
  %78 = vmatprep.subr.bf16.mxu0 0
  %79 = vmatpush1.bf16.msra.mxu0 0
  %80 = vmatprep.subr.bf16.mxu0 0
  %81 = vmatpush1.bf16.msra.mxu0 0
  %82 = vmatprep.mubr.bf16.mxu0 0
  %83 = vmatmul.mubr.bf16.gmra.mrb[0].mxu0 %v48
  %v84 = vpop.f32.mrb[0].mxu0
  %v85 = vadd.f32 0.0, %v84
  %v86 = vpop.f32.mrb[0].mxu0
  %v87 = vpop.f32.mrb[0].mxu0
  %v88 = vadd.f32 0.0, %v87
  %v89 = vpop.f32.mrb[0].mxu0
  %90 = vdwg.mxu0
  %v91 = vadd.f32 %v21, %v85
  %v92 = vadd.f32 %v22, %v88
  %93 = vst [vmem:[#allocation2] sm:$0xff] %v91
  %94 = vst [vmem:[#allocation2 + $0x8] sm:$0xff] %v92
  // Predicated region
  $region18: #{transformer_fwd.20} parent=0 // pred_check
    %p95 = pneg %p15
  $region19: #{transformer_fwd.20} parent=0 // pred_check_branch
    %97 = sbr.rel (%p95) target = $region21
  $region20: #{transformer_fwd.20} parent=0 // pred_region
    %v98 = vld [vmem:[#allocation2] sm:$0xff]
    %v99 = vld [vmem:[#allocation2 + $0x8] sm:$0xff]
    %v100 = vld [vmem:[%s2] sm:$0x1]
    %v102 = vlaneseq
    %v103 = vshrl.u32 %v102, 7
    %v104 = vsub.s32 0, %v103
    %v105 = vrot.slane %v100, %v104
    %v107 = vadd.f32 %v98, %v105
    %v108 = vadd.f32 %v99, %v105
    %v109 = vmul.f32 %v107, 0.5
    %v110 = vmul.f32 %v108, 0.5
    %v111 = vrcp.pop 1.4142135
    %v112 = vmul.f32 %v107, %v111
    %v113 = vmul.f32 %v108, %v111
    %v114 = verf.f32.pop %v112
    %v115 = verf.f32.pop %v113
    %v116 = vadd.f32 %v114, 1.0
    %v117 = vadd.f32 %v115, 1.0
    %v118 = vmul.f32 %v109, %v116
    %v119 = vmul.f32 %v110, %v117
    %v120 = vpack.c.bf16 %v119, %v118
    %v122 = vunpack.c.l.b16 %v120
    %v123 = vunpack.c.h.b16 %v120
    %v124 = vpack.c.b16 %v122, %v122
    %v125 = vpack.c.b16 %v123, %v123
    %128 = vst [vmem:[%s3] sm:$0xf] %v124
    %129 = vst [vmem:[%s3 + $0x4] sm:$0xf] %v125
  $region21: #{transformer_fwd.20} parent=0 // pred_fallthru
    _
  // Predicated region
  $region22: #{transformer_fwd.20} parent=0 // pred_check
    _
  $region23: #{transformer_fwd.20} parent=0 // pred_check_branch
    %131 = sbr.rel (0) target = $region25
  $region24: #{transformer_fwd.20} parent=0 // pred_region
    _
  $region25: #{transformer_fwd.20} parent=0 // pred_fallthru
    _
  // Predicated region
  $region26: #{transformer_fwd.20} parent=0 // pred_check
    _
  $region27: #{transformer_fwd.20} parent=0 // pred_check_branch
    %133 = sbr.rel (0) target = $region29
  $region28: #{transformer_fwd.20} parent=0 // pred_region
    _
  $region29: #{transformer_fwd.20} parent=0 // pred_fallthru
    _

// kernel: transformer_fwd.21
$region0: #{transformer_fwd.21}
  #allocation0 [shape = 'u32[]', space=smem, size = 0x4, offset = 0x4, fixed_abs, tag = 'smem constant byte address 0x4 - core index']
  #allocation1 [shape = 'u32[144,128]{1,0:T(1,128)}', space=vmem, size = 0x12000, scoped, tag = 'internal scratch']
  #allocation2 [shape = 'f32[16,32]{1,0:T(8,128)}', space=vmem, size = 0x2000, scoped, tag = 'scratch operand']
  %s0 = inlined_call_operand.vmem [shape: bf16[16,128], index: 0, kind: input, shape index: {}]
  %s1 = inlined_call_operand.vmem [shape: bf16[128,32], index: 1, kind: input, shape index: {}]
  %s2 = inlined_call_operand.vmem [shape: f32[1,32], index: 2, kind: input, shape index: {}]
  %s3 = inlined_call_operand.vmem [shape: f32[16,32], index: 3, kind: input, shape index: {}]
  %s4 = inlined_call_operand.vmem [shape: f32[16,32], index: 4, kind: output, shape index: {}]
  %s5 = sld [smem:[#allocation0]]
  $region34: #{transformer_fwd.21} parent=0
    _
  %s7 = ssub.s32 1, %s5
  %s8 = scalar_select 0, %s7, %s5
  // Predicated region
  $region2: #{transformer_fwd.21} parent=0 // pred_check
    _
  $region3: #{transformer_fwd.21} parent=0 // pred_check_branch
    %10 = sbr.rel (0) target = $region5
  $region4: #{transformer_fwd.21} parent=0 // pred_region
    _
  $region5: #{transformer_fwd.21} parent=0 // pred_fallthru
    _
  // Predicated region
  $region6: #{transformer_fwd.21} parent=0 // pred_check
    _
  $region7: #{transformer_fwd.21} parent=0 // pred_check_branch
    %12 = sbr.rel (0) target = $region9
  $region8: #{transformer_fwd.21} parent=0 // pred_region
    _
  $region9: #{transformer_fwd.21} parent=0 // pred_fallthru
    _
  // Predicated region
  $region10: #{transformer_fwd.21} parent=0 // pred_check
    _
  $region11: #{transformer_fwd.21} parent=0 // pred_check_branch
    %14 = sbr.rel (0) target = $region13
  $region12: #{transformer_fwd.21} parent=0 // pred_region
    _
  $region13: #{transformer_fwd.21} parent=0 // pred_fallthru
    _
  // Predicated region
  $region14: #{transformer_fwd.21} parent=0 // pred_check
    _
  $region15: #{transformer_fwd.21} parent=0 // pred_check_branch
    %16 = sbr.rel (0) target = $region17
  $region16: #{transformer_fwd.21} parent=0 // pred_region
    _
  $region17: #{transformer_fwd.21} parent=0 // pred_fallthru
    _
  %p18 = scmp.eq.s32.totalorder 0, 0
  // Predicated region
  $region18: #{transformer_fwd.21} parent=0 // pred_check
    %p19 = pneg %p18
  $region19: #{transformer_fwd.21} parent=0 // pred_check_branch
    %21 = sbr.rel (%p19) target = $region21
  $region20: #{transformer_fwd.21} parent=0 // pred_region
    %vm22 = vcmask 261120
    %23 = vst.msk [vmem:[#allocation2] sm:$0xff] %vm22, 0.0
    %24 = vst.msk [vmem:[#allocation2 + $0x8] sm:$0xff] %vm22, 0.0
  $region21: #{transformer_fwd.21} parent=0 // pred_fallthru
    _
  %v25 = vld [vmem:[#allocation2] sm:$0xff]
  %v26 = vld [vmem:[#allocation2 + $0x8] sm:$0xff]
  %v27 = vld [vmem:[%s0] sm:$0xf]
  %v28 = vld [vmem:[%s0 + $0x4] sm:$0xf]
  %v29 = vld [vmem:[%s1] sm:$0xf]
  %v30 = vld [vmem:[%s1 + $0x4] sm:$0xf]
  %v31 = vld [vmem:[%s1 + $0x8] sm:$0xf]
  %v32 = vld [vmem:[%s1 + $0xc] sm:$0xf]
  %v33 = vld [vmem:[%s1 + $0x10] sm:$0xf]
  %v34 = vld [vmem:[%s1 + $0x14] sm:$0xf]
  %v35 = vld [vmem:[%s1 + $0x18] sm:$0xf]
  %v36 = vld [vmem:[%s1 + $0x1c] sm:$0xf]
  %v37 = vld [vmem:[%s1 + $0x20] sm:$0xf]
  %v38 = vld [vmem:[%s1 + $0x24] sm:$0xf]
  %v39 = vld [vmem:[%s1 + $0x28] sm:$0xf]
  %v40 = vld [vmem:[%s1 + $0x2c] sm:$0xf]
  %v41 = vld [vmem:[%s1 + $0x30] sm:$0xf]
  %v42 = vld [vmem:[%s1 + $0x34] sm:$0xf]
  %v43 = vld [vmem:[%s1 + $0x38] sm:$0xf]
  %v44 = vld [vmem:[%s1 + $0x3c] sm:$0xf]
  %v47 = vunpack.c.l.b16 %v27
  %v48 = vunpack.c.l.b16 %v28
  %v49 = vpack.c.b16 %v48, %v47
  %v67 = vunpack.c.l.b16 %v29
  %v68 = vunpack.c.l.b16 %v30
  %v69 = vunpack.c.l.b16 %v31
  %v70 = vunpack.c.l.b16 %v32
  %v71 = vunpack.c.l.b16 %v33
  %v72 = vunpack.c.l.b16 %v34
  %v73 = vunpack.c.l.b16 %v35
  %v74 = vunpack.c.l.b16 %v36
  %v75 = vunpack.c.l.b16 %v37
  %v76 = vunpack.c.l.b16 %v38
  %v77 = vunpack.c.l.b16 %v39
  %v78 = vunpack.c.l.b16 %v40
  %v79 = vunpack.c.l.b16 %v41
  %v80 = vunpack.c.l.b16 %v42
  %v81 = vunpack.c.l.b16 %v43
  %v82 = vunpack.c.l.b16 %v44
  %v83 = vpack.c.b16 %v68, %v67
  %v84 = vpack.c.b16 %v70, %v69
  %v85 = vpack.c.b16 %v72, %v71
  %v86 = vpack.c.b16 %v74, %v73
  %v87 = vpack.c.b16 %v76, %v75
  %v88 = vpack.c.b16 %v78, %v77
  %v89 = vpack.c.b16 %v80, %v79
  %v90 = vpack.c.b16 %v82, %v81
  %99 = vmatprep.subr.bf16.mxu0 0
  %100 = vmatpush1.bf16.msra.mxu0 %v83
  %101 = vmatprep.subr.bf16.mxu0 0
  %102 = vmatpush1.bf16.msra.mxu0 %v84
  %103 = vmatprep.subr.bf16.mxu0 0
  %104 = vmatpush1.bf16.msra.mxu0 %v85
  %105 = vmatprep.subr.bf16.mxu0 0
  %106 = vmatpush1.bf16.msra.mxu0 %v86
  %107 = vmatprep.subr.bf16.mxu0 0
  %108 = vmatpush1.bf16.msra.mxu0 %v87
  %109 = vmatprep.subr.bf16.mxu0 0
  %110 = vmatpush1.bf16.msra.mxu0 %v88
  %111 = vmatprep.subr.bf16.mxu0 0
  %112 = vmatpush1.bf16.msra.mxu0 %v89
  %113 = vmatprep.subr.bf16.mxu0 0
  %114 = vmatpush1.bf16.msra.mxu0 %v90
  %115 = vmatprep.subr.bf16.mxu0 0
  %116 = vmatpush1.bf16.msra.mxu0 0
  %117 = vmatprep.subr.bf16.mxu0 0
  %118 = vmatpush1.bf16.msra.mxu0 0
  %119 = vmatprep.subr.bf16.mxu0 0
  %120 = vmatpush1.bf16.msra.mxu0 0
  %121 = vmatprep.subr.bf16.mxu0 0
  %122 = vmatpush1.bf16.msra.mxu0 0
  %123 = vmatprep.subr.bf16.mxu0 0
  %124 = vmatpush1.bf16.msra.mxu0 0
  %125 = vmatprep.subr.bf16.mxu0 0
  %126 = vmatpush1.bf16.msra.mxu0 0
  %127 = vmatprep.subr.bf16.mxu0 0
  %128 = vmatpush1.bf16.msra.mxu0 0
  %129 = vmatprep.subr.bf16.mxu0 0
  %130 = vmatpush1.bf16.msra.mxu0 0
  %131 = vmatprep.mubr.bf16.mxu0 0
  %132 = vmatmul.mubr.bf16.gmra.mrb[0].mxu0 %v49
  %v133 = vpop.f32.mrb[0].mxu0
  %v134 = vadd.f32 0.0, %v133
  %v135 = vpop.f32.mrb[0].mxu0
  %v136 = vpop.f32.mrb[0].mxu0
  %v137 = vadd.f32 0.0, %v136
  %v138 = vpop.f32.mrb[0].mxu0
  %139 = vdwg.mxu0
  %v140 = vadd.f32 %v25, %v134
  %v141 = vadd.f32 %v26, %v137
  %vm142 = vcmask 261120
  %143 = vst.msk [vmem:[#allocation2] sm:$0xff] %vm142, %v140
  %144 = vst.msk [vmem:[#allocation2 + $0x8] sm:$0xff] %vm142, %v141
  // Predicated region
  $region22: #{transformer_fwd.21} parent=0 // pred_check
    %p145 = pneg %p18
  $region23: #{transformer_fwd.21} parent=0 // pred_check_branch
    %147 = sbr.rel (%p145) target = $region25
  $region24: #{transformer_fwd.21} parent=0 // pred_region
    %v148 = vld [vmem:[#allocation2] sm:$0xff]
    %v149 = vld [vmem:[#allocation2 + $0x8] sm:$0xff]
    %v150 = vld [vmem:[%s2] sm:$0x1]
    %v152 = vlaneseq
    %v153 = vshrl.u32 %v152, 7
    %v154 = vsub.s32 0, %v153
    %v155 = vrot.slane %v150, %v154
    %v157 = vadd.f32 %v148, %v155
    %v158 = vadd.f32 %v149, %v155
    %v159 = vld [vmem:[%s3] sm:$0xff]
    %v160 = vld [vmem:[%s3 + $0x8] sm:$0xff]
    %v161 = vadd.f32 %v157, %v159
    %v162 = vadd.f32 %v158, %v160
    %163 = vst.msk [vmem:[%s4] sm:$0xff] %vm142, %v161
    %164 = vst.msk [vmem:[%s4 + $0x8] sm:$0xff] %vm142, %v162
  $region25: #{transformer_fwd.21} parent=0 // pred_fallthru
    _
  // Predicated region
  $region26: #{transformer_fwd.21} parent=0 // pred_check
    _
  $region27: #{transformer_fwd.21} parent=0 // pred_check_branch
    %166 = sbr.rel (0) target = $region29
  $region28: #{transformer_fwd.21} parent=0 // pred_region
    _
  $region29: #{transformer_fwd.21} parent=0 // pred_fallthru
    _
  // Predicated region
  $region30: #{transformer_fwd.21} parent=0 // pred_check
    _
  $region31: #{transformer_fwd.21} parent=0 // pred_check_branch
    %168 = sbr.rel (0) target = $region33
  $region32: #{transformer_fwd.21} parent=0 // pred_region
    _
  $region33: #{transformer_fwd.21} parent=0 // pred_fallthru
    _

// kernel: transformer_fwd.29
$region0: #{transformer_fwd.29}
  #allocation0 [shape = 'u32[]', space=smem, size = 0x4, offset = 0x4, fixed_abs, tag = 'smem constant byte address 0x4 - core index']
  #allocation1 [shape = 'u32[144,128]{1,0:T(1,128)}', space=vmem, size = 0x12000, scoped, tag = 'internal scratch']
  %s0 = inlined_call_operand.vmem [shape: f32[16,32], index: 0, kind: input, shape index: {}]
  %s1 = inlined_call_operand.vmem [shape: f32[16,1], index: 1, kind: input, shape index: {}]
  %s2 = inlined_call_operand.vmem [shape: f32[1,32], index: 2, kind: input, shape index: {}]
  %s3 = inlined_call_operand.vmem [shape: f32[1,32], index: 3, kind: input, shape index: {}]
  %s4 = inlined_call_operand.vmem [shape: f32[16,32], index: 4, kind: output, shape index: {0}]
  %s5 = inlined_call_operand.hbm [shape: bf16[16,32], index: 5, kind: output, shape index: {1}]
  %6 = xla_tuple %s4, %s5
  %s7 = sld [smem:[#allocation0]]
  $region34: #{transformer_fwd.29} parent=0
    _
  %s9 = ssub.s32 1, %s7
  %s10 = scalar_select 0, %s9, %s7
  $region1: #{transformer_fwd.29} parent=0
    #allocation2 [shape = 'u8[4096]{0}', space=vmem, size = 0x1000, scoped, tag = 'output window, operand 1, single buffered']
    #allocation3 [shape = 's32[1]{0}', space=sflag, size = 0x4, scoped, tag = 'scoped memory for transformer_fwd.29']
    %11 = vsyncpa [#allocation3], 0
    // Predicated region
    $region2: #{transformer_fwd.29} parent=1 // pred_check
      _
    $region3: #{transformer_fwd.29} parent=1 // pred_check_branch
      %13 = sbr.rel (0) target = $region5
    $region4: #{transformer_fwd.29} parent=1 // pred_region
      _
    $region5: #{transformer_fwd.29} parent=1 // pred_fallthru
      _
    // Predicated region
    $region6: #{transformer_fwd.29} parent=1 // pred_check
      _
    $region7: #{transformer_fwd.29} parent=1 // pred_check_branch
      %15 = sbr.rel (0) target = $region9
    $region8: #{transformer_fwd.29} parent=1 // pred_region
      _
    $region9: #{transformer_fwd.29} parent=1 // pred_fallthru
      _
    // Predicated region
    $region10: #{transformer_fwd.29} parent=1 // pred_check
      _
    $region11: #{transformer_fwd.29} parent=1 // pred_check_branch
      %17 = sbr.rel (0) target = $region13
    $region12: #{transformer_fwd.29} parent=1 // pred_region
      _
    $region13: #{transformer_fwd.29} parent=1 // pred_fallthru
      _
    // Predicated region
    $region14: #{transformer_fwd.29} parent=1 // pred_check
      _
    $region15: #{transformer_fwd.29} parent=1 // pred_check_branch
      %19 = sbr.rel (0) target = $region17
    $region16: #{transformer_fwd.29} parent=1 // pred_region
      _
    $region17: #{transformer_fwd.29} parent=1 // pred_fallthru
      _
    %v20 = vld [vmem:[%s0] sm:$0xff]
    %v21 = vld [vmem:[%s0 + $0x8] sm:$0xff]
    %vm22 = vcmask 261120
    %v23 = vsel %vm22, %v20, 0.0
    %24 = vadd.xlane.f32.xlu0 %v23
    %v25 = vpop.xlane.xlu0 %24
    %v26 = vsel %vm22, %v21, 0.0
    %27 = vadd.xlane.f32.xlu0 %v26
    %v28 = vpop.xlane.xlu0 %27
    %v29 = vrcp.pop 32.0
    %v30 = vmul.f32 %v25, %v29
    %v31 = vmul.f32 %v28, %v29
    %v32 = vsub.f32 %v20, %v30
    %v33 = vsub.f32 %v21, %v31
    %v34 = vmul.f32 %v32, %v32
    %v35 = vmul.f32 %v33, %v33
    %v36 = vsel %vm22, %v34, 0.0
    %37 = vadd.xlane.f32.xlu0 %v36
    %v38 = vpop.xlane.xlu0 %37
    %v39 = vsel %vm22, %v35, 0.0
    %40 = vadd.xlane.f32.xlu0 %v39
    %v41 = vpop.xlane.xlu0 %40
    %v42 = vmul.f32 %v38, %v29
    %v43 = vmul.f32 %v41, %v29
    %v44 = vadd.f32 %v42, 1e-12
    %v45 = vadd.f32 %v43, 1e-12
    %v46 = vrsqrt.pop %v44
    %v47 = vrsqrt.pop %v45
    %v48 = vmul.f32 %v32, %v46
    %v49 = vmul.f32 %v33, %v47
    %v50 = vld [vmem:[%s2] sm:$0x1]
    %v52 = vlaneseq
    %v53 = vshrl.u32 %v52, 7
    %v54 = vsub.s32 0, %v53
    %v55 = vrot.slane %v50, %v54
    %v57 = vmul.f32 %v48, %v55
    %v58 = vmul.f32 %v49, %v55
    %v59 = vld [vmem:[%s3] sm:$0x1]
    %v61 = vlaneseq
    %v62 = vshrl.u32 %v61, 7
    %v63 = vsub.s32 0, %v62
    %v64 = vrot.slane %v59, %v63
    %v66 = vadd.f32 %v57, %v64
    %v67 = vadd.f32 %v58, %v64
    %v68 = vld [vmem:[%s1] sm:$0xff]
    %v69 = vld [vmem:[%s1 + $0x8] sm:$0xff]
    %71 = vset.pattern.permute.xlu0 0
    %72 = vperm.xlu0 %71, %v68
    %v73 = vpop.permute.xlu0 %72
    %76 = vset.pattern.permute.xlu0 0
    %77 = vperm.xlu0 %76, %v69
    %v78 = vpop.permute.xlu0 %77
    %v80 = vmul.f32 %v66, %v73
    %v81 = vmul.f32 %v67, %v78
    %82 = vst.msk [vmem:[%s4] sm:$0xff] %vm22, %v80
    %83 = vst.msk [vmem:[%s4 + $0x8] sm:$0xff] %vm22, %v81
    %v84 = vpack.c.bf16 %v81, %v80
    %v86 = vunpack.c.l.b16 %v84
    %v87 = vunpack.c.h.b16 %v84
    %v88 = vpack.c.b16 %v86, %v86
    %v89 = vpack.c.b16 %v87, %v87
    %vm92 = vcmask 257024
    %93 = vst.msk [vmem:[#allocation2] sm:$0xf] %vm92, %v88
    %94 = vst.msk [vmem:[#allocation2 + $0x4] sm:$0xf] %vm92, %v89
    // Predicated region
    $region18: #{transformer_fwd.29} parent=1 // pred_check
      _
    $region19: #{transformer_fwd.29} parent=1 // pred_check_branch
      %96 = sbr.rel (0) target = $region21
    $region20: #{transformer_fwd.29} parent=1 // pred_region
      _
    $region21: #{transformer_fwd.29} parent=1 // pred_fallthru
      _
    // Predicated region
    $region22: #{transformer_fwd.29} parent=1 // pred_check
      _
    $region23: #{transformer_fwd.29} parent=1 // pred_check_branch
      %98 = sbr.rel (0) target = $region25
    $region24: #{transformer_fwd.29} parent=1 // pred_region
      %s100 = ssub.s32 128, 128
      %101 = vsyncadd [#allocation3], %s100
      %s102 = sshll.u32 [#allocation2], 4
      %s103 = int_to_ptr.vmem [resolvable:$true] %s102
      %108 = dma.vmem_to_hbm [thread:$0]  %s103, 128, %s5, [#allocation3], 64, 64, 4
    $region25: #{transformer_fwd.29} parent=1 // pred_fallthru
      _
    // Predicated region
    $region26: #{transformer_fwd.29} parent=1 // pred_check
      _
    $region27: #{transformer_fwd.29} parent=1 // pred_check_branch
      %110 = sbr.rel (0) target = $region29
    $region28: #{transformer_fwd.29} parent=1 // pred_region
      _
    $region29: #{transformer_fwd.29} parent=1 // pred_fallthru
      _
    // Predicated region
    $region30: #{transformer_fwd.29} parent=1 // pred_check
      _
    $region31: #{transformer_fwd.29} parent=1 // pred_check_branch
      %112 = sbr.rel (0) target = $region33
    $region32: #{transformer_fwd.29} parent=1 // pred_region
      %113 = dma.done [#allocation3], 128
    $region33: #{transformer_fwd.29} parent=1 // pred_fallthru
      _
    %114 = vsyncpa [#allocation3], 1

</llo_original>
